<compile_context>
chip_gen: v5e
topology: v5e:2x2
jax: 0.10.0
libtpu: 0.0.40
codegen_flags: <defaults>
</compile_context>

<pallas_src>
import jax
import jax.numpy as jnp
from jax import lax
from jax.experimental import pallas as pl
from jax.experimental.pallas import tpu as pltpu

# ----- model configuration (shapes implied by the PyTorch forward) ----------
BATCH = 2
SEQ_LEN = 28                 # forced by .view(-1, 1, 52*2*2, 4)
IN_CH = 52
C1 = 104                     # conv1 out channels (groups=52 -> 2 per group)
C2 = 208                     # conv2 out channels (groups=104 -> 2 per group)
K1D = 5                      # 1-D conv kernel size
T1 = SEQ_LEN - (K1D - 1)     # 24  conv1 output length
P1 = T1 // 2                 # 12  after pool1
T2 = P1 - (K1D - 1)          # 8   conv2 output length
P2 = T2 // 2                 # 4   after pool2 -> image is (208, 4)
R3 = C2 - 2                  # 206 conv3 output height
H3 = R3 // 2                 # 103 after pool3
OC3 = 6                      # conv3 out channels
FEAT = OC3 * H3              # 618
FC1 = 64
FC2 = 32
CLASS_COUNT = 3


# ============================================================================
# The single fused Pallas kernel (one sample per grid step)
# ============================================================================
def _cnn1d2d_kernel(x_ref, w1_ref, b1_ref, sel1_ref, w2_ref, b2_ref, sel2_ref,
                    sh_ref, m3_ref, b3_ref, selp_ref,
                    fw1_ref, fb1_ref, fw2_ref, fb2_ref, fw3_ref, fb3_ref,
                    o_ref):
    f32 = jnp.float32
    x = x_ref[0]                                           # (28, 52)

    # ---- conv1 (grouped conv densified) + bias + relu : (28,52) -> (24,104)
    acc1 = jnp.dot(x[0:T1, :], w1_ref[0], preferred_element_type=f32)
    for s in range(1, K1D):
        acc1 = acc1 + jnp.dot(x[s:s + T1, :], w1_ref[s],
                              preferred_element_type=f32)
    h1 = jnp.maximum(acc1 + b1_ref[...], 0.0)

    # ---- MaxPool1d(2,2) via host-precomputed selection matmuls : -> (12,104)
    h1p = jnp.maximum(jnp.dot(sel1_ref[0], h1, preferred_element_type=f32),
                      jnp.dot(sel1_ref[1], h1, preferred_element_type=f32))

    # ---- conv2 (grouped conv densified) + bias + relu : (12,104) -> (8,208)
    acc2 = jnp.dot(h1p[0:T2, :], w2_ref[0], preferred_element_type=f32)
    for s in range(1, K1D):
        acc2 = acc2 + jnp.dot(h1p[s:s + T2, :], w2_ref[s],
                              preferred_element_type=f32)
    h2 = jnp.maximum(acc2 + b2_ref[...], 0.0)

    # ---- MaxPool1d(2,2) : (8,208) -> z (4,208), z[t, c] = image^T[t, c]
    z = jnp.maximum(jnp.dot(sel2_ref[0], h2, preferred_element_type=f32),
                    jnp.dot(sel2_ref[1], h2, preferred_element_type=f32))

    # ---- conv3 (3x3) + relu + MaxPool2d(2,2), computed in the z layout ----
    # zs[kh][t, i] = z[t, i + kh]  (lane shift done as a matmul against a
    # precomputed shifted identity -> zero relayout risk, exact).
    zs = (z,
          jnp.dot(z, sh_ref[0], preferred_element_type=f32),
          jnp.dot(z, sh_ref[1], preferred_element_type=f32))
    # For each output column j of conv3, Acc_j[oc, i] = sum_kh m3[j,kh] @ zs[kh]
    w6 = None
    for j in range(2):
        acc = jnp.dot(m3_ref[j * 3 + 0], zs[0], preferred_element_type=f32)
        for kh in range(1, 3):
            acc = acc + jnp.dot(m3_ref[j * 3 + kh], zs[kh],
                                preferred_element_type=f32)
        oj = jnp.maximum(acc + b3_ref[...], 0.0)           # (6, 208) relu
        w6 = oj if w6 is None else jnp.maximum(w6, oj)     # max over width j
    # MaxPool over conv3 height (stride 2) via selection matmuls on the right:
    # garbage columns i>=206 are never selected.  p6[oc, r] -> feat[oc*103+r].
    p6 = jnp.maximum(jnp.dot(w6, selp_ref[0], preferred_element_type=f32),
                     jnp.dot(w6, selp_ref[1], preferred_element_type=f32))

    # ---- fused FC head: fc1 -> relu -> fc2 -> relu -> fc3 ------------------
    # fc1 contracts the row-major flatten of p6 block-wise against the
    # host-reshaped weight fw1r (6, 103, 64): no in-kernel flatten needed.
    y = fb1_ref[...]
    for oc in range(OC3):
        y = y + jnp.dot(p6[oc:oc + 1, :], fw1_ref[oc],
                        preferred_element_type=f32)
    y = jnp.maximum(y, 0.0)                                # (1, 64)
    y = jnp.maximum(jnp.dot(y, fw2_ref[...], preferred_element_type=f32)
                    + fb2_ref[...], 0.0)                   # (1, 32)
    y = jnp.dot(y, fw3_ref[...], preferred_element_type=f32) + fb3_ref[...]
    o_ref[0] = y.astype(o_ref.dtype)                       # (1, 3)


# ============================================================================
# Wrapper: one pallas_call for the whole forward pass
# ============================================================================
_CONST_KEYS = ("w1d", "b1", "sel1", "w2d", "b2", "sel2", "shifts", "m3", "b3",
               "selp", "fw1", "fb1", "fw2", "fb2", "fw3", "fb3")


def _const_spec(a):
    zeros = (0,) * a.ndim
    return pl.BlockSpec(a.shape, lambda b, _z=zeros: _z)   # resident constant


def forward(params, x):
    x = x.astype(jnp.float32)
    B = x.shape[0]
    consts = [params[k] for k in _CONST_KEYS]
    out = pl.pallas_call(
        _cnn1d2d_kernel,
        out_shape=jax.ShapeDtypeStruct((B, 1, CLASS_COUNT), jnp.float32),
        grid=(B,),
        in_specs=[pl.BlockSpec((1, SEQ_LEN, IN_CH), lambda b: (b, 0, 0))]
                 + [_const_spec(c) for c in consts],
        out_specs=pl.BlockSpec((1, 1, CLASS_COUNT), lambda b: (b, 0, 0)),
        compiler_params=pltpu.CompilerParams(
            dimension_semantics=("parallel",)),
    )(x, *consts)
    return out.reshape(B, CLASS_COUNT)


# ============================================================================
# Parameters (deterministic, in-script) + pure-XLA reference for validation
# ============================================================================
def init_params(key):
    ks = jax.random.split(key, 12)

    def nrm(k, shape, s):
        return s * jax.random.normal(k, shape, jnp.float32)

    # raw weights in PyTorch layout
    raw = {
        "w1": nrm(ks[0], (C1, 1, K1D), (1.0 / K1D) ** 0.5),
        "b1": nrm(ks[1], (C1,), 0.1),
        "w2": nrm(ks[2], (C2, 1, K1D), (1.0 / K1D) ** 0.5),
        "b2": nrm(ks[3], (C2,), 0.1),
        "w3": nrm(ks[4], (OC3, 1, 3, 3), 1.0 / 3.0),
        "b3": nrm(ks[5], (OC3,), 0.1),
        "fw1": nrm(ks[6], (FC1, FEAT), (1.0 / FEAT) ** 0.5),
        "fb1": nrm(ks[7], (FC1,), 0.05),
        "fw2": nrm(ks[8], (FC2, FC1), (1.0 / FC1) ** 0.5),
        "fb2": nrm(ks[9], (FC2,), 0.05),
        "fw3": nrm(ks[10], (CLASS_COUNT, FC2), (1.0 / FC2) ** 0.5),
        "fb3": nrm(ks[11], (CLASS_COUNT,), 0.05),
    }

    # densify grouped convs: w1d[s, c, o] = w1[o, 0, s] iff c == o // 2
    o1 = jnp.arange(C1)
    w1d = jnp.zeros((K1D, IN_CH, C1), jnp.float32).at[:, o1 // 2, o1].set(
        jnp.transpose(raw["w1"][:, 0, :]))
    o2 = jnp.arange(C2)
    w2d = jnp.zeros((K1D, C1, C2), jnp.float32).at[:, o2 // 2, o2].set(
        jnp.transpose(raw["w2"][:, 0, :]))

    # host-precomputed MaxPool(2,2) selection matrices (left-applied)
    def pool_sel(n_out, n_in):
        r = jnp.arange(n_out)[:, None]
        c = jnp.arange(n_in)[None, :]
        return jnp.stack([(c == 2 * r).astype(jnp.float32),
                          (c == 2 * r + 1).astype(jnp.float32)])

    sel1 = pool_sel(P1, T1)                       # (2, 12, 24)
    sel2 = pool_sel(P2, T2)                       # (2, 4, 8)

    # pool3-over-height selection, applied from the right: (2, 208, 103)
    i3 = jnp.arange(C2)[:, None]
    r3 = jnp.arange(H3)[None, :]
    selp = jnp.stack([(i3 == 2 * r3).astype(jnp.float32),
                      (i3 == 2 * r3 + 1).astype(jnp.float32)])

    # lane-shift matrices: (z @ shifts[k-1])[t, i] = z[t, i + k]
    shifts = jnp.stack([jnp.eye(C2, k=-1, dtype=jnp.float32),
                        jnp.eye(C2, k=-2, dtype=jnp.float32)])

    # conv3 taps in the z (time, channel) layout:
    # m3[j*3 + kh][oc, t] = w3[oc, 0, kh, t - j]  (zero outside 3-tap window)
    m3 = jnp.zeros((6, OC3, P2), jnp.float32)
    for j in range(2):
        for kh in range(3):
            for kw in range(3):
                m3 = m3.at[j * 3 + kh, :, j + kw].set(raw["w3"][:, 0, kh, kw])

    params = {
        "w1d": w1d, "b1": raw["b1"].reshape(1, C1),
        "sel1": sel1,
        "w2d": w2d, "b2": raw["b2"].reshape(1, C2),
        "sel2": sel2,
        "shifts": shifts, "m3": m3, "b3": raw["b3"].reshape(OC3, 1),
        "selp": selp,
        # fc1 weight reshaped so feat[oc*103 + r] contraction needs no flatten
        "fw1": jnp.transpose(raw["fw1"]).reshape(OC3, H3, FC1),
        "fb1": raw["fb1"].reshape(1, -1),
        "fw2": jnp.transpose(raw["fw2"]), "fb2": raw["fb2"].reshape(1, -1),
        "fw3": jnp.transpose(raw["fw3"]), "fb3": raw["fb3"].reshape(1, -1),
    }
    return params, raw


def reference_forward(raw, x):
    """Pure-XLA re-implementation of the PyTorch forward (for validation)."""
    B = x.shape[0]
    dn1 = ("NCH", "OIH", "NCH")
    h = jnp.transpose(x, (0, 2, 1))                              # (B, 52, 28)
    h = lax.conv_general_dilated(h, raw["w1"], (1,), "VALID",
                                 dimension_numbers=dn1,
                                 feature_group_count=IN_CH)
    h = jax.nn.relu(h + raw["b1"][None, :, None])
    h = lax.reduce_window(h, -jnp.inf, lax.max, (1, 1, 2), (1, 1, 2), "VALID")
    h = lax.conv_general_dilated(h, raw["w2"], (1,), "VALID",
                                 dimension_numbers=dn1,
                                 feature_group_count=C1)
    h = jax.nn.relu(h + raw["b2"][None, :, None])
    h = lax.reduce_window(h, -jnp.inf, lax.max, (1, 1, 2), (1, 1, 2), "VALID")
    img = h.reshape(B, 1, C2, P2)
    g = lax.conv_general_dilated(img, raw["w3"], (1, 1), "VALID",
                                 dimension_numbers=("NCHW", "OIHW", "NCHW"))
    g = jax.nn.relu(g + raw["b3"][None, :, None, None])
    g = lax.reduce_window(g, -jnp.inf, lax.max, (1, 1, 2, 2), (1, 1, 2, 2),
                          "VALID")
    f = g.reshape(B, FEAT)
    f = jax.nn.relu(f @ raw["fw1"].T + raw["fb1"])
    f = jax.nn.relu(f @ raw["fw2"].T + raw["fb2"])
    return f @ raw["fw3"].T + raw["fb3"]


# ============================================================================
if __name__ == "__main__":
    key = jax.random.PRNGKey(0)
    pkey, xkey = jax.random.split(key)
    params, raw = init_params(pkey)

    x = jax.random.normal(xkey, (BATCH, SEQ_LEN, IN_CH), jnp.float32)

    fwd = jax.jit(forward)
    logits = fwd(params, x)
    jax.block_until_ready(logits)

    assert logits.shape == (BATCH, CLASS_COUNT), logits.shape
    assert bool(jnp.isfinite(logits).all())

    # validate against a pure-XLA reference of the same PyTorch module
    ref = reference_forward(raw, x)
    err = float(jnp.max(jnp.abs(logits - ref)))
    assert err < 5e-2, f"mismatch vs XLA reference: max abs err = {err}"

    print("KERNEL_OK")
</pallas_src>

<mosaic_0001>
module attributes {stable_mosaic.version = 11 : i64} {
  func.func @_cnn1d2d_kernel(%arg0: i32, %arg1: memref<1x28x52xf32, #tpu.memory_space<vmem>>, %arg2: memref<5x52x104xf32, #tpu.memory_space<vmem>>, %arg3: memref<1x104xf32, #tpu.memory_space<vmem>>, %arg4: memref<2x12x24xf32, #tpu.memory_space<vmem>>, %arg5: memref<5x104x208xf32, #tpu.memory_space<vmem>>, %arg6: memref<1x208xf32, #tpu.memory_space<vmem>>, %arg7: memref<2x4x8xf32, #tpu.memory_space<vmem>>, %arg8: memref<2x208x208xf32, #tpu.memory_space<vmem>>, %arg9: memref<6x6x4xf32, #tpu.memory_space<vmem>>, %arg10: memref<6x1xf32, #tpu.memory_space<vmem>>, %arg11: memref<2x208x103xf32, #tpu.memory_space<vmem>>, %arg12: memref<6x103x64xf32, #tpu.memory_space<vmem>>, %arg13: memref<1x64xf32, #tpu.memory_space<vmem>>, %arg14: memref<64x32xf32, #tpu.memory_space<vmem>>, %arg15: memref<1x32xf32, #tpu.memory_space<vmem>>, %arg16: memref<32x3xf32, #tpu.memory_space<vmem>>, %arg17: memref<1x3xf32, #tpu.memory_space<vmem>>, %arg18: memref<1x1x3xf32, #tpu.memory_space<vmem>>) attributes {dimension_semantics = [#tpu.dimension_semantics<parallel>], iteration_bounds = array<i64: 2>, scalar_prefetch = 0 : i64, scratch_operands = 0 : i64, tpu.core_type = #tpu.core_type<tc>, window_params = [{transform_indices = @transform_0, window_bounds = array<i64: 1, 28, 52>}, {pipeline_mode = #tpu.pipeline_mode<synchronous>, transform_indices = @transform_1, window_bounds = array<i64: 5, 52, 104>}, {pipeline_mode = #tpu.pipeline_mode<synchronous>, transform_indices = @transform_2, window_bounds = array<i64: 1, 104>}, {pipeline_mode = #tpu.pipeline_mode<synchronous>, transform_indices = @transform_3, window_bounds = array<i64: 2, 12, 24>}, {pipeline_mode = #tpu.pipeline_mode<synchronous>, transform_indices = @transform_4, window_bounds = array<i64: 5, 104, 208>}, {pipeline_mode = #tpu.pipeline_mode<synchronous>, transform_indices = @transform_5, window_bounds = array<i64: 1, 208>}, {pipeline_mode = #tpu.pipeline_mode<synchronous>, transform_indices = @transform_6, window_bounds = array<i64: 2, 4, 8>}, {pipeline_mode = #tpu.pipeline_mode<synchronous>, transform_indices = @transform_7, window_bounds = array<i64: 2, 208, 208>}, {pipeline_mode = #tpu.pipeline_mode<synchronous>, transform_indices = @transform_8, window_bounds = array<i64: 6, 6, 4>}, {pipeline_mode = #tpu.pipeline_mode<synchronous>, transform_indices = @transform_9, window_bounds = array<i64: 6, 1>}, {pipeline_mode = #tpu.pipeline_mode<synchronous>, transform_indices = @transform_10, window_bounds = array<i64: 2, 208, 103>}, {pipeline_mode = #tpu.pipeline_mode<synchronous>, transform_indices = @transform_11, window_bounds = array<i64: 6, 103, 64>}, {pipeline_mode = #tpu.pipeline_mode<synchronous>, transform_indices = @transform_12, window_bounds = array<i64: 1, 64>}, {pipeline_mode = #tpu.pipeline_mode<synchronous>, transform_indices = @transform_13, window_bounds = array<i64: 64, 32>}, {pipeline_mode = #tpu.pipeline_mode<synchronous>, transform_indices = @transform_14, window_bounds = array<i64: 1, 32>}, {pipeline_mode = #tpu.pipeline_mode<synchronous>, transform_indices = @transform_15, window_bounds = array<i64: 32, 3>}, {pipeline_mode = #tpu.pipeline_mode<synchronous>, transform_indices = @transform_16, window_bounds = array<i64: 1, 3>}, {transform_indices = @transform_17, window_bounds = array<i64: 1, 1, 3>}]} {
    %c0 = arith.constant 0 : index
    %c0_0 = arith.constant 0 : index
    %c0_1 = arith.constant 0 : index
    %0 = vector.load %arg1[%c0, %c0_0, %c0_1] : memref<1x28x52xf32, #tpu.memory_space<vmem>>, vector<1x28x52xf32>
    %1 = vector.shape_cast %0 : vector<1x28x52xf32> to vector<28x52xf32>
    %2 = vector.extract_strided_slice %1 {offsets = [0, 0], sizes = [24, 52], strides = [1, 1]} : vector<28x52xf32> to vector<24x52xf32>
    %c0_2 = arith.constant 0 : index
    %c0_3 = arith.constant 0 : index
    %c0_4 = arith.constant 0 : index
    %3 = vector.load %arg2[%c0_2, %c0_3, %c0_4] : memref<5x52x104xf32, #tpu.memory_space<vmem>>, vector<1x52x104xf32>
    %4 = vector.shape_cast %3 : vector<1x52x104xf32> to vector<52x104xf32>
    %cst = arith.constant dense<0.000000e+00> : vector<24x104xf32>
    %5 = tpu.matmul %2, %4, %cst {dimension_numbers = #tpu.dot_dimension_numbers<[1], [0], [0], [1], [0, 0, 1, 1], [], []>} : vector<24x52xf32>, vector<52x104xf32>, vector<24x104xf32> -> vector<24x104xf32>
    %6 = vector.extract_strided_slice %1 {offsets = [1, 0], sizes = [24, 52], strides = [1, 1]} : vector<28x52xf32> to vector<24x52xf32>
    %c1 = arith.constant 1 : index
    %c0_5 = arith.constant 0 : index
    %c0_6 = arith.constant 0 : index
    %7 = vector.load %arg2[%c1, %c0_5, %c0_6] : memref<5x52x104xf32, #tpu.memory_space<vmem>>, vector<1x52x104xf32>
    %8 = vector.shape_cast %7 : vector<1x52x104xf32> to vector<52x104xf32>
    %cst_7 = arith.constant dense<0.000000e+00> : vector<24x104xf32>
    %9 = tpu.matmul %6, %8, %cst_7 {dimension_numbers = #tpu.dot_dimension_numbers<[1], [0], [0], [1], [0, 0, 1, 1], [], []>} : vector<24x52xf32>, vector<52x104xf32>, vector<24x104xf32> -> vector<24x104xf32>
    %10 = arith.addf %5, %9 : vector<24x104xf32>
    %11 = vector.extract_strided_slice %1 {offsets = [2, 0], sizes = [24, 52], strides = [1, 1]} : vector<28x52xf32> to vector<24x52xf32>
    %c2 = arith.constant 2 : index
    %c0_8 = arith.constant 0 : index
    %c0_9 = arith.constant 0 : index
    %12 = vector.load %arg2[%c2, %c0_8, %c0_9] : memref<5x52x104xf32, #tpu.memory_space<vmem>>, vector<1x52x104xf32>
    %13 = vector.shape_cast %12 : vector<1x52x104xf32> to vector<52x104xf32>
    %cst_10 = arith.constant dense<0.000000e+00> : vector<24x104xf32>
    %14 = tpu.matmul %11, %13, %cst_10 {dimension_numbers = #tpu.dot_dimension_numbers<[1], [0], [0], [1], [0, 0, 1, 1], [], []>} : vector<24x52xf32>, vector<52x104xf32>, vector<24x104xf32> -> vector<24x104xf32>
    %15 = arith.addf %10, %14 : vector<24x104xf32>
    %16 = vector.extract_strided_slice %1 {offsets = [3, 0], sizes = [24, 52], strides = [1, 1]} : vector<28x52xf32> to vector<24x52xf32>
    %c3 = arith.constant 3 : index
    %c0_11 = arith.constant 0 : index
    %c0_12 = arith.constant 0 : index
    %17 = vector.load %arg2[%c3, %c0_11, %c0_12] : memref<5x52x104xf32, #tpu.memory_space<vmem>>, vector<1x52x104xf32>
    %18 = vector.shape_cast %17 : vector<1x52x104xf32> to vector<52x104xf32>
    %cst_13 = arith.constant dense<0.000000e+00> : vector<24x104xf32>
    %19 = tpu.matmul %16, %18, %cst_13 {dimension_numbers = #tpu.dot_dimension_numbers<[1], [0], [0], [1], [0, 0, 1, 1], [], []>} : vector<24x52xf32>, vector<52x104xf32>, vector<24x104xf32> -> vector<24x104xf32>
    %20 = arith.addf %15, %19 : vector<24x104xf32>
    %21 = vector.extract_strided_slice %1 {offsets = [4, 0], sizes = [24, 52], strides = [1, 1]} : vector<28x52xf32> to vector<24x52xf32>
    %c4 = arith.constant 4 : index
    %c0_14 = arith.constant 0 : index
    %c0_15 = arith.constant 0 : index
    %22 = vector.load %arg2[%c4, %c0_14, %c0_15] : memref<5x52x104xf32, #tpu.memory_space<vmem>>, vector<1x52x104xf32>
    %23 = vector.shape_cast %22 : vector<1x52x104xf32> to vector<52x104xf32>
    %cst_16 = arith.constant dense<0.000000e+00> : vector<24x104xf32>
    %24 = tpu.matmul %21, %23, %cst_16 {dimension_numbers = #tpu.dot_dimension_numbers<[1], [0], [0], [1], [0, 0, 1, 1], [], []>} : vector<24x52xf32>, vector<52x104xf32>, vector<24x104xf32> -> vector<24x104xf32>
    %25 = arith.addf %20, %24 : vector<24x104xf32>
    %c0_17 = arith.constant 0 : index
    %c0_18 = arith.constant 0 : index
    %26 = vector.load %arg3[%c0_17, %c0_18] : memref<1x104xf32, #tpu.memory_space<vmem>>, vector<1x104xf32>
    %27 = vector.broadcast %26 : vector<1x104xf32> to vector<24x104xf32>
    %28 = arith.addf %25, %27 : vector<24x104xf32>
    %cst_19 = arith.constant 0.000000e+00 : f32
    %29 = vector.broadcast %cst_19 : f32 to vector<24x104xf32>
    %30 = arith.maximumf %28, %29 : vector<24x104xf32>
    %c0_20 = arith.constant 0 : index
    %c0_21 = arith.constant 0 : index
    %c0_22 = arith.constant 0 : index
    %31 = vector.load %arg4[%c0_20, %c0_21, %c0_22] : memref<2x12x24xf32, #tpu.memory_space<vmem>>, vector<1x12x24xf32>
    %32 = vector.shape_cast %31 : vector<1x12x24xf32> to vector<12x24xf32>
    %cst_23 = arith.constant dense<0.000000e+00> : vector<12x104xf32>
    %33 = tpu.matmul %32, %30, %cst_23 {dimension_numbers = #tpu.dot_dimension_numbers<[1], [0], [0], [1], [0, 0, 1, 1], [], []>} : vector<12x24xf32>, vector<24x104xf32>, vector<12x104xf32> -> vector<12x104xf32>
    %c1_24 = arith.constant 1 : index
    %c0_25 = arith.constant 0 : index
    %c0_26 = arith.constant 0 : index
    %34 = vector.load %arg4[%c1_24, %c0_25, %c0_26] : memref<2x12x24xf32, #tpu.memory_space<vmem>>, vector<1x12x24xf32>
    %35 = vector.shape_cast %34 : vector<1x12x24xf32> to vector<12x24xf32>
    %cst_27 = arith.constant dense<0.000000e+00> : vector<12x104xf32>
    %36 = tpu.matmul %35, %30, %cst_27 {dimension_numbers = #tpu.dot_dimension_numbers<[1], [0], [0], [1], [0, 0, 1, 1], [], []>} : vector<12x24xf32>, vector<24x104xf32>, vector<12x104xf32> -> vector<12x104xf32>
    %37 = arith.maximumf %33, %36 : vector<12x104xf32>
    %38 = vector.extract_strided_slice %37 {offsets = [0, 0], sizes = [8, 104], strides = [1, 1]} : vector<12x104xf32> to vector<8x104xf32>
    %c0_28 = arith.constant 0 : index
    %c0_29 = arith.constant 0 : index
    %c0_30 = arith.constant 0 : index
    %39 = vector.load %arg5[%c0_28, %c0_29, %c0_30] : memref<5x104x208xf32, #tpu.memory_space<vmem>>, vector<1x104x208xf32>
    %40 = vector.shape_cast %39 : vector<1x104x208xf32> to vector<104x208xf32>
    %cst_31 = arith.constant dense<0.000000e+00> : vector<8x208xf32>
    %41 = tpu.matmul %38, %40, %cst_31 {dimension_numbers = #tpu.dot_dimension_numbers<[1], [0], [0], [1], [0, 0, 1, 1], [], []>} : vector<8x104xf32>, vector<104x208xf32>, vector<8x208xf32> -> vector<8x208xf32>
    %42 = vector.extract_strided_slice %37 {offsets = [1, 0], sizes = [8, 104], strides = [1, 1]} : vector<12x104xf32> to vector<8x104xf32>
    %c1_32 = arith.constant 1 : index
    %c0_33 = arith.constant 0 : index
    %c0_34 = arith.constant 0 : index
    %43 = vector.load %arg5[%c1_32, %c0_33, %c0_34] : memref<5x104x208xf32, #tpu.memory_space<vmem>>, vector<1x104x208xf32>
    %44 = vector.shape_cast %43 : vector<1x104x208xf32> to vector<104x208xf32>
    %cst_35 = arith.constant dense<0.000000e+00> : vector<8x208xf32>
    %45 = tpu.matmul %42, %44, %cst_35 {dimension_numbers = #tpu.dot_dimension_numbers<[1], [0], [0], [1], [0, 0, 1, 1], [], []>} : vector<8x104xf32>, vector<104x208xf32>, vector<8x208xf32> -> vector<8x208xf32>
    %46 = arith.addf %41, %45 : vector<8x208xf32>
    %47 = vector.extract_strided_slice %37 {offsets = [2, 0], sizes = [8, 104], strides = [1, 1]} : vector<12x104xf32> to vector<8x104xf32>
    %c2_36 = arith.constant 2 : index
    %c0_37 = arith.constant 0 : index
    %c0_38 = arith.constant 0 : index
    %48 = vector.load %arg5[%c2_36, %c0_37, %c0_38] : memref<5x104x208xf32, #tpu.memory_space<vmem>>, vector<1x104x208xf32>
    %49 = vector.shape_cast %48 : vector<1x104x208xf32> to vector<104x208xf32>
    %cst_39 = arith.constant dense<0.000000e+00> : vector<8x208xf32>
    %50 = tpu.matmul %47, %49, %cst_39 {dimension_numbers = #tpu.dot_dimension_numbers<[1], [0], [0], [1], [0, 0, 1, 1], [], []>} : vector<8x104xf32>, vector<104x208xf32>, vector<8x208xf32> -> vector<8x208xf32>
    %51 = arith.addf %46, %50 : vector<8x208xf32>
    %52 = vector.extract_strided_slice %37 {offsets = [3, 0], sizes = [8, 104], strides = [1, 1]} : vector<12x104xf32> to vector<8x104xf32>
    %c3_40 = arith.constant 3 : index
    %c0_41 = arith.constant 0 : index
    %c0_42 = arith.constant 0 : index
    %53 = vector.load %arg5[%c3_40, %c0_41, %c0_42] : memref<5x104x208xf32, #tpu.memory_space<vmem>>, vector<1x104x208xf32>
    %54 = vector.shape_cast %53 : vector<1x104x208xf32> to vector<104x208xf32>
    %cst_43 = arith.constant dense<0.000000e+00> : vector<8x208xf32>
    %55 = tpu.matmul %52, %54, %cst_43 {dimension_numbers = #tpu.dot_dimension_numbers<[1], [0], [0], [1], [0, 0, 1, 1], [], []>} : vector<8x104xf32>, vector<104x208xf32>, vector<8x208xf32> -> vector<8x208xf32>
    %56 = arith.addf %51, %55 : vector<8x208xf32>
    %57 = vector.extract_strided_slice %37 {offsets = [4, 0], sizes = [8, 104], strides = [1, 1]} : vector<12x104xf32> to vector<8x104xf32>
    %c4_44 = arith.constant 4 : index
    %c0_45 = arith.constant 0 : index
    %c0_46 = arith.constant 0 : index
    %58 = vector.load %arg5[%c4_44, %c0_45, %c0_46] : memref<5x104x208xf32, #tpu.memory_space<vmem>>, vector<1x104x208xf32>
    %59 = vector.shape_cast %58 : vector<1x104x208xf32> to vector<104x208xf32>
    %cst_47 = arith.constant dense<0.000000e+00> : vector<8x208xf32>
    %60 = tpu.matmul %57, %59, %cst_47 {dimension_numbers = #tpu.dot_dimension_numbers<[1], [0], [0], [1], [0, 0, 1, 1], [], []>} : vector<8x104xf32>, vector<104x208xf32>, vector<8x208xf32> -> vector<8x208xf32>
    %61 = arith.addf %56, %60 : vector<8x208xf32>
    %c0_48 = arith.constant 0 : index
    %c0_49 = arith.constant 0 : index
    %62 = vector.load %arg6[%c0_48, %c0_49] : memref<1x208xf32, #tpu.memory_space<vmem>>, vector<1x208xf32>
    %63 = vector.broadcast %62 : vector<1x208xf32> to vector<8x208xf32>
    %64 = arith.addf %61, %63 : vector<8x208xf32>
    %cst_50 = arith.constant 0.000000e+00 : f32
    %65 = vector.broadcast %cst_50 : f32 to vector<8x208xf32>
    %66 = arith.maximumf %64, %65 : vector<8x208xf32>
    %c0_51 = arith.constant 0 : index
    %c0_52 = arith.constant 0 : index
    %c0_53 = arith.constant 0 : index
    %67 = vector.load %arg7[%c0_51, %c0_52, %c0_53] : memref<2x4x8xf32, #tpu.memory_space<vmem>>, vector<1x4x8xf32>
    %68 = vector.shape_cast %67 : vector<1x4x8xf32> to vector<4x8xf32>
    %cst_54 = arith.constant dense<0.000000e+00> : vector<4x208xf32>
    %69 = tpu.matmul %68, %66, %cst_54 {dimension_numbers = #tpu.dot_dimension_numbers<[1], [0], [0], [1], [0, 0, 1, 1], [], []>} : vector<4x8xf32>, vector<8x208xf32>, vector<4x208xf32> -> vector<4x208xf32>
    %c1_55 = arith.constant 1 : index
    %c0_56 = arith.constant 0 : index
    %c0_57 = arith.constant 0 : index
    %70 = vector.load %arg7[%c1_55, %c0_56, %c0_57] : memref<2x4x8xf32, #tpu.memory_space<vmem>>, vector<1x4x8xf32>
    %71 = vector.shape_cast %70 : vector<1x4x8xf32> to vector<4x8xf32>
    %cst_58 = arith.constant dense<0.000000e+00> : vector<4x208xf32>
    %72 = tpu.matmul %71, %66, %cst_58 {dimension_numbers = #tpu.dot_dimension_numbers<[1], [0], [0], [1], [0, 0, 1, 1], [], []>} : vector<4x8xf32>, vector<8x208xf32>, vector<4x208xf32> -> vector<4x208xf32>
    %73 = arith.maximumf %69, %72 : vector<4x208xf32>
    %c0_59 = arith.constant 0 : index
    %c0_60 = arith.constant 0 : index
    %c0_61 = arith.constant 0 : index
    %74 = vector.load %arg8[%c0_59, %c0_60, %c0_61] : memref<2x208x208xf32, #tpu.memory_space<vmem>>, vector<1x208x208xf32>
    %75 = vector.shape_cast %74 : vector<1x208x208xf32> to vector<208x208xf32>
    %cst_62 = arith.constant dense<0.000000e+00> : vector<4x208xf32>
    %76 = tpu.matmul %73, %75, %cst_62 {dimension_numbers = #tpu.dot_dimension_numbers<[1], [0], [0], [1], [0, 0, 1, 1], [], []>} : vector<4x208xf32>, vector<208x208xf32>, vector<4x208xf32> -> vector<4x208xf32>
    %c1_63 = arith.constant 1 : index
    %c0_64 = arith.constant 0 : index
    %c0_65 = arith.constant 0 : index
    %77 = vector.load %arg8[%c1_63, %c0_64, %c0_65] : memref<2x208x208xf32, #tpu.memory_space<vmem>>, vector<1x208x208xf32>
    %78 = vector.shape_cast %77 : vector<1x208x208xf32> to vector<208x208xf32>
    %cst_66 = arith.constant dense<0.000000e+00> : vector<4x208xf32>
    %79 = tpu.matmul %73, %78, %cst_66 {dimension_numbers = #tpu.dot_dimension_numbers<[1], [0], [0], [1], [0, 0, 1, 1], [], []>} : vector<4x208xf32>, vector<208x208xf32>, vector<4x208xf32> -> vector<4x208xf32>
    %c0_67 = arith.constant 0 : index
    %c0_68 = arith.constant 0 : index
    %c0_69 = arith.constant 0 : index
    %80 = vector.load %arg9[%c0_67, %c0_68, %c0_69] : memref<6x6x4xf32, #tpu.memory_space<vmem>>, vector<1x6x4xf32>
    %81 = vector.shape_cast %80 : vector<1x6x4xf32> to vector<6x4xf32>
    %cst_70 = arith.constant dense<0.000000e+00> : vector<6x208xf32>
    %82 = tpu.matmul %81, %73, %cst_70 {dimension_numbers = #tpu.dot_dimension_numbers<[1], [0], [0], [1], [0, 0, 1, 1], [], []>} : vector<6x4xf32>, vector<4x208xf32>, vector<6x208xf32> -> vector<6x208xf32>
    %c1_71 = arith.constant 1 : index
    %c0_72 = arith.constant 0 : index
    %c0_73 = arith.constant 0 : index
    %83 = vector.load %arg9[%c1_71, %c0_72, %c0_73] : memref<6x6x4xf32, #tpu.memory_space<vmem>>, vector<1x6x4xf32>
    %84 = vector.shape_cast %83 : vector<1x6x4xf32> to vector<6x4xf32>
    %cst_74 = arith.constant dense<0.000000e+00> : vector<6x208xf32>
    %85 = tpu.matmul %84, %76, %cst_74 {dimension_numbers = #tpu.dot_dimension_numbers<[1], [0], [0], [1], [0, 0, 1, 1], [], []>} : vector<6x4xf32>, vector<4x208xf32>, vector<6x208xf32> -> vector<6x208xf32>
    %86 = arith.addf %82, %85 : vector<6x208xf32>
    %c2_75 = arith.constant 2 : index
    %c0_76 = arith.constant 0 : index
    %c0_77 = arith.constant 0 : index
    %87 = vector.load %arg9[%c2_75, %c0_76, %c0_77] : memref<6x6x4xf32, #tpu.memory_space<vmem>>, vector<1x6x4xf32>
    %88 = vector.shape_cast %87 : vector<1x6x4xf32> to vector<6x4xf32>
    %cst_78 = arith.constant dense<0.000000e+00> : vector<6x208xf32>
    %89 = tpu.matmul %88, %79, %cst_78 {dimension_numbers = #tpu.dot_dimension_numbers<[1], [0], [0], [1], [0, 0, 1, 1], [], []>} : vector<6x4xf32>, vector<4x208xf32>, vector<6x208xf32> -> vector<6x208xf32>
    %90 = arith.addf %86, %89 : vector<6x208xf32>
    %c0_79 = arith.constant 0 : index
    %c0_80 = arith.constant 0 : index
    %91 = vector.load %arg10[%c0_79, %c0_80] : memref<6x1xf32, #tpu.memory_space<vmem>>, vector<6x1xf32>
    %92 = vector.broadcast %91 : vector<6x1xf32> to vector<6x208xf32>
    %93 = arith.addf %90, %92 : vector<6x208xf32>
    %cst_81 = arith.constant 0.000000e+00 : f32
    %94 = vector.broadcast %cst_81 : f32 to vector<6x208xf32>
    %95 = arith.maximumf %93, %94 : vector<6x208xf32>
    %c3_82 = arith.constant 3 : index
    %c0_83 = arith.constant 0 : index
    %c0_84 = arith.constant 0 : index
    %96 = vector.load %arg9[%c3_82, %c0_83, %c0_84] : memref<6x6x4xf32, #tpu.memory_space<vmem>>, vector<1x6x4xf32>
    %97 = vector.shape_cast %96 : vector<1x6x4xf32> to vector<6x4xf32>
    %cst_85 = arith.constant dense<0.000000e+00> : vector<6x208xf32>
    %98 = tpu.matmul %97, %73, %cst_85 {dimension_numbers = #tpu.dot_dimension_numbers<[1], [0], [0], [1], [0, 0, 1, 1], [], []>} : vector<6x4xf32>, vector<4x208xf32>, vector<6x208xf32> -> vector<6x208xf32>
    %c4_86 = arith.constant 4 : index
    %c0_87 = arith.constant 0 : index
    %c0_88 = arith.constant 0 : index
    %99 = vector.load %arg9[%c4_86, %c0_87, %c0_88] : memref<6x6x4xf32, #tpu.memory_space<vmem>>, vector<1x6x4xf32>
    %100 = vector.shape_cast %99 : vector<1x6x4xf32> to vector<6x4xf32>
    %cst_89 = arith.constant dense<0.000000e+00> : vector<6x208xf32>
    %101 = tpu.matmul %100, %76, %cst_89 {dimension_numbers = #tpu.dot_dimension_numbers<[1], [0], [0], [1], [0, 0, 1, 1], [], []>} : vector<6x4xf32>, vector<4x208xf32>, vector<6x208xf32> -> vector<6x208xf32>
    %102 = arith.addf %98, %101 : vector<6x208xf32>
    %c5 = arith.constant 5 : index
    %c0_90 = arith.constant 0 : index
    %c0_91 = arith.constant 0 : index
    %103 = vector.load %arg9[%c5, %c0_90, %c0_91] : memref<6x6x4xf32, #tpu.memory_space<vmem>>, vector<1x6x4xf32>
    %104 = vector.shape_cast %103 : vector<1x6x4xf32> to vector<6x4xf32>
    %cst_92 = arith.constant dense<0.000000e+00> : vector<6x208xf32>
    %105 = tpu.matmul %104, %79, %cst_92 {dimension_numbers = #tpu.dot_dimension_numbers<[1], [0], [0], [1], [0, 0, 1, 1], [], []>} : vector<6x4xf32>, vector<4x208xf32>, vector<6x208xf32> -> vector<6x208xf32>
    %106 = arith.addf %102, %105 : vector<6x208xf32>
    %c0_93 = arith.constant 0 : index
    %c0_94 = arith.constant 0 : index
    %107 = vector.load %arg10[%c0_93, %c0_94] : memref<6x1xf32, #tpu.memory_space<vmem>>, vector<6x1xf32>
    %108 = vector.broadcast %107 : vector<6x1xf32> to vector<6x208xf32>
    %109 = arith.addf %106, %108 : vector<6x208xf32>
    %cst_95 = arith.constant 0.000000e+00 : f32
    %110 = vector.broadcast %cst_95 : f32 to vector<6x208xf32>
    %111 = arith.maximumf %109, %110 : vector<6x208xf32>
    %112 = arith.maximumf %95, %111 : vector<6x208xf32>
    %c0_96 = arith.constant 0 : index
    %c0_97 = arith.constant 0 : index
    %c0_98 = arith.constant 0 : index
    %113 = vector.load %arg11[%c0_96, %c0_97, %c0_98] : memref<2x208x103xf32, #tpu.memory_space<vmem>>, vector<1x208x103xf32>
    %114 = vector.shape_cast %113 : vector<1x208x103xf32> to vector<208x103xf32>
    %cst_99 = arith.constant dense<0.000000e+00> : vector<6x103xf32>
    %115 = tpu.matmul %112, %114, %cst_99 {dimension_numbers = #tpu.dot_dimension_numbers<[1], [0], [0], [1], [0, 0, 1, 1], [], []>} : vector<6x208xf32>, vector<208x103xf32>, vector<6x103xf32> -> vector<6x103xf32>
    %c1_100 = arith.constant 1 : index
    %c0_101 = arith.constant 0 : index
    %c0_102 = arith.constant 0 : index
    %116 = vector.load %arg11[%c1_100, %c0_101, %c0_102] : memref<2x208x103xf32, #tpu.memory_space<vmem>>, vector<1x208x103xf32>
    %117 = vector.shape_cast %116 : vector<1x208x103xf32> to vector<208x103xf32>
    %cst_103 = arith.constant dense<0.000000e+00> : vector<6x103xf32>
    %118 = tpu.matmul %112, %117, %cst_103 {dimension_numbers = #tpu.dot_dimension_numbers<[1], [0], [0], [1], [0, 0, 1, 1], [], []>} : vector<6x208xf32>, vector<208x103xf32>, vector<6x103xf32> -> vector<6x103xf32>
    %119 = arith.maximumf %115, %118 : vector<6x103xf32>
    %c0_104 = arith.constant 0 : index
    %c0_105 = arith.constant 0 : index
    %120 = vector.load %arg13[%c0_104, %c0_105] : memref<1x64xf32, #tpu.memory_space<vmem>>, vector<1x64xf32>
    %121 = vector.extract_strided_slice %119 {offsets = [0, 0], sizes = [1, 103], strides = [1, 1]} : vector<6x103xf32> to vector<1x103xf32>
    %c0_106 = arith.constant 0 : index
    %c0_107 = arith.constant 0 : index
    %c0_108 = arith.constant 0 : index
    %122 = vector.load %arg12[%c0_106, %c0_107, %c0_108] : memref<6x103x64xf32, #tpu.memory_space<vmem>>, vector<1x103x64xf32>
    %123 = vector.shape_cast %122 : vector<1x103x64xf32> to vector<103x64xf32>
    %cst_109 = arith.constant dense<0.000000e+00> : vector<1x64xf32>
    %124 = tpu.matmul %121, %123, %cst_109 {dimension_numbers = #tpu.dot_dimension_numbers<[1], [0], [0], [1], [0, 0, 1, 1], [], []>} : vector<1x103xf32>, vector<103x64xf32>, vector<1x64xf32> -> vector<1x64xf32>
    %125 = arith.addf %120, %124 : vector<1x64xf32>
    %126 = vector.extract_strided_slice %119 {offsets = [1, 0], sizes = [1, 103], strides = [1, 1]} : vector<6x103xf32> to vector<1x103xf32>
    %c1_110 = arith.constant 1 : index
    %c0_111 = arith.constant 0 : index
    %c0_112 = arith.constant 0 : index
    %127 = vector.load %arg12[%c1_110, %c0_111, %c0_112] : memref<6x103x64xf32, #tpu.memory_space<vmem>>, vector<1x103x64xf32>
    %128 = vector.shape_cast %127 : vector<1x103x64xf32> to vector<103x64xf32>
    %cst_113 = arith.constant dense<0.000000e+00> : vector<1x64xf32>
    %129 = tpu.matmul %126, %128, %cst_113 {dimension_numbers = #tpu.dot_dimension_numbers<[1], [0], [0], [1], [0, 0, 1, 1], [], []>} : vector<1x103xf32>, vector<103x64xf32>, vector<1x64xf32> -> vector<1x64xf32>
    %130 = arith.addf %125, %129 : vector<1x64xf32>
    %131 = vector.extract_strided_slice %119 {offsets = [2, 0], sizes = [1, 103], strides = [1, 1]} : vector<6x103xf32> to vector<1x103xf32>
    %c2_114 = arith.constant 2 : index
    %c0_115 = arith.constant 0 : index
    %c0_116 = arith.constant 0 : index
    %132 = vector.load %arg12[%c2_114, %c0_115, %c0_116] : memref<6x103x64xf32, #tpu.memory_space<vmem>>, vector<1x103x64xf32>
    %133 = vector.shape_cast %132 : vector<1x103x64xf32> to vector<103x64xf32>
    %cst_117 = arith.constant dense<0.000000e+00> : vector<1x64xf32>
    %134 = tpu.matmul %131, %133, %cst_117 {dimension_numbers = #tpu.dot_dimension_numbers<[1], [0], [0], [1], [0, 0, 1, 1], [], []>} : vector<1x103xf32>, vector<103x64xf32>, vector<1x64xf32> -> vector<1x64xf32>
    %135 = arith.addf %130, %134 : vector<1x64xf32>
    %136 = vector.extract_strided_slice %119 {offsets = [3, 0], sizes = [1, 103], strides = [1, 1]} : vector<6x103xf32> to vector<1x103xf32>
    %c3_118 = arith.constant 3 : index
    %c0_119 = arith.constant 0 : index
    %c0_120 = arith.constant 0 : index
    %137 = vector.load %arg12[%c3_118, %c0_119, %c0_120] : memref<6x103x64xf32, #tpu.memory_space<vmem>>, vector<1x103x64xf32>
    %138 = vector.shape_cast %137 : vector<1x103x64xf32> to vector<103x64xf32>
    %cst_121 = arith.constant dense<0.000000e+00> : vector<1x64xf32>
    %139 = tpu.matmul %136, %138, %cst_121 {dimension_numbers = #tpu.dot_dimension_numbers<[1], [0], [0], [1], [0, 0, 1, 1], [], []>} : vector<1x103xf32>, vector<103x64xf32>, vector<1x64xf32> -> vector<1x64xf32>
    %140 = arith.addf %135, %139 : vector<1x64xf32>
    %141 = vector.extract_strided_slice %119 {offsets = [4, 0], sizes = [1, 103], strides = [1, 1]} : vector<6x103xf32> to vector<1x103xf32>
    %c4_122 = arith.constant 4 : index
    %c0_123 = arith.constant 0 : index
    %c0_124 = arith.constant 0 : index
    %142 = vector.load %arg12[%c4_122, %c0_123, %c0_124] : memref<6x103x64xf32, #tpu.memory_space<vmem>>, vector<1x103x64xf32>
    %143 = vector.shape_cast %142 : vector<1x103x64xf32> to vector<103x64xf32>
    %cst_125 = arith.constant dense<0.000000e+00> : vector<1x64xf32>
    %144 = tpu.matmul %141, %143, %cst_125 {dimension_numbers = #tpu.dot_dimension_numbers<[1], [0], [0], [1], [0, 0, 1, 1], [], []>} : vector<1x103xf32>, vector<103x64xf32>, vector<1x64xf32> -> vector<1x64xf32>
    %145 = arith.addf %140, %144 : vector<1x64xf32>
    %146 = vector.extract_strided_slice %119 {offsets = [5, 0], sizes = [1, 103], strides = [1, 1]} : vector<6x103xf32> to vector<1x103xf32>
    %c5_126 = arith.constant 5 : index
    %c0_127 = arith.constant 0 : index
    %c0_128 = arith.constant 0 : index
    %147 = vector.load %arg12[%c5_126, %c0_127, %c0_128] : memref<6x103x64xf32, #tpu.memory_space<vmem>>, vector<1x103x64xf32>
    %148 = vector.shape_cast %147 : vector<1x103x64xf32> to vector<103x64xf32>
    %cst_129 = arith.constant dense<0.000000e+00> : vector<1x64xf32>
    %149 = tpu.matmul %146, %148, %cst_129 {dimension_numbers = #tpu.dot_dimension_numbers<[1], [0], [0], [1], [0, 0, 1, 1], [], []>} : vector<1x103xf32>, vector<103x64xf32>, vector<1x64xf32> -> vector<1x64xf32>
    %150 = arith.addf %145, %149 : vector<1x64xf32>
    %cst_130 = arith.constant 0.000000e+00 : f32
    %151 = vector.broadcast %cst_130 : f32 to vector<1x64xf32>
    %152 = arith.maximumf %150, %151 : vector<1x64xf32>
    %c0_131 = arith.constant 0 : index
    %c0_132 = arith.constant 0 : index
    %153 = vector.load %arg14[%c0_131, %c0_132] : memref<64x32xf32, #tpu.memory_space<vmem>>, vector<64x32xf32>
    %cst_133 = arith.constant dense<0.000000e+00> : vector<1x32xf32>
    %154 = tpu.matmul %152, %153, %cst_133 {dimension_numbers = #tpu.dot_dimension_numbers<[1], [0], [0], [1], [0, 0, 1, 1], [], []>} : vector<1x64xf32>, vector<64x32xf32>, vector<1x32xf32> -> vector<1x32xf32>
    %c0_134 = arith.constant 0 : index
    %c0_135 = arith.constant 0 : index
    %155 = vector.load %arg15[%c0_134, %c0_135] : memref<1x32xf32, #tpu.memory_space<vmem>>, vector<1x32xf32>
    %156 = arith.addf %154, %155 : vector<1x32xf32>
    %cst_136 = arith.constant 0.000000e+00 : f32
    %157 = vector.broadcast %cst_136 : f32 to vector<1x32xf32>
    %158 = arith.maximumf %156, %157 : vector<1x32xf32>
    %c0_137 = arith.constant 0 : index
    %c0_138 = arith.constant 0 : index
    %159 = vector.load %arg16[%c0_137, %c0_138] : memref<32x3xf32, #tpu.memory_space<vmem>>, vector<32x3xf32>
    %cst_139 = arith.constant dense<0.000000e+00> : vector<1x3xf32>
    %160 = tpu.matmul %158, %159, %cst_139 {dimension_numbers = #tpu.dot_dimension_numbers<[1], [0], [0], [1], [0, 0, 1, 1], [], []>} : vector<1x32xf32>, vector<32x3xf32>, vector<1x3xf32> -> vector<1x3xf32>
    %c0_140 = arith.constant 0 : index
    %c0_141 = arith.constant 0 : index
    %161 = vector.load %arg17[%c0_140, %c0_141] : memref<1x3xf32, #tpu.memory_space<vmem>>, vector<1x3xf32>
    %162 = arith.addf %160, %161 : vector<1x3xf32>
    %c0_142 = arith.constant 0 : index
    %c0_143 = arith.constant 0 : index
    %c0_144 = arith.constant 0 : index
    %163 = vector.load %arg18[%c0_142, %c0_143, %c0_144] : memref<1x1x3xf32, #tpu.memory_space<vmem>>, vector<1x1x3xf32>
    %164 = vector.shape_cast %163 : vector<1x1x3xf32> to vector<1x3xf32>
    %165 = vector.shape_cast %162 : vector<1x3xf32> to vector<1x1x3xf32>
    tpu.vector_store %arg18[%c0_142, %c0_143, %c0_144], %165 {strides = array<i32>} : memref<1x1x3xf32, #tpu.memory_space<vmem>>, vector<1x1x3xf32>,
    return
  }
  func.func @transform_0(%arg0: i32) -> (i32, i32, i32) {
    %c0_i32 = arith.constant 0 : i32
    %c0_i32_0 = arith.constant 0 : i32
    %c0_i32_1 = arith.constant 0 : i32
    return %arg0, %c0_i32, %c0_i32_0 : i32, i32, i32
  }
  func.func @transform_1(%arg0: i32) -> (i32, i32, i32) {
    %c0_i32 = arith.constant 0 : i32
    %c0_i32_0 = arith.constant 0 : i32
    %c0_i32_1 = arith.constant 0 : i32
    %c0_i32_2 = arith.constant 0 : i32
    return %c0_i32, %c0_i32_0, %c0_i32_1 : i32, i32, i32
  }
  func.func @transform_2(%arg0: i32) -> (i32, i32) {
    %c0_i32 = arith.constant 0 : i32
    %c0_i32_0 = arith.constant 0 : i32
    %c0_i32_1 = arith.constant 0 : i32
    return %c0_i32, %c0_i32_0 : i32, i32
  }
  func.func @transform_3(%arg0: i32) -> (i32, i32, i32) {
    %c0_i32 = arith.constant 0 : i32
    %c0_i32_0 = arith.constant 0 : i32
    %c0_i32_1 = arith.constant 0 : i32
    %c0_i32_2 = arith.constant 0 : i32
    return %c0_i32, %c0_i32_0, %c0_i32_1 : i32, i32, i32
  }
  func.func @transform_4(%arg0: i32) -> (i32, i32, i32) {
    %c0_i32 = arith.constant 0 : i32
    %c0_i32_0 = arith.constant 0 : i32
    %c0_i32_1 = arith.constant 0 : i32
    %c0_i32_2 = arith.constant 0 : i32
    return %c0_i32, %c0_i32_0, %c0_i32_1 : i32, i32, i32
  }
  func.func @transform_5(%arg0: i32) -> (i32, i32) {
    %c0_i32 = arith.constant 0 : i32
    %c0_i32_0 = arith.constant 0 : i32
    %c0_i32_1 = arith.constant 0 : i32
    return %c0_i32, %c0_i32_0 : i32, i32
  }
  func.func @transform_6(%arg0: i32) -> (i32, i32, i32) {
    %c0_i32 = arith.constant 0 : i32
    %c0_i32_0 = arith.constant 0 : i32
    %c0_i32_1 = arith.constant 0 : i32
    %c0_i32_2 = arith.constant 0 : i32
    return %c0_i32, %c0_i32_0, %c0_i32_1 : i32, i32, i32
  }
  func.func @transform_7(%arg0: i32) -> (i32, i32, i32) {
    %c0_i32 = arith.constant 0 : i32
    %c0_i32_0 = arith.constant 0 : i32
    %c0_i32_1 = arith.constant 0 : i32
    %c0_i32_2 = arith.constant 0 : i32
    return %c0_i32, %c0_i32_0, %c0_i32_1 : i32, i32, i32
  }
  func.func @transform_8(%arg0: i32) -> (i32, i32, i32) {
    %c0_i32 = arith.constant 0 : i32
    %c0_i32_0 = arith.constant 0 : i32
    %c0_i32_1 = arith.constant 0 : i32
    %c0_i32_2 = arith.constant 0 : i32
    return %c0_i32, %c0_i32_0, %c0_i32_1 : i32, i32, i32
  }
  func.func @transform_9(%arg0: i32) -> (i32, i32) {
    %c0_i32 = arith.constant 0 : i32
    %c0_i32_0 = arith.constant 0 : i32
    %c0_i32_1 = arith.constant 0 : i32
    return %c0_i32, %c0_i32_0 : i32, i32
  }
  func.func @transform_10(%arg0: i32) -> (i32, i32, i32) {
    %c0_i32 = arith.constant 0 : i32
    %c0_i32_0 = arith.constant 0 : i32
    %c0_i32_1 = arith.constant 0 : i32
    %c0_i32_2 = arith.constant 0 : i32
    return %c0_i32, %c0_i32_0, %c0_i32_1 : i32, i32, i32
  }
  func.func @transform_11(%arg0: i32) -> (i32, i32, i32) {
    %c0_i32 = arith.constant 0 : i32
    %c0_i32_0 = arith.constant 0 : i32
    %c0_i32_1 = arith.constant 0 : i32
    %c0_i32_2 = arith.constant 0 : i32
    return %c0_i32, %c0_i32_0, %c0_i32_1 : i32, i32, i32
  }
  func.func @transform_12(%arg0: i32) -> (i32, i32) {
    %c0_i32 = arith.constant 0 : i32
    %c0_i32_0 = arith.constant 0 : i32
    %c0_i32_1 = arith.constant 0 : i32
    return %c0_i32, %c0_i32_0 : i32, i32
  }
  func.func @transform_13(%arg0: i32) -> (i32, i32) {
    %c0_i32 = arith.constant 0 : i32
    %c0_i32_0 = arith.constant 0 : i32
    %c0_i32_1 = arith.constant 0 : i32
    return %c0_i32, %c0_i32_0 : i32, i32
  }
  func.func @transform_14(%arg0: i32) -> (i32, i32) {
    %c0_i32 = arith.constant 0 : i32
    %c0_i32_0 = arith.constant 0 : i32
    %c0_i32_1 = arith.constant 0 : i32
    return %c0_i32, %c0_i32_0 : i32, i32
  }
  func.func @transform_15(%arg0: i32) -> (i32, i32) {
    %c0_i32 = arith.constant 0 : i32
    %c0_i32_0 = arith.constant 0 : i32
    %c0_i32_1 = arith.constant 0 : i32
    return %c0_i32, %c0_i32_0 : i32, i32
  }
  func.func @transform_16(%arg0: i32) -> (i32, i32) {
    %c0_i32 = arith.constant 0 : i32
    %c0_i32_0 = arith.constant 0 : i32
    %c0_i32_1 = arith.constant 0 : i32
    return %c0_i32, %c0_i32_0 : i32, i32
  }
  func.func @transform_17(%arg0: i32) -> (i32, i32, i32) {
    %c0_i32 = arith.constant 0 : i32
    %c0_i32_0 = arith.constant 0 : i32
    %c0_i32_1 = arith.constant 0 : i32
    return %arg0, %c0_i32, %c0_i32_0 : i32, i32, i32
  }
}

</mosaic_0001>

<llo_original>
// kernel: forward.1
$region0: #{forward.1}
  #allocation0 [shape = 'u32[]', space=smem, size = 0x4, offset = 0x4, fixed_abs, tag = 'smem constant byte address 0x4 - core index']
  #allocation1 [shape = 'u32[72,128]{1,0:T(1,128)}', space=vmem, size = 0x9000, scoped, tag = 'internal scratch']
  %s0 = inlined_call_operand.vmem [shape: f32[2,28,52], index: 0, kind: input, shape index: {}]
  %s1 = inlined_call_operand.vmem [shape: f32[5,52,104], index: 1, kind: input, shape index: {}]
  %s2 = inlined_call_operand.vmem [shape: f32[1,104], index: 2, kind: input, shape index: {}]
  %s3 = inlined_call_operand.vmem [shape: f32[2,12,24], index: 3, kind: input, shape index: {}]
  %s4 = inlined_call_operand.vmem [shape: f32[5,104,208], index: 4, kind: input, shape index: {}]
  %s5 = inlined_call_operand.vmem [shape: f32[1,208], index: 5, kind: input, shape index: {}]
  %s6 = inlined_call_operand.vmem [shape: f32[2,4,8], index: 6, kind: input, shape index: {}]
  %s7 = inlined_call_operand.hbm [shape: f32[2,208,208], index: 7, kind: input, shape index: {}]
  %s8 = inlined_call_operand.vmem [shape: f32[6,6,4], index: 8, kind: input, shape index: {}]
  %s9 = inlined_call_operand.vmem [shape: f32[6,1], index: 9, kind: input, shape index: {}]
  %s10 = inlined_call_operand.vmem [shape: f32[2,208,103], index: 10, kind: input, shape index: {}]
  %s11 = inlined_call_operand.vmem [shape: f32[6,103,64], index: 11, kind: input, shape index: {}]
  %s12 = inlined_call_operand.vmem [shape: f32[1,64], index: 12, kind: input, shape index: {}]
  %s13 = inlined_call_operand.vmem [shape: f32[64,32], index: 13, kind: input, shape index: {}]
  %s14 = inlined_call_operand.vmem [shape: f32[1,32], index: 14, kind: input, shape index: {}]
  %s15 = inlined_call_operand.vmem [shape: f32[32,3], index: 15, kind: input, shape index: {}]
  %s16 = inlined_call_operand.vmem [shape: f32[1,3], index: 16, kind: input, shape index: {}]
  %s17 = inlined_call_operand.hbm [shape: f32[2,1,3], index: 17, kind: output, shape index: {}]
  %s18 = sld [smem:[#allocation0]]
  $region105: #{forward.1} parent=0
    _
  %s20 = ssub.s32 1, %s18
  %s21 = scalar_select 0, %s20, %s18
  $region1: #{forward.1} parent=0
    #allocation2 [shape = 'u8[425984]{0}', space=vmem, size = 0x68000, scoped, tag = 'input window, operand 7, single buffered']
    #allocation3 [shape = 's32[2]{0}', space=sflag, size = 0x8, scoped, tag = 'scoped memory for forward.1']
    #allocation4 [shape = 's32[2]{0}', space=sflag, size = 0x8, scoped, tag = 'scoped memory for forward.1']
    #allocation5 [shape = 'u8[1024]{0}', space=vmem, size = 0x400, scoped, tag = 'output window, operand 0']
    %22 = vsyncpa [#allocation3], 0
    %23 = vsyncpa [#allocation4], 0
    %s24 = scalar_lea.sflag [#allocation4], 1
    %25 = vsyncpa %s24, 0
    loop: start=0, step=1, limit=4
    $region2: #{forward.1} parent=1 // loop_pre_header
      _
    $region3: #{forward.1} parent=1 // loop_header
      %s27 = sphi 0, %s31
      %p28 = scmp.ge.s32.totalorder %s27, 4
      %s37 = sphi 0, %s39
      %s40 = sphi 0, %s37
      %s41 = sphi 0, %s40
      %s57 = sphi 0, %s41
      %s61 = sphi 0, %s61
      %s63 = sphi 0, %s61
      %s64 = sphi 0, %s63
      %s78 = sphi 0, %s64
      %s82 = sphi 0, %s82
      %s84 = sphi 0, %s82
      %s85 = sphi 0, %s84
      %s99 = sphi 0, %s85
      %s103 = sphi 0, %s103
      %s105 = sphi 0, %s103
      %s106 = sphi 0, %s105
      %s120 = sphi 0, %s106
      %s124 = sphi 0, %s124
      %s126 = sphi 0, %s124
      %s127 = sphi 0, %s126
      %s141 = sphi 0, %s127
      %s145 = sphi 0, %s145
      %s147 = sphi 0, %s145
      %s148 = sphi 0, %s147
      %s162 = sphi 0, %s148
      %s166 = sphi 0, %s166
      %s168 = sphi 0, %s166
      %s169 = sphi 0, %s168
      %s183 = sphi 0, %s169
      %s187 = sphi 0, %s187
      %s189 = sphi 0, %s187
      %s190 = sphi 0, %s189
      %s204 = sphi 0, %s190
      %s208 = sphi 0, %s208
      %s210 = sphi 0, %s208
      %s211 = sphi 0, %s210
      %s225 = sphi 0, %s211
      %s229 = sphi 0, %s229
      %s231 = sphi 0, %s229
      %s232 = sphi 0, %s231
      %s246 = sphi 0, %s232
      %s250 = sphi 0, %s250
      %s252 = sphi 0, %s250
      %s253 = sphi 0, %s252
      %s267 = sphi 0, %s253
      %s271 = sphi 0, %s271
      %s273 = sphi 0, %s271
      %s274 = sphi 0, %s273
      %s288 = sphi 0, %s274
      %s292 = sphi 0, %s292
      %s294 = sphi 0, %s292
      %s295 = sphi 0, %s294
      %s309 = sphi 0, %s295
      %s313 = sphi 0, %s313
      %s315 = sphi 0, %s313
      %s316 = sphi 0, %s315
      %s330 = sphi 0, %s316
      %s334 = sphi 0, %s334
      %s336 = sphi 0, %s334
      %s337 = sphi 0, %s336
      %s351 = sphi 0, %s337
      %s355 = sphi 0, %s355
      %s357 = sphi 0, %s355
      %s358 = sphi 0, %s357
      %s372 = sphi 0, %s358
      %s376 = sphi 0, %s376
      %s378 = sphi 0, %s376
      %s379 = sphi 0, %s378
      %s393 = sphi 0, %s379
      %s399 = sphi 0, %s401
      %s402 = sphi 0, %s399
      %s403 = sphi 0, %s402
      %s419 = sphi 0, %s403
    $region4: #{forward.1} parent=1 // loop_header_branch
      %30 = sbr.rel (%p28) target = $region8
    $region5: #{forward.1} parent=1 // loop_body
      %s32 = ssub.s32 %s27, 1
      %s33 = ssub.s32 %s27, 2
      %s34 = sadd.s32 %s27, 1
      %s35 = ssub.s32 %s27, %s34
      %p36 = scmp.eq.s32.totalorder %s35, 0
      %s38 = sadd.s32 %s37, 1
      %s39 = scalar_select %p36, %s37, %s38
      %p42 = pneg %p36
      %p43 = scmp.eq.s32.totalorder %s27, 1
      %p44 = por %p42, %p43
      %p45 = scmp.ne.s32.totalorder %s37, %s40
      %p46 = scmp.eq.s32.totalorder %s27, 0
      %p47 = por %p45, %p46
      %p48 = scmp.ne.s32.totalorder %s37, %s40
      %p49 = scmp.eq.s32.totalorder %s32, 1
      %p50 = por %p48, %p49
      %p51 = scmp.ne.s32.totalorder %s40, %s41
      %p52 = scmp.eq.s32.totalorder %s32, 0
      %p53 = por %p51, %p52
      %p54 = scmp.ne.s32.totalorder %s40, %s41
      %p55 = scmp.eq.s32.totalorder %s33, 1
      %p56 = por %p54, %p55
      %p58 = scmp.ne.s32.totalorder %s41, %s57
      %p59 = scmp.eq.s32.totalorder %s33, 0
      %p60 = por %p58, %p59
      %s62 = sadd.s32 %s61, 1
      %p65 = scmp.eq.s32.totalorder %s27, 1
      %p66 = scmp.ne.s32.totalorder %s61, %s63
      %p67 = scmp.eq.s32.totalorder %s27, 0
      %p68 = por %p66, %p67
      %p69 = scmp.ne.s32.totalorder %s61, %s63
      %p70 = scmp.eq.s32.totalorder %s32, 1
      %p71 = por %p69, %p70
      %p72 = scmp.ne.s32.totalorder %s63, %s64
      %p73 = scmp.eq.s32.totalorder %s32, 0
      %p74 = por %p72, %p73
      %p75 = scmp.ne.s32.totalorder %s63, %s64
      %p76 = scmp.eq.s32.totalorder %s33, 1
      %p77 = por %p75, %p76
      %p79 = scmp.ne.s32.totalorder %s64, %s78
      %p80 = scmp.eq.s32.totalorder %s33, 0
      %p81 = por %p79, %p80
      %s83 = sadd.s32 %s82, 1
      %p86 = scmp.eq.s32.totalorder %s27, 1
      %p87 = scmp.ne.s32.totalorder %s82, %s84
      %p88 = scmp.eq.s32.totalorder %s27, 0
      %p89 = por %p87, %p88
      %p90 = scmp.ne.s32.totalorder %s82, %s84
      %p91 = scmp.eq.s32.totalorder %s32, 1
      %p92 = por %p90, %p91
      %p93 = scmp.ne.s32.totalorder %s84, %s85
      %p94 = scmp.eq.s32.totalorder %s32, 0
      %p95 = por %p93, %p94
      %p96 = scmp.ne.s32.totalorder %s84, %s85
      %p97 = scmp.eq.s32.totalorder %s33, 1
      %p98 = por %p96, %p97
      %p100 = scmp.ne.s32.totalorder %s85, %s99
      %p101 = scmp.eq.s32.totalorder %s33, 0
      %p102 = por %p100, %p101
      %s104 = sadd.s32 %s103, 1
      %p107 = scmp.eq.s32.totalorder %s27, 1
      %p108 = scmp.ne.s32.totalorder %s103, %s105
      %p109 = scmp.eq.s32.totalorder %s27, 0
      %p110 = por %p108, %p109
      %p111 = scmp.ne.s32.totalorder %s103, %s105
      %p112 = scmp.eq.s32.totalorder %s32, 1
      %p113 = por %p111, %p112
      %p114 = scmp.ne.s32.totalorder %s105, %s106
      %p115 = scmp.eq.s32.totalorder %s32, 0
      %p116 = por %p114, %p115
      %p117 = scmp.ne.s32.totalorder %s105, %s106
      %p118 = scmp.eq.s32.totalorder %s33, 1
      %p119 = por %p117, %p118
      %p121 = scmp.ne.s32.totalorder %s106, %s120
      %p122 = scmp.eq.s32.totalorder %s33, 0
      %p123 = por %p121, %p122
      %s125 = sadd.s32 %s124, 1
      %p128 = scmp.eq.s32.totalorder %s27, 1
      %p129 = scmp.ne.s32.totalorder %s124, %s126
      %p130 = scmp.eq.s32.totalorder %s27, 0
      %p131 = por %p129, %p130
      %p132 = scmp.ne.s32.totalorder %s124, %s126
      %p133 = scmp.eq.s32.totalorder %s32, 1
      %p134 = por %p132, %p133
      %p135 = scmp.ne.s32.totalorder %s126, %s127
      %p136 = scmp.eq.s32.totalorder %s32, 0
      %p137 = por %p135, %p136
      %p138 = scmp.ne.s32.totalorder %s126, %s127
      %p139 = scmp.eq.s32.totalorder %s33, 1
      %p140 = por %p138, %p139
      %p142 = scmp.ne.s32.totalorder %s127, %s141
      %p143 = scmp.eq.s32.totalorder %s33, 0
      %p144 = por %p142, %p143
      %s146 = sadd.s32 %s145, 1
      %p149 = scmp.eq.s32.totalorder %s27, 1
      %p150 = scmp.ne.s32.totalorder %s145, %s147
      %p151 = scmp.eq.s32.totalorder %s27, 0
      %p152 = por %p150, %p151
      %p153 = scmp.ne.s32.totalorder %s145, %s147
      %p154 = scmp.eq.s32.totalorder %s32, 1
      %p155 = por %p153, %p154
      %p156 = scmp.ne.s32.totalorder %s147, %s148
      %p157 = scmp.eq.s32.totalorder %s32, 0
      %p158 = por %p156, %p157
      %p159 = scmp.ne.s32.totalorder %s147, %s148
      %p160 = scmp.eq.s32.totalorder %s33, 1
      %p161 = por %p159, %p160
      %p163 = scmp.ne.s32.totalorder %s148, %s162
      %p164 = scmp.eq.s32.totalorder %s33, 0
      %p165 = por %p163, %p164
      %s167 = sadd.s32 %s166, 1
      %p170 = scmp.eq.s32.totalorder %s27, 1
      %p171 = scmp.ne.s32.totalorder %s166, %s168
      %p172 = scmp.eq.s32.totalorder %s27, 0
      %p173 = por %p171, %p172
      %p174 = scmp.ne.s32.totalorder %s166, %s168
      %p175 = scmp.eq.s32.totalorder %s32, 1
      %p176 = por %p174, %p175
      %p177 = scmp.ne.s32.totalorder %s168, %s169
      %p178 = scmp.eq.s32.totalorder %s32, 0
      %p179 = por %p177, %p178
      %p180 = scmp.ne.s32.totalorder %s168, %s169
      %p181 = scmp.eq.s32.totalorder %s33, 1
      %p182 = por %p180, %p181
      %p184 = scmp.ne.s32.totalorder %s169, %s183
      %p185 = scmp.eq.s32.totalorder %s33, 0
      %p186 = por %p184, %p185
      %s188 = sadd.s32 %s187, 1
      %p191 = scmp.eq.s32.totalorder %s27, 1
      %p192 = scmp.ne.s32.totalorder %s187, %s189
      %p193 = scmp.eq.s32.totalorder %s27, 0
      %p194 = por %p192, %p193
      %p195 = scmp.ne.s32.totalorder %s187, %s189
      %p196 = scmp.eq.s32.totalorder %s32, 1
      %p197 = por %p195, %p196
      %p198 = scmp.ne.s32.totalorder %s189, %s190
      %p199 = scmp.eq.s32.totalorder %s32, 0
      %p200 = por %p198, %p199
      %p201 = scmp.ne.s32.totalorder %s189, %s190
      %p202 = scmp.eq.s32.totalorder %s33, 1
      %p203 = por %p201, %p202
      %p205 = scmp.ne.s32.totalorder %s190, %s204
      %p206 = scmp.eq.s32.totalorder %s33, 0
      %p207 = por %p205, %p206
      %s209 = sadd.s32 %s208, 1
      %p212 = scmp.eq.s32.totalorder %s27, 1
      %p213 = scmp.ne.s32.totalorder %s208, %s210
      %p214 = scmp.eq.s32.totalorder %s27, 0
      %p215 = por %p213, %p214
      %p216 = scmp.ne.s32.totalorder %s208, %s210
      %p217 = scmp.eq.s32.totalorder %s32, 1
      %p218 = por %p216, %p217
      %p219 = scmp.ne.s32.totalorder %s210, %s211
      %p220 = scmp.eq.s32.totalorder %s32, 0
      %p221 = por %p219, %p220
      %p222 = scmp.ne.s32.totalorder %s210, %s211
      %p223 = scmp.eq.s32.totalorder %s33, 1
      %p224 = por %p222, %p223
      %p226 = scmp.ne.s32.totalorder %s211, %s225
      %p227 = scmp.eq.s32.totalorder %s33, 0
      %p228 = por %p226, %p227
      %s230 = sadd.s32 %s229, 1
      %p233 = scmp.eq.s32.totalorder %s27, 1
      %p234 = scmp.ne.s32.totalorder %s229, %s231
      %p235 = scmp.eq.s32.totalorder %s27, 0
      %p236 = por %p234, %p235
      %p237 = scmp.ne.s32.totalorder %s229, %s231
      %p238 = scmp.eq.s32.totalorder %s32, 1
      %p239 = por %p237, %p238
      %p240 = scmp.ne.s32.totalorder %s231, %s232
      %p241 = scmp.eq.s32.totalorder %s32, 0
      %p242 = por %p240, %p241
      %p243 = scmp.ne.s32.totalorder %s231, %s232
      %p244 = scmp.eq.s32.totalorder %s33, 1
      %p245 = por %p243, %p244
      %p247 = scmp.ne.s32.totalorder %s232, %s246
      %p248 = scmp.eq.s32.totalorder %s33, 0
      %p249 = por %p247, %p248
      %s251 = sadd.s32 %s250, 1
      %p254 = scmp.eq.s32.totalorder %s27, 1
      %p255 = scmp.ne.s32.totalorder %s250, %s252
      %p256 = scmp.eq.s32.totalorder %s27, 0
      %p257 = por %p255, %p256
      %p258 = scmp.ne.s32.totalorder %s250, %s252
      %p259 = scmp.eq.s32.totalorder %s32, 1
      %p260 = por %p258, %p259
      %p261 = scmp.ne.s32.totalorder %s252, %s253
      %p262 = scmp.eq.s32.totalorder %s32, 0
      %p263 = por %p261, %p262
      %p264 = scmp.ne.s32.totalorder %s252, %s253
      %p265 = scmp.eq.s32.totalorder %s33, 1
      %p266 = por %p264, %p265
      %p268 = scmp.ne.s32.totalorder %s253, %s267
      %p269 = scmp.eq.s32.totalorder %s33, 0
      %p270 = por %p268, %p269
      %s272 = sadd.s32 %s271, 1
      %p275 = scmp.eq.s32.totalorder %s27, 1
      %p276 = scmp.ne.s32.totalorder %s271, %s273
      %p277 = scmp.eq.s32.totalorder %s27, 0
      %p278 = por %p276, %p277
      %p279 = scmp.ne.s32.totalorder %s271, %s273
      %p280 = scmp.eq.s32.totalorder %s32, 1
      %p281 = por %p279, %p280
      %p282 = scmp.ne.s32.totalorder %s273, %s274
      %p283 = scmp.eq.s32.totalorder %s32, 0
      %p284 = por %p282, %p283
      %p285 = scmp.ne.s32.totalorder %s273, %s274
      %p286 = scmp.eq.s32.totalorder %s33, 1
      %p287 = por %p285, %p286
      %p289 = scmp.ne.s32.totalorder %s274, %s288
      %p290 = scmp.eq.s32.totalorder %s33, 0
      %p291 = por %p289, %p290
      %s293 = sadd.s32 %s292, 1
      %p296 = scmp.eq.s32.totalorder %s27, 1
      %p297 = scmp.ne.s32.totalorder %s292, %s294
      %p298 = scmp.eq.s32.totalorder %s27, 0
      %p299 = por %p297, %p298
      %p300 = scmp.ne.s32.totalorder %s292, %s294
      %p301 = scmp.eq.s32.totalorder %s32, 1
      %p302 = por %p300, %p301
      %p303 = scmp.ne.s32.totalorder %s294, %s295
      %p304 = scmp.eq.s32.totalorder %s32, 0
      %p305 = por %p303, %p304
      %p306 = scmp.ne.s32.totalorder %s294, %s295
      %p307 = scmp.eq.s32.totalorder %s33, 1
      %p308 = por %p306, %p307
      %p310 = scmp.ne.s32.totalorder %s295, %s309
      %p311 = scmp.eq.s32.totalorder %s33, 0
      %p312 = por %p310, %p311
      %s314 = sadd.s32 %s313, 1
      %p317 = scmp.eq.s32.totalorder %s27, 1
      %p318 = scmp.ne.s32.totalorder %s313, %s315
      %p319 = scmp.eq.s32.totalorder %s27, 0
      %p320 = por %p318, %p319
      %p321 = scmp.ne.s32.totalorder %s313, %s315
      %p322 = scmp.eq.s32.totalorder %s32, 1
      %p323 = por %p321, %p322
      %p324 = scmp.ne.s32.totalorder %s315, %s316
      %p325 = scmp.eq.s32.totalorder %s32, 0
      %p326 = por %p324, %p325
      %p327 = scmp.ne.s32.totalorder %s315, %s316
      %p328 = scmp.eq.s32.totalorder %s33, 1
      %p329 = por %p327, %p328
      %p331 = scmp.ne.s32.totalorder %s316, %s330
      %p332 = scmp.eq.s32.totalorder %s33, 0
      %p333 = por %p331, %p332
      %s335 = sadd.s32 %s334, 1
      %p338 = scmp.eq.s32.totalorder %s27, 1
      %p339 = scmp.ne.s32.totalorder %s334, %s336
      %p340 = scmp.eq.s32.totalorder %s27, 0
      %p341 = por %p339, %p340
      %p342 = scmp.ne.s32.totalorder %s334, %s336
      %p343 = scmp.eq.s32.totalorder %s32, 1
      %p344 = por %p342, %p343
      %p345 = scmp.ne.s32.totalorder %s336, %s337
      %p346 = scmp.eq.s32.totalorder %s32, 0
      %p347 = por %p345, %p346
      %p348 = scmp.ne.s32.totalorder %s336, %s337
      %p349 = scmp.eq.s32.totalorder %s33, 1
      %p350 = por %p348, %p349
      %p352 = scmp.ne.s32.totalorder %s337, %s351
      %p353 = scmp.eq.s32.totalorder %s33, 0
      %p354 = por %p352, %p353
      %s356 = sadd.s32 %s355, 1
      %p359 = scmp.eq.s32.totalorder %s27, 1
      %p360 = scmp.ne.s32.totalorder %s355, %s357
      %p361 = scmp.eq.s32.totalorder %s27, 0
      %p362 = por %p360, %p361
      %p363 = scmp.ne.s32.totalorder %s355, %s357
      %p364 = scmp.eq.s32.totalorder %s32, 1
      %p365 = por %p363, %p364
      %p366 = scmp.ne.s32.totalorder %s357, %s358
      %p367 = scmp.eq.s32.totalorder %s32, 0
      %p368 = por %p366, %p367
      %p369 = scmp.ne.s32.totalorder %s357, %s358
      %p370 = scmp.eq.s32.totalorder %s33, 1
      %p371 = por %p369, %p370
      %p373 = scmp.ne.s32.totalorder %s358, %s372
      %p374 = scmp.eq.s32.totalorder %s33, 0
      %p375 = por %p373, %p374
      %s377 = sadd.s32 %s376, 1
      %p380 = scmp.eq.s32.totalorder %s27, 1
      %p381 = scmp.ne.s32.totalorder %s376, %s378
      %p382 = scmp.eq.s32.totalorder %s27, 0
      %p383 = por %p381, %p382
      %p384 = scmp.ne.s32.totalorder %s376, %s378
      %p385 = scmp.eq.s32.totalorder %s32, 1
      %p386 = por %p384, %p385
      %p387 = scmp.ne.s32.totalorder %s378, %s379
      %p388 = scmp.eq.s32.totalorder %s32, 0
      %p389 = por %p387, %p388
      %p390 = scmp.ne.s32.totalorder %s378, %s379
      %p391 = scmp.eq.s32.totalorder %s33, 1
      %p392 = por %p390, %p391
      %p394 = scmp.ne.s32.totalorder %s379, %s393
      %p395 = scmp.eq.s32.totalorder %s33, 0
      %p396 = por %p394, %p395
      %s397 = ssub.s32 %s27, %s34
      %p398 = scmp.eq.s32.totalorder %s397, 0
      %s400 = sadd.s32 %s399, 1
      %s401 = scalar_select %p398, %s399, %s400
      %p404 = pneg %p398
      %p405 = scmp.eq.s32.totalorder %s27, 1
      %p406 = por %p404, %p405
      %p407 = scmp.ne.s32.totalorder %s399, %s402
      %p408 = scmp.eq.s32.totalorder %s27, 0
      %p409 = por %p407, %p408
      %p410 = scmp.ne.s32.totalorder %s399, %s402
      %p411 = scmp.eq.s32.totalorder %s32, 1
      %p412 = por %p410, %p411
      %p413 = scmp.ne.s32.totalorder %s402, %s403
      %p414 = scmp.eq.s32.totalorder %s32, 0
      %p415 = por %p413, %p414
      %p416 = scmp.ne.s32.totalorder %s402, %s403
      %p417 = scmp.eq.s32.totalorder %s33, 1
      %p418 = por %p416, %p417
      %p420 = scmp.ne.s32.totalorder %s403, %s419
      %p421 = scmp.eq.s32.totalorder %s33, 0
      %p422 = por %p420, %p421
      %p423 = scmp.le.s32.totalorder 1, %s27
      %p424 = scmp.lt.s32.totalorder %s27, 3
      %p425 = pnand %p423, %p424
      %p426 = pneg %p425
      // Predicated region
      $region9: #{forward.1} parent=5 // pred_check
        _
      $region10: #{forward.1} parent=5 // pred_check_branch
        %428 = sbr.rel (%p425) target = $region12
      $region11: #{forward.1} parent=5 // pred_region
        %s429 = ssub.s32 %s27, 1
        // Predicated region
        $region13: #{forward.1} parent=11 // pred_check
          %p430 = pneg %p74
        $region14: #{forward.1} parent=11 // pred_check_branch
          %432 = sbr.rel (%p430) target = $region16
        $region15: #{forward.1} parent=11 // pred_region
          _
        $region16: #{forward.1} parent=11 // pred_fallthru
          _
        // Predicated region
        $region17: #{forward.1} parent=11 // pred_check
          %p433 = pneg %p95
        $region18: #{forward.1} parent=11 // pred_check_branch
          %435 = sbr.rel (%p433) target = $region20
        $region19: #{forward.1} parent=11 // pred_region
          _
        $region20: #{forward.1} parent=11 // pred_fallthru
          _
        // Predicated region
        $region21: #{forward.1} parent=11 // pred_check
          %p436 = pneg %p116
        $region22: #{forward.1} parent=11 // pred_check_branch
          %438 = sbr.rel (%p436) target = $region24
        $region23: #{forward.1} parent=11 // pred_region
          _
        $region24: #{forward.1} parent=11 // pred_fallthru
          _
        // Predicated region
        $region25: #{forward.1} parent=11 // pred_check
          %p439 = pneg %p137
        $region26: #{forward.1} parent=11 // pred_check_branch
          %441 = sbr.rel (%p439) target = $region28
        $region27: #{forward.1} parent=11 // pred_region
          _
        $region28: #{forward.1} parent=11 // pred_fallthru
          _
        // Predicated region
        $region29: #{forward.1} parent=11 // pred_check
          %p442 = pneg %p158
        $region30: #{forward.1} parent=11 // pred_check_branch
          %444 = sbr.rel (%p442) target = $region32
        $region31: #{forward.1} parent=11 // pred_region
          _
        $region32: #{forward.1} parent=11 // pred_fallthru
          _
        // Predicated region
        $region33: #{forward.1} parent=11 // pred_check
          %p445 = pneg %p179
        $region34: #{forward.1} parent=11 // pred_check_branch
          %447 = sbr.rel (%p445) target = $region36
        $region35: #{forward.1} parent=11 // pred_region
          _
        $region36: #{forward.1} parent=11 // pred_fallthru
          _
        // Predicated region
        $region37: #{forward.1} parent=11 // pred_check
          %p448 = pneg %p200
        $region38: #{forward.1} parent=11 // pred_check_branch
          %450 = sbr.rel (%p448) target = $region40
        $region39: #{forward.1} parent=11 // pred_region
          %452 = vsyncadd [#allocation3], 0
          %s453 = sshll.u32 %s7, 4
          %s454 = int_to_ptr.hbm [resolvable:$true] %s453
          %s455 = sshll.u32 [#allocation2], 4
          %s456 = int_to_ptr.vmem [resolvable:$true] %s455
          %461 = dma.hbm_to_vmem [thread:$0]  %s454, 13312, %s456, [#allocation3], 256, 256, 16
        $region40: #{forward.1} parent=11 // pred_fallthru
          _
        // Predicated region
        $region41: #{forward.1} parent=11 // pred_check
          %p462 = pneg %p221
        $region42: #{forward.1} parent=11 // pred_check_branch
          %464 = sbr.rel (%p462) target = $region44
        $region43: #{forward.1} parent=11 // pred_region
          _
        $region44: #{forward.1} parent=11 // pred_fallthru
          _
        // Predicated region
        $region45: #{forward.1} parent=11 // pred_check
          %p465 = pneg %p242
        $region46: #{forward.1} parent=11 // pred_check_branch
          %467 = sbr.rel (%p465) target = $region48
        $region47: #{forward.1} parent=11 // pred_region
          _
        $region48: #{forward.1} parent=11 // pred_fallthru
          _
        // Predicated region
        $region49: #{forward.1} parent=11 // pred_check
          %p468 = pneg %p263
        $region50: #{forward.1} parent=11 // pred_check_branch
          %470 = sbr.rel (%p468) target = $region52
        $region51: #{forward.1} parent=11 // pred_region
          _
        $region52: #{forward.1} parent=11 // pred_fallthru
          _
        // Predicated region
        $region53: #{forward.1} parent=11 // pred_check
          %p471 = pneg %p284
        $region54: #{forward.1} parent=11 // pred_check_branch
          %473 = sbr.rel (%p471) target = $region56
        $region55: #{forward.1} parent=11 // pred_region
          _
        $region56: #{forward.1} parent=11 // pred_fallthru
          _
        // Predicated region
        $region57: #{forward.1} parent=11 // pred_check
          %p474 = pneg %p305
        $region58: #{forward.1} parent=11 // pred_check_branch
          %476 = sbr.rel (%p474) target = $region60
        $region59: #{forward.1} parent=11 // pred_region
          _
        $region60: #{forward.1} parent=11 // pred_fallthru
          _
        // Predicated region
        $region61: #{forward.1} parent=11 // pred_check
          %p477 = pneg %p326
        $region62: #{forward.1} parent=11 // pred_check_branch
          %479 = sbr.rel (%p477) target = $region64
        $region63: #{forward.1} parent=11 // pred_region
          _
        $region64: #{forward.1} parent=11 // pred_fallthru
          _
        // Predicated region
        $region65: #{forward.1} parent=11 // pred_check
          %p480 = pneg %p347
        $region66: #{forward.1} parent=11 // pred_check_branch
          %482 = sbr.rel (%p480) target = $region68
        $region67: #{forward.1} parent=11 // pred_region
          _
        $region68: #{forward.1} parent=11 // pred_fallthru
          _
        // Predicated region
        $region69: #{forward.1} parent=11 // pred_check
          %p483 = pneg %p368
        $region70: #{forward.1} parent=11 // pred_check_branch
          %485 = sbr.rel (%p483) target = $region72
        $region71: #{forward.1} parent=11 // pred_region
          _
        $region72: #{forward.1} parent=11 // pred_fallthru
          _
        // Predicated region
        $region73: #{forward.1} parent=11 // pred_check
          %p486 = pneg %p389
        $region74: #{forward.1} parent=11 // pred_check_branch
          %488 = sbr.rel (%p486) target = $region76
        $region75: #{forward.1} parent=11 // pred_region
          _
        $region76: #{forward.1} parent=11 // pred_fallthru
          _
      $region12: #{forward.1} parent=5 // pred_fallthru
        _
      %p489 = scmp.lt.s32.totalorder %s27, 2
      // Predicated region
      $region77: #{forward.1} parent=5 // pred_check
        %p490 = pneg %p489
      $region78: #{forward.1} parent=5 // pred_check_branch
        %492 = sbr.rel (%p490) target = $region80
      $region79: #{forward.1} parent=5 // pred_region
        // Predicated region
        $region81: #{forward.1} parent=79 // pred_check
          %p493 = pneg %p47
        $region82: #{forward.1} parent=79 // pred_check_branch
          %495 = sbr.rel (%p493) target = $region84
        $region83: #{forward.1} parent=79 // pred_region
          %p496 = scmp.lt.s32.totalorder %s27, 1
          %s497 = scalar_select %p496, %s27, 1
          %s498 = smul.addr %s497, 4
          %s499 = smul.addr %s498, 8
          %s500 = scalar_lea.vmem %s0, %s499
        $region84: #{forward.1} parent=79 // pred_fallthru
          _
      $region80: #{forward.1} parent=5 // pred_fallthru
        _
      %p501 = scmp.le.s32.totalorder 1, %s27
      %p502 = scmp.lt.s32.totalorder %s27, 3
      %p503 = pnand %p501, %p502
      %p504 = pneg %p503
      // Predicated region
      $region85: #{forward.1} parent=5 // pred_check
        _
      $region86: #{forward.1} parent=5 // pred_check_branch
        %506 = sbr.rel (%p503) target = $region88
      $region87: #{forward.1} parent=5 // pred_region
        %s507 = ssub.s32 %s27, 1
        // Predicated region
        $region89: #{forward.1} parent=87 // pred_check
          %p508 = pneg %p200
        $region90: #{forward.1} parent=87 // pred_check_branch
          %510 = sbr.rel (%p508) target = $region92
        $region91: #{forward.1} parent=87 // pred_region
          %512 = dma.done [#allocation3], 13312
        $region92: #{forward.1} parent=87 // pred_fallthru
          _
        %p513 = scmp.lt.s32.totalorder %s32, 1
        %s514 = scalar_select %p513, %s32, 1
        %s515 = smul.addr %s514, 4
        %s516 = smul.addr %s515, 8
        %s517 = scalar_lea.vmem %s0, %s516
        %p518 = pneg %p53
        %p519 = pneg %p50
        %p520 = pneg %p74
        %p521 = pneg %p71
        %p522 = pneg %p95
        %p523 = pneg %p92
        %p524 = pneg %p116
        %p525 = pneg %p113
        %p526 = pneg %p137
        %p527 = pneg %p134
        %p528 = pneg %p158
        %p529 = pneg %p155
        %p530 = pneg %p179
        %p531 = pneg %p176
        %p532 = pneg %p200
        %p533 = pneg %p197
        %p534 = pneg %p221
        %p535 = pneg %p218
        %p536 = pneg %p242
        %p537 = pneg %p239
        %p538 = pneg %p263
        %p539 = pneg %p260
        %p540 = pneg %p284
        %p541 = pneg %p281
        %p542 = pneg %p305
        %p543 = pneg %p302
        %p544 = pneg %p326
        %p545 = pneg %p323
        %p546 = pneg %p347
        %p547 = pneg %p344
        %p548 = pneg %p368
        %p549 = pneg %p365
        %p550 = pneg %p389
        %p551 = pneg %p386
        %p552 = pneg %p415
        %p553 = pneg %p412
        %s554 = sand.u32 %s402, 1
        %s555 = scalar_lea.sflag [#allocation4], %s554
        %s556 = sand.u32 %s402, 1
        %s557 = scalar_lea.vmem [#allocation5], %s556
        %p558 = scmp.lt.s32.totalorder %s32, 1
        %s559 = scalar_select %p558, %s32, 1
        %s560 = smul.addr %s559, 4
        %s561 = smul.addr %s560, 8
        %s562 = scalar_lea.vmem %s0, %s561
        %v563 = vld [vmem:[%s562] sm:$0xff]
        %v564 = vld [vmem:[%s562 + $0x8] sm:$0xff]
        %v565 = vld [vmem:[%s562 + $0x10] sm:$0xff]
        %v566 = vld [vmem:[%s562 + $0x18] sm:$0xf]
        %v567 = vld [vmem:[%s1] sm:$0xff]
        %v568 = vld [vmem:[%s1 + $0x8] sm:$0xff]
        %v569 = vld [vmem:[%s1 + $0x10] sm:$0xff]
        %v570 = vld [vmem:[%s1 + $0x18] sm:$0xff]
        %v571 = vld [vmem:[%s1 + $0x20] sm:$0xff]
        %v572 = vld [vmem:[%s1 + $0x28] sm:$0xff]
        %v573 = vld [vmem:[%s1 + $0x30] sm:$0xf]
        %s574 = scalar_lea.vmem %s1, 56
        %v575 = vld [vmem:[%s574] sm:$0xff]
        %v576 = vld [vmem:[%s574 + $0x8] sm:$0xff]
        %v577 = vld [vmem:[%s574 + $0x10] sm:$0xff]
        %v578 = vld [vmem:[%s574 + $0x18] sm:$0xff]
        %v579 = vld [vmem:[%s574 + $0x20] sm:$0xff]
        %v580 = vld [vmem:[%s574 + $0x28] sm:$0xff]
        %v581 = vld [vmem:[%s574 + $0x30] sm:$0xf]
        %vm586 = vcmask 1046528
        %v587 = vrot.slane %v563, 1
        %v588 = vrot.slane %v564, 1
        %v589 = vsel %vm586, %v587, %v588
        %v590 = vrot.slane %v565, 1
        %v591 = vsel %vm586, %v588, %v590
        %v592 = vrot.slane %v566, 1
        %v593 = vsel %vm586, %v590, %v592
        %vm594 = vcmask 424960
        %v595 = vsel %vm594, %v589, 0
        %v597 = vsel %vm594, %v591, 0
        %v599 = vsel %vm594, %v593, 0
        %vm601 = vcmask 1043456
        %v603 = vsel %vm601, %v581, 0
        %605 = vmatpush.msra.mxu0 0.0
        %606 = vmatpush.msra.mxu0 0.0
        %607 = vmatpush.msra.mxu0 0.0
        %608 = vmatpush.msra.mxu0 0.0
        %609 = vmatpush.msra.mxu0 0.0
        %610 = vmatpush.msra.mxu0 0.0
        %611 = vmatpush.msra.mxu0 0.0
        %612 = vmatpush.msra.mxu0 0.0
        %613 = vmatpush.msra.mxu0 0.0
        %614 = vmatpush.msra.mxu0 %v603
        %615 = vmatpush.msra.mxu0 %v580
        %616 = vmatpush.msra.mxu0 %v579
        %617 = vmatpush.msra.mxu0 %v578
        %618 = vmatpush.msra.mxu0 %v577
        %619 = vmatpush.msra.mxu0 %v576
        %620 = vmatpush.msra.mxu0 %v575
        %621 = vmatmul.f32.gmra.mxu0 %v595
        %v622 = vpop.f32.mrf.mxu0
        %v623 = vadd.f32 0.0, %v622
        %624 = vmatmul.f32.gmra.mxu0 %v597
        %v625 = vpop.f32.mrf.mxu0
        %v626 = vadd.f32 0.0, %v625
        %627 = vmatmul.f32.gmra.mxu0 %v599
        %v628 = vpop.f32.mrf.mxu0
        %v629 = vadd.f32 0.0, %v628
        %630 = vdwg.mxu0
        %v631 = vsel %vm594, %v563, 0
        %v633 = vsel %vm594, %v564, 0
        %v635 = vsel %vm594, %v565, 0
        %v638 = vsel %vm601, %v573, 0
        %640 = vmatpush.msra.mxu0 0.0
        %641 = vmatpush.msra.mxu0 0.0
        %642 = vmatpush.msra.mxu0 0.0
        %643 = vmatpush.msra.mxu0 0.0
        %644 = vmatpush.msra.mxu0 0.0
        %645 = vmatpush.msra.mxu0 0.0
        %646 = vmatpush.msra.mxu0 0.0
        %647 = vmatpush.msra.mxu0 0.0
        %648 = vmatpush.msra.mxu0 0.0
        %649 = vmatpush.msra.mxu0 %v638
        %650 = vmatpush.msra.mxu0 %v572
        %651 = vmatpush.msra.mxu0 %v571
        %652 = vmatpush.msra.mxu0 %v570
        %653 = vmatpush.msra.mxu0 %v569
        %654 = vmatpush.msra.mxu0 %v568
        %655 = vmatpush.msra.mxu0 %v567
        %656 = vmatmul.f32.gmra.mxu0 %v631
        %v657 = vpop.f32.mrf.mxu0
        %v658 = vadd.f32 %v623, %v657
        %659 = vmatmul.f32.gmra.mxu0 %v633
        %v660 = vpop.f32.mrf.mxu0
        %v661 = vadd.f32 %v626, %v660
        %662 = vmatmul.f32.gmra.mxu0 %v635
        %v663 = vpop.f32.mrf.mxu0
        %v664 = vadd.f32 %v629, %v663
        %665 = vdwg.mxu0
        %s666 = scalar_lea.vmem %s1, 112
        %v667 = vld [vmem:[%s666] sm:$0xff]
        %v668 = vld [vmem:[%s666 + $0x8] sm:$0xff]
        %v669 = vld [vmem:[%s666 + $0x10] sm:$0xff]
        %v670 = vld [vmem:[%s666 + $0x18] sm:$0xff]
        %v671 = vld [vmem:[%s666 + $0x20] sm:$0xff]
        %v672 = vld [vmem:[%s666 + $0x28] sm:$0xff]
        %v673 = vld [vmem:[%s666 + $0x30] sm:$0xf]
        %vm674 = vcmask 1045504
        %v675 = vrot.slane %v563, 2
        %v676 = vrot.slane %v564, 2
        %v677 = vsel %vm674, %v675, %v676
        %v678 = vrot.slane %v565, 2
        %v679 = vsel %vm674, %v676, %v678
        %v680 = vrot.slane %v566, 2
        %v681 = vsel %vm674, %v678, %v680
        %v682 = vsel %vm594, %v677, 0
        %v684 = vsel %vm594, %v679, 0
        %v686 = vsel %vm594, %v681, 0
        %v689 = vsel %vm601, %v673, 0
        %691 = vmatpush.msra.mxu0 0.0
        %692 = vmatpush.msra.mxu0 0.0
        %693 = vmatpush.msra.mxu0 0.0
        %694 = vmatpush.msra.mxu0 0.0
        %695 = vmatpush.msra.mxu0 0.0
        %696 = vmatpush.msra.mxu0 0.0
        %697 = vmatpush.msra.mxu0 0.0
        %698 = vmatpush.msra.mxu0 0.0
        %699 = vmatpush.msra.mxu0 0.0
        %700 = vmatpush.msra.mxu0 %v689
        %701 = vmatpush.msra.mxu0 %v672
        %702 = vmatpush.msra.mxu0 %v671
        %703 = vmatpush.msra.mxu0 %v670
        %704 = vmatpush.msra.mxu0 %v669
        %705 = vmatpush.msra.mxu0 %v668
        %706 = vmatpush.msra.mxu0 %v667
        %707 = vmatmul.f32.gmra.mxu0 %v682
        %v708 = vpop.f32.mrf.mxu0
        %v709 = vadd.f32 0.0, %v708
        %710 = vmatmul.f32.gmra.mxu0 %v684
        %v711 = vpop.f32.mrf.mxu0
        %v712 = vadd.f32 0.0, %v711
        %713 = vmatmul.f32.gmra.mxu0 %v686
        %v714 = vpop.f32.mrf.mxu0
        %v715 = vadd.f32 0.0, %v714
        %716 = vdwg.mxu0
        %v717 = vadd.f32 %v658, %v709
        %v718 = vadd.f32 %v661, %v712
        %v719 = vadd.f32 %v664, %v715
        %s720 = scalar_lea.vmem %s1, 168
        %v721 = vld [vmem:[%s720] sm:$0xff]
        %v722 = vld [vmem:[%s720 + $0x8] sm:$0xff]
        %v723 = vld [vmem:[%s720 + $0x10] sm:$0xff]
        %v724 = vld [vmem:[%s720 + $0x18] sm:$0xff]
        %v725 = vld [vmem:[%s720 + $0x20] sm:$0xff]
        %v726 = vld [vmem:[%s720 + $0x28] sm:$0xff]
        %v727 = vld [vmem:[%s720 + $0x30] sm:$0xf]
        %vm728 = vcmask 1044480
        %v729 = vrot.slane %v563, 3
        %v730 = vrot.slane %v564, 3
        %v731 = vsel %vm728, %v729, %v730
        %v732 = vrot.slane %v565, 3
        %v733 = vsel %vm728, %v730, %v732
        %v734 = vrot.slane %v566, 3
        %v735 = vsel %vm728, %v732, %v734
        %v736 = vsel %vm594, %v731, 0
        %v738 = vsel %vm594, %v733, 0
        %v740 = vsel %vm594, %v735, 0
        %v743 = vsel %vm601, %v727, 0
        %745 = vmatpush.msra.mxu0 0.0
        %746 = vmatpush.msra.mxu0 0.0
        %747 = vmatpush.msra.mxu0 0.0
        %748 = vmatpush.msra.mxu0 0.0
        %749 = vmatpush.msra.mxu0 0.0
        %750 = vmatpush.msra.mxu0 0.0
        %751 = vmatpush.msra.mxu0 0.0
        %752 = vmatpush.msra.mxu0 0.0
        %753 = vmatpush.msra.mxu0 0.0
        %754 = vmatpush.msra.mxu0 %v743
        %755 = vmatpush.msra.mxu0 %v726
        %756 = vmatpush.msra.mxu0 %v725
        %757 = vmatpush.msra.mxu0 %v724
        %758 = vmatpush.msra.mxu0 %v723
        %759 = vmatpush.msra.mxu0 %v722
        %760 = vmatpush.msra.mxu0 %v721
        %761 = vmatmul.f32.gmra.mxu0 %v736
        %v762 = vpop.f32.mrf.mxu0
        %v763 = vadd.f32 0.0, %v762
        %764 = vmatmul.f32.gmra.mxu0 %v738
        %v765 = vpop.f32.mrf.mxu0
        %v766 = vadd.f32 0.0, %v765
        %767 = vmatmul.f32.gmra.mxu0 %v740
        %v768 = vpop.f32.mrf.mxu0
        %v769 = vadd.f32 0.0, %v768
        %770 = vdwg.mxu0
        %v771 = vadd.f32 %v717, %v763
        %v772 = vadd.f32 %v718, %v766
        %v773 = vadd.f32 %v719, %v769
        %s774 = scalar_lea.vmem %s1, 224
        %v775 = vld [vmem:[%s774] sm:$0xff]
        %v776 = vld [vmem:[%s774 + $0x8] sm:$0xff]
        %v777 = vld [vmem:[%s774 + $0x10] sm:$0xff]
        %v778 = vld [vmem:[%s774 + $0x18] sm:$0xff]
        %v779 = vld [vmem:[%s774 + $0x20] sm:$0xff]
        %v780 = vld [vmem:[%s774 + $0x28] sm:$0xff]
        %v781 = vld [vmem:[%s774 + $0x30] sm:$0xf]
        %v782 = vrot.slane %v563, 4
        %v783 = vrot.slane %v564, 4
        %v784 = vsel %vm601, %v782, %v783
        %v785 = vrot.slane %v565, 4
        %v786 = vsel %vm601, %v783, %v785
        %v787 = vrot.slane %v566, 4
        %v788 = vsel %vm601, %v785, %v787
        %v789 = vsel %vm594, %v784, 0
        %v791 = vsel %vm594, %v786, 0
        %v793 = vsel %vm594, %v788, 0
        %v796 = vsel %vm601, %v781, 0
        %798 = vmatpush.msra.mxu0 0.0
        %799 = vmatpush.msra.mxu0 0.0
        %800 = vmatpush.msra.mxu0 0.0
        %801 = vmatpush.msra.mxu0 0.0
        %802 = vmatpush.msra.mxu0 0.0
        %803 = vmatpush.msra.mxu0 0.0
        %804 = vmatpush.msra.mxu0 0.0
        %805 = vmatpush.msra.mxu0 0.0
        %806 = vmatpush.msra.mxu0 0.0
        %807 = vmatpush.msra.mxu0 %v796
        %808 = vmatpush.msra.mxu0 %v780
        %809 = vmatpush.msra.mxu0 %v779
        %810 = vmatpush.msra.mxu0 %v778
        %811 = vmatpush.msra.mxu0 %v777
        %812 = vmatpush.msra.mxu0 %v776
        %813 = vmatpush.msra.mxu0 %v775
        %814 = vmatmul.f32.gmra.mxu0 %v789
        %v815 = vpop.f32.mrf.mxu0
        %v816 = vadd.f32 0.0, %v815
        %817 = vmatmul.f32.gmra.mxu0 %v791
        %v818 = vpop.f32.mrf.mxu0
        %v819 = vadd.f32 0.0, %v818
        %820 = vmatmul.f32.gmra.mxu0 %v793
        %v821 = vpop.f32.mrf.mxu0
        %v822 = vadd.f32 0.0, %v821
        %823 = vdwg.mxu0
        %v824 = vadd.f32 %v771, %v816
        %v825 = vadd.f32 %v772, %v819
        %v826 = vadd.f32 %v773, %v822
        %v827 = vld [vmem:[%s2] sm:$0x1]
        %v829 = vperm.slane %v827, 0
        %v831 = vadd.f32 %v824, %v829
        %v832 = vadd.f32 %v825, %v829
        %v833 = vadd.f32 %v826, %v829
        %v834 = vmax.f32 %v831, 0.0
        %v835 = vmax.f32 %v832, 0.0
        %v836 = vmax.f32 %v833, 0.0
        %v837 = vld [vmem:[%s3] sm:$0xff]
        %v838 = vld [vmem:[%s3 + $0x8] sm:$0xf]
        %vm839 = vcmask 195584
        %v841 = vsel %vm839, %v837, 0
        %v844 = vsel %vm839, %v838, 0
        %846 = vmatpush.msra.mxu0 0.0
        %847 = vmatpush.msra.mxu0 0.0
        %848 = vmatpush.msra.mxu0 0.0
        %849 = vmatpush.msra.mxu0 0.0
        %850 = vmatpush.msra.mxu0 0.0
        %851 = vmatpush.msra.mxu0 0.0
        %852 = vmatpush.msra.mxu0 0.0
        %853 = vmatpush.msra.mxu0 0.0
        %854 = vmatpush.msra.mxu0 0.0
        %855 = vmatpush.msra.mxu0 0.0
        %856 = vmatpush.msra.mxu0 0.0
        %857 = vmatpush.msra.mxu0 0.0
        %858 = vmatpush.msra.mxu0 0.0
        %859 = vmatpush.msra.mxu0 %v836
        %860 = vmatpush.msra.mxu0 %v835
        %861 = vmatpush.msra.mxu0 %v834
        %862 = vmatmul.f32.gmra.mxu0 %v841
        %v863 = vpop.f32.mrf.mxu0
        %v864 = vadd.f32 0.0, %v863
        %865 = vmatmul.f32.gmra.mxu0 %v844
        %v866 = vpop.f32.mrf.mxu0
        %v867 = vadd.f32 0.0, %v866
        %868 = vdwg.mxu0
        %s869 = scalar_lea.vmem %s3, 16
        %v870 = vld [vmem:[%s869] sm:$0xff]
        %v871 = vld [vmem:[%s869 + $0x8] sm:$0xf]
        %v873 = vsel %vm839, %v870, 0
        %v876 = vsel %vm839, %v871, 0
        %878 = vmatpush.msra.mxu0 0.0
        %879 = vmatpush.msra.mxu0 0.0
        %880 = vmatpush.msra.mxu0 0.0
        %881 = vmatpush.msra.mxu0 0.0
        %882 = vmatpush.msra.mxu0 0.0
        %883 = vmatpush.msra.mxu0 0.0
        %884 = vmatpush.msra.mxu0 0.0
        %885 = vmatpush.msra.mxu0 0.0
        %886 = vmatpush.msra.mxu0 0.0
        %887 = vmatpush.msra.mxu0 0.0
        %888 = vmatpush.msra.mxu0 0.0
        %889 = vmatpush.msra.mxu0 0.0
        %890 = vmatpush.msra.mxu0 0.0
        %891 = vmatpush.msra.mxu0 %v836
        %892 = vmatpush.msra.mxu0 %v835
        %893 = vmatpush.msra.mxu0 %v834
        %894 = vmatmul.f32.gmra.mxu0 %v873
        %v895 = vpop.f32.mrf.mxu0
        %v896 = vadd.f32 0.0, %v895
        %897 = vmatmul.f32.gmra.mxu0 %v876
        %v898 = vpop.f32.mrf.mxu0
        %v899 = vadd.f32 0.0, %v898
        %900 = vdwg.mxu0
        %v901 = vmax.f32 %v864, %v896
        %v902 = vmax.f32 %v867, %v899
        %v903 = vld [vmem:[%s4] sm:$0xff]
        %v904 = vld [vmem:[%s4 + $0x8] sm:$0xff]
        %v905 = vld [vmem:[%s4 + $0x10] sm:$0xff]
        %v906 = vld [vmem:[%s4 + $0x18] sm:$0xff]
        %v907 = vld [vmem:[%s4 + $0x20] sm:$0xff]
        %v908 = vld [vmem:[%s4 + $0x28] sm:$0xff]
        %v909 = vld [vmem:[%s4 + $0x30] sm:$0xff]
        %v910 = vld [vmem:[%s4 + $0x38] sm:$0xff]
        %v911 = vld [vmem:[%s4 + $0x40] sm:$0xff]
        %v912 = vld [vmem:[%s4 + $0x48] sm:$0xff]
        %v913 = vld [vmem:[%s4 + $0x50] sm:$0xff]
        %v914 = vld [vmem:[%s4 + $0x58] sm:$0xff]
        %v915 = vld [vmem:[%s4 + $0x60] sm:$0xff]
        %v916 = vld [vmem:[%s4 + $0x68] sm:$0xff]
        %v917 = vld [vmem:[%s4 + $0x70] sm:$0xff]
        %v918 = vld [vmem:[%s4 + $0x78] sm:$0xff]
        %v919 = vld [vmem:[%s4 + $0x80] sm:$0xff]
        %v920 = vld [vmem:[%s4 + $0x88] sm:$0xff]
        %v921 = vld [vmem:[%s4 + $0x90] sm:$0xff]
        %v922 = vld [vmem:[%s4 + $0x98] sm:$0xff]
        %v923 = vld [vmem:[%s4 + $0xa0] sm:$0xff]
        %v924 = vld [vmem:[%s4 + $0xa8] sm:$0xff]
        %v925 = vld [vmem:[%s4 + $0xb0] sm:$0xff]
        %v926 = vld [vmem:[%s4 + $0xb8] sm:$0xff]
        %v927 = vld [vmem:[%s4 + $0xc0] sm:$0xff]
        %v928 = vld [vmem:[%s4 + $0xc8] sm:$0xff]
        %s929 = scalar_lea.vmem %s4, 208
        %v930 = vld [vmem:[%s929] sm:$0xff]
        %v931 = vld [vmem:[%s929 + $0x8] sm:$0xff]
        %v932 = vld [vmem:[%s929 + $0x10] sm:$0xff]
        %v933 = vld [vmem:[%s929 + $0x18] sm:$0xff]
        %v934 = vld [vmem:[%s929 + $0x20] sm:$0xff]
        %v935 = vld [vmem:[%s929 + $0x28] sm:$0xff]
        %v936 = vld [vmem:[%s929 + $0x30] sm:$0xff]
        %v937 = vld [vmem:[%s929 + $0x38] sm:$0xff]
        %v938 = vld [vmem:[%s929 + $0x40] sm:$0xff]
        %v939 = vld [vmem:[%s929 + $0x48] sm:$0xff]
        %v940 = vld [vmem:[%s929 + $0x50] sm:$0xff]
        %v941 = vld [vmem:[%s929 + $0x58] sm:$0xff]
        %v942 = vld [vmem:[%s929 + $0x60] sm:$0xff]
        %v943 = vld [vmem:[%s929 + $0x68] sm:$0xff]
        %v944 = vld [vmem:[%s929 + $0x70] sm:$0xff]
        %v945 = vld [vmem:[%s929 + $0x78] sm:$0xff]
        %v946 = vld [vmem:[%s929 + $0x80] sm:$0xff]
        %v947 = vld [vmem:[%s929 + $0x88] sm:$0xff]
        %v948 = vld [vmem:[%s929 + $0x90] sm:$0xff]
        %v949 = vld [vmem:[%s929 + $0x98] sm:$0xff]
        %v950 = vld [vmem:[%s929 + $0xa0] sm:$0xff]
        %v951 = vld [vmem:[%s929 + $0xa8] sm:$0xff]
        %v952 = vld [vmem:[%s929 + $0xb0] sm:$0xff]
        %v953 = vld [vmem:[%s929 + $0xb8] sm:$0xff]
        %v954 = vld [vmem:[%s929 + $0xc0] sm:$0xff]
        %v955 = vld [vmem:[%s929 + $0xc8] sm:$0xff]
        %v958 = vrot.slane %v901, 1
        %v959 = vrot.slane %v902, 1
        %v960 = vsel %vm586, %v958, %v959
        %vm961 = vcmask 850944
        %v962 = vsel %vm961, %v960, 0
        %964 = vmatpush.msra.mxu0 0.0
        %965 = vmatpush.msra.mxu0 0.0
        %966 = vmatpush.msra.mxu0 0.0
        %967 = vmatpush.msra.mxu0 %v954
        %968 = vmatpush.msra.mxu0 %v952
        %969 = vmatpush.msra.mxu0 %v950
        %970 = vmatpush.msra.mxu0 %v948
        %971 = vmatpush.msra.mxu0 %v946
        %972 = vmatpush.msra.mxu0 %v944
        %973 = vmatpush.msra.mxu0 %v942
        %974 = vmatpush.msra.mxu0 %v940
        %975 = vmatpush.msra.mxu0 %v938
        %976 = vmatpush.msra.mxu0 %v936
        %977 = vmatpush.msra.mxu0 %v934
        %978 = vmatpush.msra.mxu0 %v932
        %979 = vmatpush.msra.mxu0 %v930
        %980 = vmatmul.f32.gmra.mxu0 %v962
        %v981 = vpop.f32.mrf.mxu0
        %v982 = vadd.f32 0.0, %v981
        %983 = vdwg.mxu0
        %984 = vmatpush.msra.mxu0 0.0
        %985 = vmatpush.msra.mxu0 0.0
        %986 = vmatpush.msra.mxu0 0.0
        %987 = vmatpush.msra.mxu0 %v955
        %988 = vmatpush.msra.mxu0 %v953
        %989 = vmatpush.msra.mxu0 %v951
        %990 = vmatpush.msra.mxu0 %v949
        %991 = vmatpush.msra.mxu0 %v947
        %992 = vmatpush.msra.mxu0 %v945
        %993 = vmatpush.msra.mxu0 %v943
        %994 = vmatpush.msra.mxu0 %v941
        %995 = vmatpush.msra.mxu0 %v939
        %996 = vmatpush.msra.mxu0 %v937
        %997 = vmatpush.msra.mxu0 %v935
        %998 = vmatpush.msra.mxu0 %v933
        %999 = vmatpush.msra.mxu0 %v931
        %1000 = vmatmul.f32.gmra.mxu0 %v962
        %v1001 = vpop.f32.mrf.mxu0
        %v1002 = vadd.f32 0.0, %v1001
        %1003 = vdwg.mxu0
        %v1004 = vsel %vm961, %v901, 0
        %1006 = vmatpush.msra.mxu0 0.0
        %1007 = vmatpush.msra.mxu0 0.0
        %1008 = vmatpush.msra.mxu0 0.0
        %1009 = vmatpush.msra.mxu0 %v927
        %1010 = vmatpush.msra.mxu0 %v925
        %1011 = vmatpush.msra.mxu0 %v923
        %1012 = vmatpush.msra.mxu0 %v921
        %1013 = vmatpush.msra.mxu0 %v919
        %1014 = vmatpush.msra.mxu0 %v917
        %1015 = vmatpush.msra.mxu0 %v915
        %1016 = vmatpush.msra.mxu0 %v913
        %1017 = vmatpush.msra.mxu0 %v911
        %1018 = vmatpush.msra.mxu0 %v909
        %1019 = vmatpush.msra.mxu0 %v907
        %1020 = vmatpush.msra.mxu0 %v905
        %1021 = vmatpush.msra.mxu0 %v903
        %1022 = vmatmul.f32.gmra.mxu0 %v1004
        %v1023 = vpop.f32.mrf.mxu0
        %v1024 = vadd.f32 %v982, %v1023
        %1025 = vdwg.mxu0
        %1026 = vmatpush.msra.mxu0 0.0
        %1027 = vmatpush.msra.mxu0 0.0
        %1028 = vmatpush.msra.mxu0 0.0
        %1029 = vmatpush.msra.mxu0 %v928
        %1030 = vmatpush.msra.mxu0 %v926
        %1031 = vmatpush.msra.mxu0 %v924
        %1032 = vmatpush.msra.mxu0 %v922
        %1033 = vmatpush.msra.mxu0 %v920
        %1034 = vmatpush.msra.mxu0 %v918
        %1035 = vmatpush.msra.mxu0 %v916
        %1036 = vmatpush.msra.mxu0 %v914
        %1037 = vmatpush.msra.mxu0 %v912
        %1038 = vmatpush.msra.mxu0 %v910
        %1039 = vmatpush.msra.mxu0 %v908
        %1040 = vmatpush.msra.mxu0 %v906
        %1041 = vmatpush.msra.mxu0 %v904
        %1042 = vmatmul.f32.gmra.mxu0 %v1004
        %v1043 = vpop.f32.mrf.mxu0
        %v1044 = vadd.f32 %v1002, %v1043
        %1045 = vdwg.mxu0
        %s1046 = scalar_lea.vmem %s4, 416
        %v1047 = vld [vmem:[%s1046] sm:$0xff]
        %v1048 = vld [vmem:[%s1046 + $0x8] sm:$0xff]
        %v1049 = vld [vmem:[%s1046 + $0x10] sm:$0xff]
        %v1050 = vld [vmem:[%s1046 + $0x18] sm:$0xff]
        %v1051 = vld [vmem:[%s1046 + $0x20] sm:$0xff]
        %v1052 = vld [vmem:[%s1046 + $0x28] sm:$0xff]
        %v1053 = vld [vmem:[%s1046 + $0x30] sm:$0xff]
        %v1054 = vld [vmem:[%s1046 + $0x38] sm:$0xff]
        %v1055 = vld [vmem:[%s1046 + $0x40] sm:$0xff]
        %v1056 = vld [vmem:[%s1046 + $0x48] sm:$0xff]
        %v1057 = vld [vmem:[%s1046 + $0x50] sm:$0xff]
        %v1058 = vld [vmem:[%s1046 + $0x58] sm:$0xff]
        %v1059 = vld [vmem:[%s1046 + $0x60] sm:$0xff]
        %v1060 = vld [vmem:[%s1046 + $0x68] sm:$0xff]
        %v1061 = vld [vmem:[%s1046 + $0x70] sm:$0xff]
        %v1062 = vld [vmem:[%s1046 + $0x78] sm:$0xff]
        %v1063 = vld [vmem:[%s1046 + $0x80] sm:$0xff]
        %v1064 = vld [vmem:[%s1046 + $0x88] sm:$0xff]
        %v1065 = vld [vmem:[%s1046 + $0x90] sm:$0xff]
        %v1066 = vld [vmem:[%s1046 + $0x98] sm:$0xff]
        %v1067 = vld [vmem:[%s1046 + $0xa0] sm:$0xff]
        %v1068 = vld [vmem:[%s1046 + $0xa8] sm:$0xff]
        %v1069 = vld [vmem:[%s1046 + $0xb0] sm:$0xff]
        %v1070 = vld [vmem:[%s1046 + $0xb8] sm:$0xff]
        %v1071 = vld [vmem:[%s1046 + $0xc0] sm:$0xff]
        %v1072 = vld [vmem:[%s1046 + $0xc8] sm:$0xff]
        %v1073 = vrot.slane %v901, 2
        %v1074 = vrot.slane %v902, 2
        %v1075 = vsel %vm674, %v1073, %v1074
        %v1076 = vsel %vm961, %v1075, 0
        %1078 = vmatpush.msra.mxu0 0.0
        %1079 = vmatpush.msra.mxu0 0.0
        %1080 = vmatpush.msra.mxu0 0.0
        %1081 = vmatpush.msra.mxu0 %v1071
        %1082 = vmatpush.msra.mxu0 %v1069
        %1083 = vmatpush.msra.mxu0 %v1067
        %1084 = vmatpush.msra.mxu0 %v1065
        %1085 = vmatpush.msra.mxu0 %v1063
        %1086 = vmatpush.msra.mxu0 %v1061
        %1087 = vmatpush.msra.mxu0 %v1059
        %1088 = vmatpush.msra.mxu0 %v1057
        %1089 = vmatpush.msra.mxu0 %v1055
        %1090 = vmatpush.msra.mxu0 %v1053
        %1091 = vmatpush.msra.mxu0 %v1051
        %1092 = vmatpush.msra.mxu0 %v1049
        %1093 = vmatpush.msra.mxu0 %v1047
        %1094 = vmatmul.f32.gmra.mxu0 %v1076
        %v1095 = vpop.f32.mrf.mxu0
        %v1096 = vadd.f32 0.0, %v1095
        %1097 = vdwg.mxu0
        %1098 = vmatpush.msra.mxu0 0.0
        %1099 = vmatpush.msra.mxu0 0.0
        %1100 = vmatpush.msra.mxu0 0.0
        %1101 = vmatpush.msra.mxu0 %v1072
        %1102 = vmatpush.msra.mxu0 %v1070
        %1103 = vmatpush.msra.mxu0 %v1068
        %1104 = vmatpush.msra.mxu0 %v1066
        %1105 = vmatpush.msra.mxu0 %v1064
        %1106 = vmatpush.msra.mxu0 %v1062
        %1107 = vmatpush.msra.mxu0 %v1060
        %1108 = vmatpush.msra.mxu0 %v1058
        %1109 = vmatpush.msra.mxu0 %v1056
        %1110 = vmatpush.msra.mxu0 %v1054
        %1111 = vmatpush.msra.mxu0 %v1052
        %1112 = vmatpush.msra.mxu0 %v1050
        %1113 = vmatpush.msra.mxu0 %v1048
        %1114 = vmatmul.f32.gmra.mxu0 %v1076
        %v1115 = vpop.f32.mrf.mxu0
        %v1116 = vadd.f32 0.0, %v1115
        %1117 = vdwg.mxu0
        %v1118 = vadd.f32 %v1024, %v1096
        %v1119 = vadd.f32 %v1044, %v1116
        %s1120 = scalar_lea.vmem %s4, 624
        %v1121 = vld [vmem:[%s1120] sm:$0xff]
        %v1122 = vld [vmem:[%s1120 + $0x8] sm:$0xff]
        %v1123 = vld [vmem:[%s1120 + $0x10] sm:$0xff]
        %v1124 = vld [vmem:[%s1120 + $0x18] sm:$0xff]
        %v1125 = vld [vmem:[%s1120 + $0x20] sm:$0xff]
        %v1126 = vld [vmem:[%s1120 + $0x28] sm:$0xff]
        %v1127 = vld [vmem:[%s1120 + $0x30] sm:$0xff]
        %v1128 = vld [vmem:[%s1120 + $0x38] sm:$0xff]
        %v1129 = vld [vmem:[%s1120 + $0x40] sm:$0xff]
        %v1130 = vld [vmem:[%s1120 + $0x48] sm:$0xff]
        %v1131 = vld [vmem:[%s1120 + $0x50] sm:$0xff]
        %v1132 = vld [vmem:[%s1120 + $0x58] sm:$0xff]
        %v1133 = vld [vmem:[%s1120 + $0x60] sm:$0xff]
        %v1134 = vld [vmem:[%s1120 + $0x68] sm:$0xff]
        %v1135 = vld [vmem:[%s1120 + $0x70] sm:$0xff]
        %v1136 = vld [vmem:[%s1120 + $0x78] sm:$0xff]
        %v1137 = vld [vmem:[%s1120 + $0x80] sm:$0xff]
        %v1138 = vld [vmem:[%s1120 + $0x88] sm:$0xff]
        %v1139 = vld [vmem:[%s1120 + $0x90] sm:$0xff]
        %v1140 = vld [vmem:[%s1120 + $0x98] sm:$0xff]
        %v1141 = vld [vmem:[%s1120 + $0xa0] sm:$0xff]
        %v1142 = vld [vmem:[%s1120 + $0xa8] sm:$0xff]
        %v1143 = vld [vmem:[%s1120 + $0xb0] sm:$0xff]
        %v1144 = vld [vmem:[%s1120 + $0xb8] sm:$0xff]
        %v1145 = vld [vmem:[%s1120 + $0xc0] sm:$0xff]
        %v1146 = vld [vmem:[%s1120 + $0xc8] sm:$0xff]
        %v1147 = vrot.slane %v901, 3
        %v1148 = vrot.slane %v902, 3
        %v1149 = vsel %vm728, %v1147, %v1148
        %v1150 = vsel %vm961, %v1149, 0
        %1152 = vmatpush.msra.mxu0 0.0
        %1153 = vmatpush.msra.mxu0 0.0
        %1154 = vmatpush.msra.mxu0 0.0
        %1155 = vmatpush.msra.mxu0 %v1145
        %1156 = vmatpush.msra.mxu0 %v1143
        %1157 = vmatpush.msra.mxu0 %v1141
        %1158 = vmatpush.msra.mxu0 %v1139
        %1159 = vmatpush.msra.mxu0 %v1137
        %1160 = vmatpush.msra.mxu0 %v1135
        %1161 = vmatpush.msra.mxu0 %v1133
        %1162 = vmatpush.msra.mxu0 %v1131
        %1163 = vmatpush.msra.mxu0 %v1129
        %1164 = vmatpush.msra.mxu0 %v1127
        %1165 = vmatpush.msra.mxu0 %v1125
        %1166 = vmatpush.msra.mxu0 %v1123
        %1167 = vmatpush.msra.mxu0 %v1121
        %1168 = vmatmul.f32.gmra.mxu0 %v1150
        %v1169 = vpop.f32.mrf.mxu0
        %v1170 = vadd.f32 0.0, %v1169
        %1171 = vdwg.mxu0
        %1172 = vmatpush.msra.mxu0 0.0
        %1173 = vmatpush.msra.mxu0 0.0
        %1174 = vmatpush.msra.mxu0 0.0
        %1175 = vmatpush.msra.mxu0 %v1146
        %1176 = vmatpush.msra.mxu0 %v1144
        %1177 = vmatpush.msra.mxu0 %v1142
        %1178 = vmatpush.msra.mxu0 %v1140
        %1179 = vmatpush.msra.mxu0 %v1138
        %1180 = vmatpush.msra.mxu0 %v1136
        %1181 = vmatpush.msra.mxu0 %v1134
        %1182 = vmatpush.msra.mxu0 %v1132
        %1183 = vmatpush.msra.mxu0 %v1130
        %1184 = vmatpush.msra.mxu0 %v1128
        %1185 = vmatpush.msra.mxu0 %v1126
        %1186 = vmatpush.msra.mxu0 %v1124
        %1187 = vmatpush.msra.mxu0 %v1122
        %1188 = vmatmul.f32.gmra.mxu0 %v1150
        %v1189 = vpop.f32.mrf.mxu0
        %v1190 = vadd.f32 0.0, %v1189
        %1191 = vdwg.mxu0
        %v1192 = vadd.f32 %v1118, %v1170
        %v1193 = vadd.f32 %v1119, %v1190
        %s1194 = scalar_lea.vmem %s4, 832
        %v1195 = vld [vmem:[%s1194] sm:$0xff]
        %v1196 = vld [vmem:[%s1194 + $0x8] sm:$0xff]
        %v1197 = vld [vmem:[%s1194 + $0x10] sm:$0xff]
        %v1198 = vld [vmem:[%s1194 + $0x18] sm:$0xff]
        %v1199 = vld [vmem:[%s1194 + $0x20] sm:$0xff]
        %v1200 = vld [vmem:[%s1194 + $0x28] sm:$0xff]
        %v1201 = vld [vmem:[%s1194 + $0x30] sm:$0xff]
        %v1202 = vld [vmem:[%s1194 + $0x38] sm:$0xff]
        %v1203 = vld [vmem:[%s1194 + $0x40] sm:$0xff]
        %v1204 = vld [vmem:[%s1194 + $0x48] sm:$0xff]
        %v1205 = vld [vmem:[%s1194 + $0x50] sm:$0xff]
        %v1206 = vld [vmem:[%s1194 + $0x58] sm:$0xff]
        %v1207 = vld [vmem:[%s1194 + $0x60] sm:$0xff]
        %v1208 = vld [vmem:[%s1194 + $0x68] sm:$0xff]
        %v1209 = vld [vmem:[%s1194 + $0x70] sm:$0xff]
        %v1210 = vld [vmem:[%s1194 + $0x78] sm:$0xff]
        %v1211 = vld [vmem:[%s1194 + $0x80] sm:$0xff]
        %v1212 = vld [vmem:[%s1194 + $0x88] sm:$0xff]
        %v1213 = vld [vmem:[%s1194 + $0x90] sm:$0xff]
        %v1214 = vld [vmem:[%s1194 + $0x98] sm:$0xff]
        %v1215 = vld [vmem:[%s1194 + $0xa0] sm:$0xff]
        %v1216 = vld [vmem:[%s1194 + $0xa8] sm:$0xff]
        %v1217 = vld [vmem:[%s1194 + $0xb0] sm:$0xff]
        %v1218 = vld [vmem:[%s1194 + $0xb8] sm:$0xff]
        %v1219 = vld [vmem:[%s1194 + $0xc0] sm:$0xff]
        %v1220 = vld [vmem:[%s1194 + $0xc8] sm:$0xff]
        %v1221 = vrot.slane %v901, 4
        %v1222 = vrot.slane %v902, 4
        %v1223 = vsel %vm601, %v1221, %v1222
        %v1224 = vsel %vm961, %v1223, 0
        %1226 = vmatpush.msra.mxu0 0.0
        %1227 = vmatpush.msra.mxu0 0.0
        %1228 = vmatpush.msra.mxu0 0.0
        %1229 = vmatpush.msra.mxu0 %v1219
        %1230 = vmatpush.msra.mxu0 %v1217
        %1231 = vmatpush.msra.mxu0 %v1215
        %1232 = vmatpush.msra.mxu0 %v1213
        %1233 = vmatpush.msra.mxu0 %v1211
        %1234 = vmatpush.msra.mxu0 %v1209
        %1235 = vmatpush.msra.mxu0 %v1207
        %1236 = vmatpush.msra.mxu0 %v1205
        %1237 = vmatpush.msra.mxu0 %v1203
        %1238 = vmatpush.msra.mxu0 %v1201
        %1239 = vmatpush.msra.mxu0 %v1199
        %1240 = vmatpush.msra.mxu0 %v1197
        %1241 = vmatpush.msra.mxu0 %v1195
        %1242 = vmatmul.f32.gmra.mxu0 %v1224
        %v1243 = vpop.f32.mrf.mxu0
        %v1244 = vadd.f32 0.0, %v1243
        %1245 = vdwg.mxu0
        %1246 = vmatpush.msra.mxu0 0.0
        %1247 = vmatpush.msra.mxu0 0.0
        %1248 = vmatpush.msra.mxu0 0.0
        %1249 = vmatpush.msra.mxu0 %v1220
        %1250 = vmatpush.msra.mxu0 %v1218
        %1251 = vmatpush.msra.mxu0 %v1216
        %1252 = vmatpush.msra.mxu0 %v1214
        %1253 = vmatpush.msra.mxu0 %v1212
        %1254 = vmatpush.msra.mxu0 %v1210
        %1255 = vmatpush.msra.mxu0 %v1208
        %1256 = vmatpush.msra.mxu0 %v1206
        %1257 = vmatpush.msra.mxu0 %v1204
        %1258 = vmatpush.msra.mxu0 %v1202
        %1259 = vmatpush.msra.mxu0 %v1200
        %1260 = vmatpush.msra.mxu0 %v1198
        %1261 = vmatpush.msra.mxu0 %v1196
        %1262 = vmatmul.f32.gmra.mxu0 %v1224
        %v1263 = vpop.f32.mrf.mxu0
        %v1264 = vadd.f32 0.0, %v1263
        %1265 = vdwg.mxu0
        %v1266 = vadd.f32 %v1192, %v1244
        %v1267 = vadd.f32 %v1193, %v1264
        %v1268 = vld [vmem:[%s5] sm:$0x3]
        %v1270 = vperm.slane %v1268, 0
        %v1271 = vperm.slane %v1268, 1
        %v1274 = vadd.f32 %v1266, %v1270
        %v1275 = vadd.f32 %v1267, %v1271
        %v1276 = vmax.f32 %v1274, 0.0
        %v1277 = vmax.f32 %v1275, 0.0
        %v1278 = vld [vmem:[%s6] sm:$0xf]
        %vm1279 = vcmask 64512
        %v1281 = vsel %vm1279, %v1278, 0
        %1283 = vmatpush.msra.mxu0 0.0
        %1284 = vmatpush.msra.mxu0 0.0
        %1285 = vmatpush.msra.mxu0 0.0
        %1286 = vmatpush.msra.mxu0 0.0
        %1287 = vmatpush.msra.mxu0 0.0
        %1288 = vmatpush.msra.mxu0 0.0
        %1289 = vmatpush.msra.mxu0 0.0
        %1290 = vmatpush.msra.mxu0 0.0
        %1291 = vmatpush.msra.mxu0 0.0
        %1292 = vmatpush.msra.mxu0 0.0
        %1293 = vmatpush.msra.mxu0 0.0
        %1294 = vmatpush.msra.mxu0 0.0
        %1295 = vmatpush.msra.mxu0 0.0
        %1296 = vmatpush.msra.mxu0 0.0
        %1297 = vmatpush.msra.mxu0 0.0
        %1298 = vmatpush.msra.mxu0 %v1276
        %1299 = vmatmul.f32.gmra.mxu0 %v1281
        %v1300 = vpop.f32.mrf.mxu0
        %v1301 = vadd.f32 0.0, %v1300
        %1302 = vdwg.mxu0
        %1303 = vmatpush.msra.mxu0 0.0
        %1304 = vmatpush.msra.mxu0 0.0
        %1305 = vmatpush.msra.mxu0 0.0
        %1306 = vmatpush.msra.mxu0 0.0
        %1307 = vmatpush.msra.mxu0 0.0
        %1308 = vmatpush.msra.mxu0 0.0
        %1309 = vmatpush.msra.mxu0 0.0
        %1310 = vmatpush.msra.mxu0 0.0
        %1311 = vmatpush.msra.mxu0 0.0
        %1312 = vmatpush.msra.mxu0 0.0
        %1313 = vmatpush.msra.mxu0 0.0
        %1314 = vmatpush.msra.mxu0 0.0
        %1315 = vmatpush.msra.mxu0 0.0
        %1316 = vmatpush.msra.mxu0 0.0
        %1317 = vmatpush.msra.mxu0 0.0
        %1318 = vmatpush.msra.mxu0 %v1277
        %1319 = vmatmul.f32.gmra.mxu0 %v1281
        %v1320 = vpop.f32.mrf.mxu0
        %v1321 = vadd.f32 0.0, %v1320
        %1322 = vdwg.mxu0
        %s1323 = scalar_lea.vmem %s6, 4
        %v1324 = vld [vmem:[%s1323] sm:$0xf]
        %v1326 = vsel %vm1279, %v1324, 0
        %1328 = vmatpush.msra.mxu0 0.0
        %1329 = vmatpush.msra.mxu0 0.0
        %1330 = vmatpush.msra.mxu0 0.0
        %1331 = vmatpush.msra.mxu0 0.0
        %1332 = vmatpush.msra.mxu0 0.0
        %1333 = vmatpush.msra.mxu0 0.0
        %1334 = vmatpush.msra.mxu0 0.0
        %1335 = vmatpush.msra.mxu0 0.0
        %1336 = vmatpush.msra.mxu0 0.0
        %1337 = vmatpush.msra.mxu0 0.0
        %1338 = vmatpush.msra.mxu0 0.0
        %1339 = vmatpush.msra.mxu0 0.0
        %1340 = vmatpush.msra.mxu0 0.0
        %1341 = vmatpush.msra.mxu0 0.0
        %1342 = vmatpush.msra.mxu0 0.0
        %1343 = vmatpush.msra.mxu0 %v1276
        %1344 = vmatmul.f32.gmra.mxu0 %v1326
        %v1345 = vpop.f32.mrf.mxu0
        %v1346 = vadd.f32 0.0, %v1345
        %1347 = vdwg.mxu0
        %1348 = vmatpush.msra.mxu0 0.0
        %1349 = vmatpush.msra.mxu0 0.0
        %1350 = vmatpush.msra.mxu0 0.0
        %1351 = vmatpush.msra.mxu0 0.0
        %1352 = vmatpush.msra.mxu0 0.0
        %1353 = vmatpush.msra.mxu0 0.0
        %1354 = vmatpush.msra.mxu0 0.0
        %1355 = vmatpush.msra.mxu0 0.0
        %1356 = vmatpush.msra.mxu0 0.0
        %1357 = vmatpush.msra.mxu0 0.0
        %1358 = vmatpush.msra.mxu0 0.0
        %1359 = vmatpush.msra.mxu0 0.0
        %1360 = vmatpush.msra.mxu0 0.0
        %1361 = vmatpush.msra.mxu0 0.0
        %1362 = vmatpush.msra.mxu0 0.0
        %1363 = vmatpush.msra.mxu0 %v1277
        %1364 = vmatmul.f32.gmra.mxu0 %v1326
        %v1365 = vpop.f32.mrf.mxu0
        %v1366 = vadd.f32 0.0, %v1365
        %1367 = vdwg.mxu0
        %v1368 = vmax.f32 %v1301, %v1346
        %v1369 = vmax.f32 %v1321, %v1366
        %v1370 = vld [vmem:[#allocation2] sm:$0xff]
        %v1371 = vld [vmem:[#allocation2 + $0x8] sm:$0xff]
        %v1372 = vld [vmem:[#allocation2 + $0x10] sm:$0xff]
        %v1373 = vld [vmem:[#allocation2 + $0x18] sm:$0xff]
        %v1374 = vld [vmem:[#allocation2 + $0x20] sm:$0xff]
        %v1375 = vld [vmem:[#allocation2 + $0x28] sm:$0xff]
        %v1376 = vld [vmem:[#allocation2 + $0x30] sm:$0xff]
        %v1377 = vld [vmem:[#allocation2 + $0x38] sm:$0xff]
        %v1378 = vld [vmem:[#allocation2 + $0x40] sm:$0xff]
        %v1379 = vld [vmem:[#allocation2 + $0x48] sm:$0xff]
        %v1380 = vld [vmem:[#allocation2 + $0x50] sm:$0xff]
        %v1381 = vld [vmem:[#allocation2 + $0x58] sm:$0xff]
        %v1382 = vld [vmem:[#allocation2 + $0x60] sm:$0xff]
        %v1383 = vld [vmem:[#allocation2 + $0x68] sm:$0xff]
        %v1384 = vld [vmem:[#allocation2 + $0x70] sm:$0xff]
        %v1385 = vld [vmem:[#allocation2 + $0x78] sm:$0xff]
        %v1386 = vld [vmem:[#allocation2 + $0x80] sm:$0xff]
        %v1387 = vld [vmem:[#allocation2 + $0x88] sm:$0xff]
        %v1388 = vld [vmem:[#allocation2 + $0x90] sm:$0xff]
        %v1389 = vld [vmem:[#allocation2 + $0x98] sm:$0xff]
        %v1390 = vld [vmem:[#allocation2 + $0xa0] sm:$0xff]
        %v1391 = vld [vmem:[#allocation2 + $0xa8] sm:$0xff]
        %v1392 = vld [vmem:[#allocation2 + $0xb0] sm:$0xff]
        %v1393 = vld [vmem:[#allocation2 + $0xb8] sm:$0xff]
        %v1394 = vld [vmem:[#allocation2 + $0xc0] sm:$0xff]
        %v1395 = vld [vmem:[#allocation2 + $0xc8] sm:$0xff]
        %v1396 = vld [vmem:[#allocation2 + $0xd0] sm:$0xff]
        %v1397 = vld [vmem:[#allocation2 + $0xd8] sm:$0xff]
        %v1398 = vld [vmem:[#allocation2 + $0xe0] sm:$0xff]
        %v1399 = vld [vmem:[#allocation2 + $0xe8] sm:$0xff]
        %v1400 = vld [vmem:[#allocation2 + $0xf0] sm:$0xff]
        %v1401 = vld [vmem:[#allocation2 + $0xf8] sm:$0xff]
        %v1402 = vld [vmem:[#allocation2 + $0x100] sm:$0xff]
        %v1403 = vld [vmem:[#allocation2 + $0x108] sm:$0xff]
        %v1404 = vld [vmem:[#allocation2 + $0x110] sm:$0xff]
        %v1405 = vld [vmem:[#allocation2 + $0x118] sm:$0xff]
        %v1406 = vld [vmem:[#allocation2 + $0x120] sm:$0xff]
        %v1407 = vld [vmem:[#allocation2 + $0x128] sm:$0xff]
        %v1408 = vld [vmem:[#allocation2 + $0x130] sm:$0xff]
        %v1409 = vld [vmem:[#allocation2 + $0x138] sm:$0xff]
        %v1410 = vld [vmem:[#allocation2 + $0x140] sm:$0xff]
        %v1411 = vld [vmem:[#allocation2 + $0x148] sm:$0xff]
        %v1412 = vld [vmem:[#allocation2 + $0x150] sm:$0xff]
        %v1413 = vld [vmem:[#allocation2 + $0x158] sm:$0xff]
        %v1414 = vld [vmem:[#allocation2 + $0x160] sm:$0xff]
        %v1415 = vld [vmem:[#allocation2 + $0x168] sm:$0xff]
        %v1416 = vld [vmem:[#allocation2 + $0x170] sm:$0xff]
        %v1417 = vld [vmem:[#allocation2 + $0x178] sm:$0xff]
        %v1418 = vld [vmem:[#allocation2 + $0x180] sm:$0xff]
        %v1419 = vld [vmem:[#allocation2 + $0x188] sm:$0xff]
        %v1420 = vld [vmem:[#allocation2 + $0x190] sm:$0xff]
        %v1421 = vld [vmem:[#allocation2 + $0x198] sm:$0xff]
        %vm1422 = vcmask 654336
        %v1424 = vsel %vm1422, %v1369, 0
        %1426 = vmatpush.msra.mxu0 %v1400
        %1427 = vmatpush.msra.mxu0 %v1398
        %1428 = vmatpush.msra.mxu0 %v1396
        %1429 = vmatpush.msra.mxu0 %v1394
        %1430 = vmatpush.msra.mxu0 %v1392
        %1431 = vmatpush.msra.mxu0 %v1390
        %1432 = vmatpush.msra.mxu0 %v1388
        %1433 = vmatpush.msra.mxu0 %v1386
        %1434 = vmatpush.msra.mxu0 %v1384
        %1435 = vmatpush.msra.mxu0 %v1382
        %1436 = vmatpush.msra.mxu0 %v1380
        %1437 = vmatpush.msra.mxu0 %v1378
        %1438 = vmatpush.msra.mxu0 %v1376
        %1439 = vmatpush.msra.mxu0 %v1374
        %1440 = vmatpush.msra.mxu0 %v1372
        %1441 = vmatpush.msra.mxu0 %v1370
        %1442 = vmatmul.f32.gmra.mxu0 %v1368
        %v1443 = vpop.f32.mrf.mxu0
        %v1444 = vadd.f32 0.0, %v1443
        %1445 = vdwg.mxu0
        %1446 = vmatpush.msra.mxu0 0.0
        %1447 = vmatpush.msra.mxu0 0.0
        %1448 = vmatpush.msra.mxu0 0.0
        %1449 = vmatpush.msra.mxu0 0.0
        %1450 = vmatpush.msra.mxu0 0.0
        %1451 = vmatpush.msra.mxu0 0.0
        %1452 = vmatpush.msra.mxu0 %v1420
        %1453 = vmatpush.msra.mxu0 %v1418
        %1454 = vmatpush.msra.mxu0 %v1416
        %1455 = vmatpush.msra.mxu0 %v1414
        %1456 = vmatpush.msra.mxu0 %v1412
        %1457 = vmatpush.msra.mxu0 %v1410
        %1458 = vmatpush.msra.mxu0 %v1408
        %1459 = vmatpush.msra.mxu0 %v1406
        %1460 = vmatpush.msra.mxu0 %v1404
        %1461 = vmatpush.msra.mxu0 %v1402
        %1462 = vmatmul.f32.gmra.mxu0 %v1424
        %v1463 = vpop.f32.mrf.mxu0
        %v1464 = vadd.f32 %v1444, %v1463
        %1465 = vdwg.mxu0
        %1466 = vmatpush.msra.mxu0 %v1401
        %1467 = vmatpush.msra.mxu0 %v1399
        %1468 = vmatpush.msra.mxu0 %v1397
        %1469 = vmatpush.msra.mxu0 %v1395
        %1470 = vmatpush.msra.mxu0 %v1393
        %1471 = vmatpush.msra.mxu0 %v1391
        %1472 = vmatpush.msra.mxu0 %v1389
        %1473 = vmatpush.msra.mxu0 %v1387
        %1474 = vmatpush.msra.mxu0 %v1385
        %1475 = vmatpush.msra.mxu0 %v1383
        %1476 = vmatpush.msra.mxu0 %v1381
        %1477 = vmatpush.msra.mxu0 %v1379
        %1478 = vmatpush.msra.mxu0 %v1377
        %1479 = vmatpush.msra.mxu0 %v1375
        %1480 = vmatpush.msra.mxu0 %v1373
        %1481 = vmatpush.msra.mxu0 %v1371
        %1482 = vmatmul.f32.gmra.mxu0 %v1368
        %v1483 = vpop.f32.mrf.mxu0
        %v1484 = vadd.f32 0.0, %v1483
        %1485 = vdwg.mxu0
        %1486 = vmatpush.msra.mxu0 0.0
        %1487 = vmatpush.msra.mxu0 0.0
        %1488 = vmatpush.msra.mxu0 0.0
        %1489 = vmatpush.msra.mxu0 0.0
        %1490 = vmatpush.msra.mxu0 0.0
        %1491 = vmatpush.msra.mxu0 0.0
        %1492 = vmatpush.msra.mxu0 %v1421
        %1493 = vmatpush.msra.mxu0 %v1419
        %1494 = vmatpush.msra.mxu0 %v1417
        %1495 = vmatpush.msra.mxu0 %v1415
        %1496 = vmatpush.msra.mxu0 %v1413
        %1497 = vmatpush.msra.mxu0 %v1411
        %1498 = vmatpush.msra.mxu0 %v1409
        %1499 = vmatpush.msra.mxu0 %v1407
        %1500 = vmatpush.msra.mxu0 %v1405
        %1501 = vmatpush.msra.mxu0 %v1403
        %1502 = vmatmul.f32.gmra.mxu0 %v1424
        %v1503 = vpop.f32.mrf.mxu0
        %v1504 = vadd.f32 %v1484, %v1503
        %1505 = vdwg.mxu0
        %s1506 = scalar_lea.vmem [#allocation2], 416
        %v1507 = vld [vmem:[%s1506] sm:$0xff]
        %v1508 = vld [vmem:[%s1506 + $0x8] sm:$0xff]
        %v1509 = vld [vmem:[%s1506 + $0x10] sm:$0xff]
        %v1510 = vld [vmem:[%s1506 + $0x18] sm:$0xff]
        %v1511 = vld [vmem:[%s1506 + $0x20] sm:$0xff]
        %v1512 = vld [vmem:[%s1506 + $0x28] sm:$0xff]
        %v1513 = vld [vmem:[%s1506 + $0x30] sm:$0xff]
        %v1514 = vld [vmem:[%s1506 + $0x38] sm:$0xff]
        %v1515 = vld [vmem:[%s1506 + $0x40] sm:$0xff]
        %v1516 = vld [vmem:[%s1506 + $0x48] sm:$0xff]
        %v1517 = vld [vmem:[%s1506 + $0x50] sm:$0xff]
        %v1518 = vld [vmem:[%s1506 + $0x58] sm:$0xff]
        %v1519 = vld [vmem:[%s1506 + $0x60] sm:$0xff]
        %v1520 = vld [vmem:[%s1506 + $0x68] sm:$0xff]
        %v1521 = vld [vmem:[%s1506 + $0x70] sm:$0xff]
        %v1522 = vld [vmem:[%s1506 + $0x78] sm:$0xff]
        %v1523 = vld [vmem:[%s1506 + $0x80] sm:$0xff]
        %v1524 = vld [vmem:[%s1506 + $0x88] sm:$0xff]
        %v1525 = vld [vmem:[%s1506 + $0x90] sm:$0xff]
        %v1526 = vld [vmem:[%s1506 + $0x98] sm:$0xff]
        %v1527 = vld [vmem:[%s1506 + $0xa0] sm:$0xff]
        %v1528 = vld [vmem:[%s1506 + $0xa8] sm:$0xff]
        %v1529 = vld [vmem:[%s1506 + $0xb0] sm:$0xff]
        %v1530 = vld [vmem:[%s1506 + $0xb8] sm:$0xff]
        %v1531 = vld [vmem:[%s1506 + $0xc0] sm:$0xff]
        %v1532 = vld [vmem:[%s1506 + $0xc8] sm:$0xff]
        %v1533 = vld [vmem:[%s1506 + $0xd0] sm:$0xff]
        %v1534 = vld [vmem:[%s1506 + $0xd8] sm:$0xff]
        %v1535 = vld [vmem:[%s1506 + $0xe0] sm:$0xff]
        %v1536 = vld [vmem:[%s1506 + $0xe8] sm:$0xff]
        %v1537 = vld [vmem:[%s1506 + $0xf0] sm:$0xff]
        %v1538 = vld [vmem:[%s1506 + $0xf8] sm:$0xff]
        %v1539 = vld [vmem:[%s1506 + $0x100] sm:$0xff]
        %v1540 = vld [vmem:[%s1506 + $0x108] sm:$0xff]
        %v1541 = vld [vmem:[%s1506 + $0x110] sm:$0xff]
        %v1542 = vld [vmem:[%s1506 + $0x118] sm:$0xff]
        %v1543 = vld [vmem:[%s1506 + $0x120] sm:$0xff]
        %v1544 = vld [vmem:[%s1506 + $0x128] sm:$0xff]
        %v1545 = vld [vmem:[%s1506 + $0x130] sm:$0xff]
        %v1546 = vld [vmem:[%s1506 + $0x138] sm:$0xff]
        %v1547 = vld [vmem:[%s1506 + $0x140] sm:$0xff]
        %v1548 = vld [vmem:[%s1506 + $0x148] sm:$0xff]
        %v1549 = vld [vmem:[%s1506 + $0x150] sm:$0xff]
        %v1550 = vld [vmem:[%s1506 + $0x158] sm:$0xff]
        %v1551 = vld [vmem:[%s1506 + $0x160] sm:$0xff]
        %v1552 = vld [vmem:[%s1506 + $0x168] sm:$0xff]
        %v1553 = vld [vmem:[%s1506 + $0x170] sm:$0xff]
        %v1554 = vld [vmem:[%s1506 + $0x178] sm:$0xff]
        %v1555 = vld [vmem:[%s1506 + $0x180] sm:$0xff]
        %v1556 = vld [vmem:[%s1506 + $0x188] sm:$0xff]
        %v1557 = vld [vmem:[%s1506 + $0x190] sm:$0xff]
        %v1558 = vld [vmem:[%s1506 + $0x198] sm:$0xff]
        %1559 = vmatpush.msra.mxu0 %v1537
        %1560 = vmatpush.msra.mxu0 %v1535
        %1561 = vmatpush.msra.mxu0 %v1533
        %1562 = vmatpush.msra.mxu0 %v1531
        %1563 = vmatpush.msra.mxu0 %v1529
        %1564 = vmatpush.msra.mxu0 %v1527
        %1565 = vmatpush.msra.mxu0 %v1525
        %1566 = vmatpush.msra.mxu0 %v1523
        %1567 = vmatpush.msra.mxu0 %v1521
        %1568 = vmatpush.msra.mxu0 %v1519
        %1569 = vmatpush.msra.mxu0 %v1517
        %1570 = vmatpush.msra.mxu0 %v1515
        %1571 = vmatpush.msra.mxu0 %v1513
        %1572 = vmatpush.msra.mxu0 %v1511
        %1573 = vmatpush.msra.mxu0 %v1509
        %1574 = vmatpush.msra.mxu0 %v1507
        %1575 = vmatmul.f32.gmra.mxu0 %v1368
        %v1576 = vpop.f32.mrf.mxu0
        %v1577 = vadd.f32 0.0, %v1576
        %1578 = vdwg.mxu0
        %1579 = vmatpush.msra.mxu0 0.0
        %1580 = vmatpush.msra.mxu0 0.0
        %1581 = vmatpush.msra.mxu0 0.0
        %1582 = vmatpush.msra.mxu0 0.0
        %1583 = vmatpush.msra.mxu0 0.0
        %1584 = vmatpush.msra.mxu0 0.0
        %1585 = vmatpush.msra.mxu0 %v1557
        %1586 = vmatpush.msra.mxu0 %v1555
        %1587 = vmatpush.msra.mxu0 %v1553
        %1588 = vmatpush.msra.mxu0 %v1551
        %1589 = vmatpush.msra.mxu0 %v1549
        %1590 = vmatpush.msra.mxu0 %v1547
        %1591 = vmatpush.msra.mxu0 %v1545
        %1592 = vmatpush.msra.mxu0 %v1543
        %1593 = vmatpush.msra.mxu0 %v1541
        %1594 = vmatpush.msra.mxu0 %v1539
        %1595 = vmatmul.f32.gmra.mxu0 %v1424
        %v1596 = vpop.f32.mrf.mxu0
        %v1597 = vadd.f32 %v1577, %v1596
        %1598 = vdwg.mxu0
        %1599 = vmatpush.msra.mxu0 %v1538
        %1600 = vmatpush.msra.mxu0 %v1536
        %1601 = vmatpush.msra.mxu0 %v1534
        %1602 = vmatpush.msra.mxu0 %v1532
        %1603 = vmatpush.msra.mxu0 %v1530
        %1604 = vmatpush.msra.mxu0 %v1528
        %1605 = vmatpush.msra.mxu0 %v1526
        %1606 = vmatpush.msra.mxu0 %v1524
        %1607 = vmatpush.msra.mxu0 %v1522
        %1608 = vmatpush.msra.mxu0 %v1520
        %1609 = vmatpush.msra.mxu0 %v1518
        %1610 = vmatpush.msra.mxu0 %v1516
        %1611 = vmatpush.msra.mxu0 %v1514
        %1612 = vmatpush.msra.mxu0 %v1512
        %1613 = vmatpush.msra.mxu0 %v1510
        %1614 = vmatpush.msra.mxu0 %v1508
        %1615 = vmatmul.f32.gmra.mxu0 %v1368
        %v1616 = vpop.f32.mrf.mxu0
        %v1617 = vadd.f32 0.0, %v1616
        %1618 = vdwg.mxu0
        %1619 = vmatpush.msra.mxu0 0.0
        %1620 = vmatpush.msra.mxu0 0.0
        %1621 = vmatpush.msra.mxu0 0.0
        %1622 = vmatpush.msra.mxu0 0.0
        %1623 = vmatpush.msra.mxu0 0.0
        %1624 = vmatpush.msra.mxu0 0.0
        %1625 = vmatpush.msra.mxu0 %v1558
        %1626 = vmatpush.msra.mxu0 %v1556
        %1627 = vmatpush.msra.mxu0 %v1554
        %1628 = vmatpush.msra.mxu0 %v1552
        %1629 = vmatpush.msra.mxu0 %v1550
        %1630 = vmatpush.msra.mxu0 %v1548
        %1631 = vmatpush.msra.mxu0 %v1546
        %1632 = vmatpush.msra.mxu0 %v1544
        %1633 = vmatpush.msra.mxu0 %v1542
        %1634 = vmatpush.msra.mxu0 %v1540
        %1635 = vmatmul.f32.gmra.mxu0 %v1424
        %v1636 = vpop.f32.mrf.mxu0
        %v1637 = vadd.f32 %v1617, %v1636
        %1638 = vdwg.mxu0
        %v1639 = vld [vmem:[%s8] sm:$0x3f]
        %s1640 = scalar_lea.vmem %s8, 8
        %v1641 = vld [vmem:[%s1640] sm:$0x3f]
        %vm1642 = vcmask 31744
        %v1644 = vsel %vm1642, %v1641, 0
        %v1647 = vsel %vm601, %v1464, 0
        %v1650 = vsel %vm601, %v1504, 0
        %1652 = vmatpush.msra.mxu0 0.0
        %1653 = vmatpush.msra.mxu0 0.0
        %1654 = vmatpush.msra.mxu0 0.0
        %1655 = vmatpush.msra.mxu0 0.0
        %1656 = vmatpush.msra.mxu0 0.0
        %1657 = vmatpush.msra.mxu0 0.0
        %1658 = vmatpush.msra.mxu0 0.0
        %1659 = vmatpush.msra.mxu0 0.0
        %1660 = vmatpush.msra.mxu0 0.0
        %1661 = vmatpush.msra.mxu0 0.0
        %1662 = vmatpush.msra.mxu0 0.0
        %1663 = vmatpush.msra.mxu0 0.0
        %1664 = vmatpush.msra.mxu0 0.0
        %1665 = vmatpush.msra.mxu0 0.0
        %1666 = vmatpush.msra.mxu0 0.0
        %1667 = vmatpush.msra.mxu0 %v1647
        %1668 = vmatmul.f32.gmra.mxu0 %v1644
        %v1669 = vpop.f32.mrf.mxu0
        %v1670 = vadd.f32 0.0, %v1669
        %1671 = vdwg.mxu0
        %1672 = vmatpush.msra.mxu0 0.0
        %1673 = vmatpush.msra.mxu0 0.0
        %1674 = vmatpush.msra.mxu0 0.0
        %1675 = vmatpush.msra.mxu0 0.0
        %1676 = vmatpush.msra.mxu0 0.0
        %1677 = vmatpush.msra.mxu0 0.0
        %1678 = vmatpush.msra.mxu0 0.0
        %1679 = vmatpush.msra.mxu0 0.0
        %1680 = vmatpush.msra.mxu0 0.0
        %1681 = vmatpush.msra.mxu0 0.0
        %1682 = vmatpush.msra.mxu0 0.0
        %1683 = vmatpush.msra.mxu0 0.0
        %1684 = vmatpush.msra.mxu0 0.0
        %1685 = vmatpush.msra.mxu0 0.0
        %1686 = vmatpush.msra.mxu0 0.0
        %1687 = vmatpush.msra.mxu0 %v1650
        %1688 = vmatmul.f32.gmra.mxu0 %v1644
        %v1689 = vpop.f32.mrf.mxu0
        %v1690 = vadd.f32 0.0, %v1689
        %1691 = vdwg.mxu0
        %v1693 = vsel %vm1642, %v1639, 0
        %v1696 = vsel %vm601, %v1368, 0
        %v1698 = vsel %vm601, %v1369, 0
        %1700 = vmatpush.msra.mxu0 0.0
        %1701 = vmatpush.msra.mxu0 0.0
        %1702 = vmatpush.msra.mxu0 0.0
        %1703 = vmatpush.msra.mxu0 0.0
        %1704 = vmatpush.msra.mxu0 0.0
        %1705 = vmatpush.msra.mxu0 0.0
        %1706 = vmatpush.msra.mxu0 0.0
        %1707 = vmatpush.msra.mxu0 0.0
        %1708 = vmatpush.msra.mxu0 0.0
        %1709 = vmatpush.msra.mxu0 0.0
        %1710 = vmatpush.msra.mxu0 0.0
        %1711 = vmatpush.msra.mxu0 0.0
        %1712 = vmatpush.msra.mxu0 0.0
        %1713 = vmatpush.msra.mxu0 0.0
        %1714 = vmatpush.msra.mxu0 0.0
        %1715 = vmatpush.msra.mxu0 %v1696
        %1716 = vmatmul.f32.gmra.mxu0 %v1693
        %v1717 = vpop.f32.mrf.mxu0
        %v1718 = vadd.f32 %v1670, %v1717
        %1719 = vdwg.mxu0
        %1720 = vmatpush.msra.mxu0 0.0
        %1721 = vmatpush.msra.mxu0 0.0
        %1722 = vmatpush.msra.mxu0 0.0
        %1723 = vmatpush.msra.mxu0 0.0
        %1724 = vmatpush.msra.mxu0 0.0
        %1725 = vmatpush.msra.mxu0 0.0
        %1726 = vmatpush.msra.mxu0 0.0
        %1727 = vmatpush.msra.mxu0 0.0
        %1728 = vmatpush.msra.mxu0 0.0
        %1729 = vmatpush.msra.mxu0 0.0
        %1730 = vmatpush.msra.mxu0 0.0
        %1731 = vmatpush.msra.mxu0 0.0
        %1732 = vmatpush.msra.mxu0 0.0
        %1733 = vmatpush.msra.mxu0 0.0
        %1734 = vmatpush.msra.mxu0 0.0
        %1735 = vmatpush.msra.mxu0 %v1698
        %1736 = vmatmul.f32.gmra.mxu0 %v1693
        %v1737 = vpop.f32.mrf.mxu0
        %v1738 = vadd.f32 %v1690, %v1737
        %1739 = vdwg.mxu0
        %s1740 = scalar_lea.vmem %s8, 16
        %v1741 = vld [vmem:[%s1740] sm:$0x3f]
        %v1743 = vsel %vm1642, %v1741, 0
        %v1746 = vsel %vm601, %v1597, 0
        %v1749 = vsel %vm601, %v1637, 0
        %1751 = vmatpush.msra.mxu0 0.0
        %1752 = vmatpush.msra.mxu0 0.0
        %1753 = vmatpush.msra.mxu0 0.0
        %1754 = vmatpush.msra.mxu0 0.0
        %1755 = vmatpush.msra.mxu0 0.0
        %1756 = vmatpush.msra.mxu0 0.0
        %1757 = vmatpush.msra.mxu0 0.0
        %1758 = vmatpush.msra.mxu0 0.0
        %1759 = vmatpush.msra.mxu0 0.0
        %1760 = vmatpush.msra.mxu0 0.0
        %1761 = vmatpush.msra.mxu0 0.0
        %1762 = vmatpush.msra.mxu0 0.0
        %1763 = vmatpush.msra.mxu0 0.0
        %1764 = vmatpush.msra.mxu0 0.0
        %1765 = vmatpush.msra.mxu0 0.0
        %1766 = vmatpush.msra.mxu0 %v1746
        %1767 = vmatmul.f32.gmra.mxu0 %v1743
        %v1768 = vpop.f32.mrf.mxu0
        %v1769 = vadd.f32 0.0, %v1768
        %1770 = vdwg.mxu0
        %1771 = vmatpush.msra.mxu0 0.0
        %1772 = vmatpush.msra.mxu0 0.0
        %1773 = vmatpush.msra.mxu0 0.0
        %1774 = vmatpush.msra.mxu0 0.0
        %1775 = vmatpush.msra.mxu0 0.0
        %1776 = vmatpush.msra.mxu0 0.0
        %1777 = vmatpush.msra.mxu0 0.0
        %1778 = vmatpush.msra.mxu0 0.0
        %1779 = vmatpush.msra.mxu0 0.0
        %1780 = vmatpush.msra.mxu0 0.0
        %1781 = vmatpush.msra.mxu0 0.0
        %1782 = vmatpush.msra.mxu0 0.0
        %1783 = vmatpush.msra.mxu0 0.0
        %1784 = vmatpush.msra.mxu0 0.0
        %1785 = vmatpush.msra.mxu0 0.0
        %1786 = vmatpush.msra.mxu0 %v1749
        %1787 = vmatmul.f32.gmra.mxu0 %v1743
        %v1788 = vpop.f32.mrf.mxu0
        %v1789 = vadd.f32 0.0, %v1788
        %1790 = vdwg.mxu0
        %v1791 = vadd.f32 %v1718, %v1769
        %v1792 = vadd.f32 %v1738, %v1789
        %v1793 = vld [vmem:[%s9] sm:$0x3f]
        %1795 = vset.pattern.permute.xlu0 0
        %1796 = vperm.xlu0 %1795, %v1793
        %v1797 = vpop.permute.xlu0 %1796
        %v1799 = vadd.f32 %v1791, %v1797
        %v1800 = vadd.f32 %v1792, %v1797
        %v1801 = vmax.f32 %v1799, 0.0
        %v1802 = vmax.f32 %v1800, 0.0
        %s1803 = scalar_lea.vmem %s8, 24
        %v1804 = vld [vmem:[%s1803] sm:$0x3f]
        %s1805 = scalar_lea.vmem %s8, 32
        %v1806 = vld [vmem:[%s1805] sm:$0x3f]
        %v1808 = vsel %vm1642, %v1806, 0
        %1810 = vmatpush.msra.mxu0 0.0
        %1811 = vmatpush.msra.mxu0 0.0
        %1812 = vmatpush.msra.mxu0 0.0
        %1813 = vmatpush.msra.mxu0 0.0
        %1814 = vmatpush.msra.mxu0 0.0
        %1815 = vmatpush.msra.mxu0 0.0
        %1816 = vmatpush.msra.mxu0 0.0
        %1817 = vmatpush.msra.mxu0 0.0
        %1818 = vmatpush.msra.mxu0 0.0
        %1819 = vmatpush.msra.mxu0 0.0
        %1820 = vmatpush.msra.mxu0 0.0
        %1821 = vmatpush.msra.mxu0 0.0
        %1822 = vmatpush.msra.mxu0 0.0
        %1823 = vmatpush.msra.mxu0 0.0
        %1824 = vmatpush.msra.mxu0 0.0
        %1825 = vmatpush.msra.mxu0 %v1647
        %1826 = vmatmul.f32.gmra.mxu0 %v1808
        %v1827 = vpop.f32.mrf.mxu0
        %v1828 = vadd.f32 0.0, %v1827
        %1829 = vdwg.mxu0
        %1830 = vmatpush.msra.mxu0 0.0
        %1831 = vmatpush.msra.mxu0 0.0
        %1832 = vmatpush.msra.mxu0 0.0
        %1833 = vmatpush.msra.mxu0 0.0
        %1834 = vmatpush.msra.mxu0 0.0
        %1835 = vmatpush.msra.mxu0 0.0
        %1836 = vmatpush.msra.mxu0 0.0
        %1837 = vmatpush.msra.mxu0 0.0
        %1838 = vmatpush.msra.mxu0 0.0
        %1839 = vmatpush.msra.mxu0 0.0
        %1840 = vmatpush.msra.mxu0 0.0
        %1841 = vmatpush.msra.mxu0 0.0
        %1842 = vmatpush.msra.mxu0 0.0
        %1843 = vmatpush.msra.mxu0 0.0
        %1844 = vmatpush.msra.mxu0 0.0
        %1845 = vmatpush.msra.mxu0 %v1650
        %1846 = vmatmul.f32.gmra.mxu0 %v1808
        %v1847 = vpop.f32.mrf.mxu0
        %v1848 = vadd.f32 0.0, %v1847
        %1849 = vdwg.mxu0
        %v1851 = vsel %vm1642, %v1804, 0
        %1853 = vmatpush.msra.mxu0 0.0
        %1854 = vmatpush.msra.mxu0 0.0
        %1855 = vmatpush.msra.mxu0 0.0
        %1856 = vmatpush.msra.mxu0 0.0
        %1857 = vmatpush.msra.mxu0 0.0
        %1858 = vmatpush.msra.mxu0 0.0
        %1859 = vmatpush.msra.mxu0 0.0
        %1860 = vmatpush.msra.mxu0 0.0
        %1861 = vmatpush.msra.mxu0 0.0
        %1862 = vmatpush.msra.mxu0 0.0
        %1863 = vmatpush.msra.mxu0 0.0
        %1864 = vmatpush.msra.mxu0 0.0
        %1865 = vmatpush.msra.mxu0 0.0
        %1866 = vmatpush.msra.mxu0 0.0
        %1867 = vmatpush.msra.mxu0 0.0
        %1868 = vmatpush.msra.mxu0 %v1696
        %1869 = vmatmul.f32.gmra.mxu0 %v1851
        %v1870 = vpop.f32.mrf.mxu0
        %v1871 = vadd.f32 %v1828, %v1870
        %1872 = vdwg.mxu0
        %1873 = vmatpush.msra.mxu0 0.0
        %1874 = vmatpush.msra.mxu0 0.0
        %1875 = vmatpush.msra.mxu0 0.0
        %1876 = vmatpush.msra.mxu0 0.0
        %1877 = vmatpush.msra.mxu0 0.0
        %1878 = vmatpush.msra.mxu0 0.0
        %1879 = vmatpush.msra.mxu0 0.0
        %1880 = vmatpush.msra.mxu0 0.0
        %1881 = vmatpush.msra.mxu0 0.0
        %1882 = vmatpush.msra.mxu0 0.0
        %1883 = vmatpush.msra.mxu0 0.0
        %1884 = vmatpush.msra.mxu0 0.0
        %1885 = vmatpush.msra.mxu0 0.0
        %1886 = vmatpush.msra.mxu0 0.0
        %1887 = vmatpush.msra.mxu0 0.0
        %1888 = vmatpush.msra.mxu0 %v1698
        %1889 = vmatmul.f32.gmra.mxu0 %v1851
        %v1890 = vpop.f32.mrf.mxu0
        %v1891 = vadd.f32 %v1848, %v1890
        %1892 = vdwg.mxu0
        %s1893 = scalar_lea.vmem %s8, 40
        %v1894 = vld [vmem:[%s1893] sm:$0x3f]
        %v1896 = vsel %vm1642, %v1894, 0
        %1898 = vmatpush.msra.mxu0 0.0
        %1899 = vmatpush.msra.mxu0 0.0
        %1900 = vmatpush.msra.mxu0 0.0
        %1901 = vmatpush.msra.mxu0 0.0
        %1902 = vmatpush.msra.mxu0 0.0
        %1903 = vmatpush.msra.mxu0 0.0
        %1904 = vmatpush.msra.mxu0 0.0
        %1905 = vmatpush.msra.mxu0 0.0
        %1906 = vmatpush.msra.mxu0 0.0
        %1907 = vmatpush.msra.mxu0 0.0
        %1908 = vmatpush.msra.mxu0 0.0
        %1909 = vmatpush.msra.mxu0 0.0
        %1910 = vmatpush.msra.mxu0 0.0
        %1911 = vmatpush.msra.mxu0 0.0
        %1912 = vmatpush.msra.mxu0 0.0
        %1913 = vmatpush.msra.mxu0 %v1746
        %1914 = vmatmul.f32.gmra.mxu0 %v1896
        %v1915 = vpop.f32.mrf.mxu0
        %v1916 = vadd.f32 0.0, %v1915
        %1917 = vdwg.mxu0
        %1918 = vmatpush.msra.mxu0 0.0
        %1919 = vmatpush.msra.mxu0 0.0
        %1920 = vmatpush.msra.mxu0 0.0
        %1921 = vmatpush.msra.mxu0 0.0
        %1922 = vmatpush.msra.mxu0 0.0
        %1923 = vmatpush.msra.mxu0 0.0
        %1924 = vmatpush.msra.mxu0 0.0
        %1925 = vmatpush.msra.mxu0 0.0
        %1926 = vmatpush.msra.mxu0 0.0
        %1927 = vmatpush.msra.mxu0 0.0
        %1928 = vmatpush.msra.mxu0 0.0
        %1929 = vmatpush.msra.mxu0 0.0
        %1930 = vmatpush.msra.mxu0 0.0
        %1931 = vmatpush.msra.mxu0 0.0
        %1932 = vmatpush.msra.mxu0 0.0
        %1933 = vmatpush.msra.mxu0 %v1749
        %1934 = vmatmul.f32.gmra.mxu0 %v1896
        %v1935 = vpop.f32.mrf.mxu0
        %v1936 = vadd.f32 0.0, %v1935
        %1937 = vdwg.mxu0
        %v1938 = vadd.f32 %v1871, %v1916
        %v1939 = vadd.f32 %v1891, %v1936
        %v1940 = vadd.f32 %v1938, %v1797
        %v1941 = vadd.f32 %v1939, %v1797
        %v1942 = vmax.f32 %v1940, 0.0
        %v1943 = vmax.f32 %v1941, 0.0
        %v1944 = vmax.f32 %v1801, %v1942
        %v1945 = vmax.f32 %v1802, %v1943
        %v1946 = vld [vmem:[%s10] sm:$0xff]
        %v1947 = vld [vmem:[%s10 + $0x8] sm:$0xff]
        %v1948 = vld [vmem:[%s10 + $0x10] sm:$0xff]
        %v1949 = vld [vmem:[%s10 + $0x18] sm:$0xff]
        %v1950 = vld [vmem:[%s10 + $0x20] sm:$0xff]
        %v1951 = vld [vmem:[%s10 + $0x28] sm:$0xff]
        %v1952 = vld [vmem:[%s10 + $0x30] sm:$0xff]
        %v1953 = vld [vmem:[%s10 + $0x38] sm:$0xff]
        %v1954 = vld [vmem:[%s10 + $0x40] sm:$0xff]
        %v1955 = vld [vmem:[%s10 + $0x48] sm:$0xff]
        %v1956 = vld [vmem:[%s10 + $0x50] sm:$0xff]
        %v1957 = vld [vmem:[%s10 + $0x58] sm:$0xff]
        %v1958 = vld [vmem:[%s10 + $0x60] sm:$0xff]
        %v1959 = vld [vmem:[%s10 + $0x68] sm:$0xff]
        %v1960 = vld [vmem:[%s10 + $0x70] sm:$0xff]
        %v1961 = vld [vmem:[%s10 + $0x78] sm:$0xff]
        %v1962 = vld [vmem:[%s10 + $0x80] sm:$0xff]
        %v1963 = vld [vmem:[%s10 + $0x88] sm:$0xff]
        %v1964 = vld [vmem:[%s10 + $0x90] sm:$0xff]
        %v1965 = vld [vmem:[%s10 + $0x98] sm:$0xff]
        %v1966 = vld [vmem:[%s10 + $0xa0] sm:$0xff]
        %v1967 = vld [vmem:[%s10 + $0xa8] sm:$0xff]
        %v1968 = vld [vmem:[%s10 + $0xb0] sm:$0xff]
        %v1969 = vld [vmem:[%s10 + $0xb8] sm:$0xff]
        %v1970 = vld [vmem:[%s10 + $0xc0] sm:$0xff]
        %v1971 = vld [vmem:[%s10 + $0xc8] sm:$0xff]
        %v1973 = vsel %vm1422, %v1945, 0
        %1975 = vmatpush.msra.mxu0 %v1961
        %1976 = vmatpush.msra.mxu0 %v1960
        %1977 = vmatpush.msra.mxu0 %v1959
        %1978 = vmatpush.msra.mxu0 %v1958
        %1979 = vmatpush.msra.mxu0 %v1957
        %1980 = vmatpush.msra.mxu0 %v1956
        %1981 = vmatpush.msra.mxu0 %v1955
        %1982 = vmatpush.msra.mxu0 %v1954
        %1983 = vmatpush.msra.mxu0 %v1953
        %1984 = vmatpush.msra.mxu0 %v1952
        %1985 = vmatpush.msra.mxu0 %v1951
        %1986 = vmatpush.msra.mxu0 %v1950
        %1987 = vmatpush.msra.mxu0 %v1949
        %1988 = vmatpush.msra.mxu0 %v1948
        %1989 = vmatpush.msra.mxu0 %v1947
        %1990 = vmatpush.msra.mxu0 %v1946
        %1991 = vmatmul.f32.gmra.mxu0 %v1944
        %v1992 = vpop.f32.mrf.mxu0
        %v1993 = vadd.f32 0.0, %v1992
        %1994 = vdwg.mxu0
        %1995 = vmatpush.msra.mxu0 0.0
        %1996 = vmatpush.msra.mxu0 0.0
        %1997 = vmatpush.msra.mxu0 0.0
        %1998 = vmatpush.msra.mxu0 0.0
        %1999 = vmatpush.msra.mxu0 0.0
        %2000 = vmatpush.msra.mxu0 0.0
        %2001 = vmatpush.msra.mxu0 %v1971
        %2002 = vmatpush.msra.mxu0 %v1970
        %2003 = vmatpush.msra.mxu0 %v1969
        %2004 = vmatpush.msra.mxu0 %v1968
        %2005 = vmatpush.msra.mxu0 %v1967
        %2006 = vmatpush.msra.mxu0 %v1966
        %2007 = vmatpush.msra.mxu0 %v1965
        %2008 = vmatpush.msra.mxu0 %v1964
        %2009 = vmatpush.msra.mxu0 %v1963
        %2010 = vmatpush.msra.mxu0 %v1962
        %2011 = vmatmul.f32.gmra.mxu0 %v1973
        %v2012 = vpop.f32.mrf.mxu0
        %v2013 = vadd.f32 %v1993, %v2012
        %2014 = vdwg.mxu0
        %s2015 = scalar_lea.vmem %s10, 208
        %v2016 = vld [vmem:[%s2015] sm:$0xff]
        %v2017 = vld [vmem:[%s2015 + $0x8] sm:$0xff]
        %v2018 = vld [vmem:[%s2015 + $0x10] sm:$0xff]
        %v2019 = vld [vmem:[%s2015 + $0x18] sm:$0xff]
        %v2020 = vld [vmem:[%s2015 + $0x20] sm:$0xff]
        %v2021 = vld [vmem:[%s2015 + $0x28] sm:$0xff]
        %v2022 = vld [vmem:[%s2015 + $0x30] sm:$0xff]
        %v2023 = vld [vmem:[%s2015 + $0x38] sm:$0xff]
        %v2024 = vld [vmem:[%s2015 + $0x40] sm:$0xff]
        %v2025 = vld [vmem:[%s2015 + $0x48] sm:$0xff]
        %v2026 = vld [vmem:[%s2015 + $0x50] sm:$0xff]
        %v2027 = vld [vmem:[%s2015 + $0x58] sm:$0xff]
        %v2028 = vld [vmem:[%s2015 + $0x60] sm:$0xff]
        %v2029 = vld [vmem:[%s2015 + $0x68] sm:$0xff]
        %v2030 = vld [vmem:[%s2015 + $0x70] sm:$0xff]
        %v2031 = vld [vmem:[%s2015 + $0x78] sm:$0xff]
        %v2032 = vld [vmem:[%s2015 + $0x80] sm:$0xff]
        %v2033 = vld [vmem:[%s2015 + $0x88] sm:$0xff]
        %v2034 = vld [vmem:[%s2015 + $0x90] sm:$0xff]
        %v2035 = vld [vmem:[%s2015 + $0x98] sm:$0xff]
        %v2036 = vld [vmem:[%s2015 + $0xa0] sm:$0xff]
        %v2037 = vld [vmem:[%s2015 + $0xa8] sm:$0xff]
        %v2038 = vld [vmem:[%s2015 + $0xb0] sm:$0xff]
        %v2039 = vld [vmem:[%s2015 + $0xb8] sm:$0xff]
        %v2040 = vld [vmem:[%s2015 + $0xc0] sm:$0xff]
        %v2041 = vld [vmem:[%s2015 + $0xc8] sm:$0xff]
        %2042 = vmatpush.msra.mxu0 %v2031
        %2043 = vmatpush.msra.mxu0 %v2030
        %2044 = vmatpush.msra.mxu0 %v2029
        %2045 = vmatpush.msra.mxu0 %v2028
        %2046 = vmatpush.msra.mxu0 %v2027
        %2047 = vmatpush.msra.mxu0 %v2026
        %2048 = vmatpush.msra.mxu0 %v2025
        %2049 = vmatpush.msra.mxu0 %v2024
        %2050 = vmatpush.msra.mxu0 %v2023
        %2051 = vmatpush.msra.mxu0 %v2022
        %2052 = vmatpush.msra.mxu0 %v2021
        %2053 = vmatpush.msra.mxu0 %v2020
        %2054 = vmatpush.msra.mxu0 %v2019
        %2055 = vmatpush.msra.mxu0 %v2018
        %2056 = vmatpush.msra.mxu0 %v2017
        %2057 = vmatpush.msra.mxu0 %v2016
        %2058 = vmatmul.f32.gmra.mxu0 %v1944
        %v2059 = vpop.f32.mrf.mxu0
        %v2060 = vadd.f32 0.0, %v2059
        %2061 = vdwg.mxu0
        %2062 = vmatpush.msra.mxu0 0.0
        %2063 = vmatpush.msra.mxu0 0.0
        %2064 = vmatpush.msra.mxu0 0.0
        %2065 = vmatpush.msra.mxu0 0.0
        %2066 = vmatpush.msra.mxu0 0.0
        %2067 = vmatpush.msra.mxu0 0.0
        %2068 = vmatpush.msra.mxu0 %v2041
        %2069 = vmatpush.msra.mxu0 %v2040
        %2070 = vmatpush.msra.mxu0 %v2039
        %2071 = vmatpush.msra.mxu0 %v2038
        %2072 = vmatpush.msra.mxu0 %v2037
        %2073 = vmatpush.msra.mxu0 %v2036
        %2074 = vmatpush.msra.mxu0 %v2035
        %2075 = vmatpush.msra.mxu0 %v2034
        %2076 = vmatpush.msra.mxu0 %v2033
        %2077 = vmatpush.msra.mxu0 %v2032
        %2078 = vmatmul.f32.gmra.mxu0 %v1973
        %v2079 = vpop.f32.mrf.mxu0
        %v2080 = vadd.f32 %v2060, %v2079
        %2081 = vdwg.mxu0
        %v2082 = vmax.f32 %v2013, %v2080
        %v2083 = vld [vmem:[%s12] sm:$0x1]
        %v2084 = vld [vmem:[%s11] sm:$0xff]
        %v2085 = vld [vmem:[%s11 + $0x8] sm:$0xff]
        %v2086 = vld [vmem:[%s11 + $0x10] sm:$0xff]
        %v2087 = vld [vmem:[%s11 + $0x18] sm:$0xff]
        %v2088 = vld [vmem:[%s11 + $0x20] sm:$0xff]
        %v2089 = vld [vmem:[%s11 + $0x28] sm:$0xff]
        %v2090 = vld [vmem:[%s11 + $0x30] sm:$0xff]
        %v2091 = vld [vmem:[%s11 + $0x38] sm:$0xff]
        %v2092 = vld [vmem:[%s11 + $0x40] sm:$0xff]
        %v2093 = vld [vmem:[%s11 + $0x48] sm:$0xff]
        %v2094 = vld [vmem:[%s11 + $0x50] sm:$0xff]
        %v2095 = vld [vmem:[%s11 + $0x58] sm:$0xff]
        %v2096 = vld [vmem:[%s11 + $0x60] sm:$0x7f]
        %vm2097 = vcmask 842752
        %v2099 = vsel %vm2097, %v2082, 0
        %v2102 = vsel %vm586, %v2096, 0
        %2104 = vmatpush.msra.mxu0 0.0
        %2105 = vmatpush.msra.mxu0 0.0
        %2106 = vmatpush.msra.mxu0 0.0
        %2107 = vmatpush.msra.mxu0 %v2102
        %2108 = vmatpush.msra.mxu0 %v2095
        %2109 = vmatpush.msra.mxu0 %v2094
        %2110 = vmatpush.msra.mxu0 %v2093
        %2111 = vmatpush.msra.mxu0 %v2092
        %2112 = vmatpush.msra.mxu0 %v2091
        %2113 = vmatpush.msra.mxu0 %v2090
        %2114 = vmatpush.msra.mxu0 %v2089
        %2115 = vmatpush.msra.mxu0 %v2088
        %2116 = vmatpush.msra.mxu0 %v2087
        %2117 = vmatpush.msra.mxu0 %v2086
        %2118 = vmatpush.msra.mxu0 %v2085
        %2119 = vmatpush.msra.mxu0 %v2084
        %2120 = vmatmul.f32.gmra.mxu0 %v2099
        %v2121 = vpop.f32.mrf.mxu0
        %v2122 = vadd.f32 0.0, %v2121
        %2123 = vdwg.mxu0
        %v2124 = vadd.f32 %v2083, %v2122
        %s2125 = scalar_lea.vmem %s11, 104
        %v2126 = vld [vmem:[%s2125] sm:$0xff]
        %v2127 = vld [vmem:[%s2125 + $0x8] sm:$0xff]
        %v2128 = vld [vmem:[%s2125 + $0x10] sm:$0xff]
        %v2129 = vld [vmem:[%s2125 + $0x18] sm:$0xff]
        %v2130 = vld [vmem:[%s2125 + $0x20] sm:$0xff]
        %v2131 = vld [vmem:[%s2125 + $0x28] sm:$0xff]
        %v2132 = vld [vmem:[%s2125 + $0x30] sm:$0xff]
        %v2133 = vld [vmem:[%s2125 + $0x38] sm:$0xff]
        %v2134 = vld [vmem:[%s2125 + $0x40] sm:$0xff]
        %v2135 = vld [vmem:[%s2125 + $0x48] sm:$0xff]
        %v2136 = vld [vmem:[%s2125 + $0x50] sm:$0xff]
        %v2137 = vld [vmem:[%s2125 + $0x58] sm:$0xff]
        %v2138 = vld [vmem:[%s2125 + $0x60] sm:$0x7f]
        %v2139 = vrot.slane %v2082, 1
        %v2140 = vsel %vm2097, %v2139, 0
        %v2143 = vsel %vm586, %v2138, 0
        %2145 = vmatpush.msra.mxu0 0.0
        %2146 = vmatpush.msra.mxu0 0.0
        %2147 = vmatpush.msra.mxu0 0.0
        %2148 = vmatpush.msra.mxu0 %v2143
        %2149 = vmatpush.msra.mxu0 %v2137
        %2150 = vmatpush.msra.mxu0 %v2136
        %2151 = vmatpush.msra.mxu0 %v2135
        %2152 = vmatpush.msra.mxu0 %v2134
        %2153 = vmatpush.msra.mxu0 %v2133
        %2154 = vmatpush.msra.mxu0 %v2132
        %2155 = vmatpush.msra.mxu0 %v2131
        %2156 = vmatpush.msra.mxu0 %v2130
        %2157 = vmatpush.msra.mxu0 %v2129
        %2158 = vmatpush.msra.mxu0 %v2128
        %2159 = vmatpush.msra.mxu0 %v2127
        %2160 = vmatpush.msra.mxu0 %v2126
        %2161 = vmatmul.f32.gmra.mxu0 %v2140
        %v2162 = vpop.f32.mrf.mxu0
        %v2163 = vadd.f32 0.0, %v2162
        %2164 = vdwg.mxu0
        %v2165 = vadd.f32 %v2124, %v2163
        %s2166 = scalar_lea.vmem %s11, 208
        %v2167 = vld [vmem:[%s2166] sm:$0xff]
        %v2168 = vld [vmem:[%s2166 + $0x8] sm:$0xff]
        %v2169 = vld [vmem:[%s2166 + $0x10] sm:$0xff]
        %v2170 = vld [vmem:[%s2166 + $0x18] sm:$0xff]
        %v2171 = vld [vmem:[%s2166 + $0x20] sm:$0xff]
        %v2172 = vld [vmem:[%s2166 + $0x28] sm:$0xff]
        %v2173 = vld [vmem:[%s2166 + $0x30] sm:$0xff]
        %v2174 = vld [vmem:[%s2166 + $0x38] sm:$0xff]
        %v2175 = vld [vmem:[%s2166 + $0x40] sm:$0xff]
        %v2176 = vld [vmem:[%s2166 + $0x48] sm:$0xff]
        %v2177 = vld [vmem:[%s2166 + $0x50] sm:$0xff]
        %v2178 = vld [vmem:[%s2166 + $0x58] sm:$0xff]
        %v2179 = vld [vmem:[%s2166 + $0x60] sm:$0x7f]
        %v2180 = vrot.slane %v2082, 2
        %v2181 = vsel %vm2097, %v2180, 0
        %v2184 = vsel %vm586, %v2179, 0
        %2186 = vmatpush.msra.mxu0 0.0
        %2187 = vmatpush.msra.mxu0 0.0
        %2188 = vmatpush.msra.mxu0 0.0
        %2189 = vmatpush.msra.mxu0 %v2184
        %2190 = vmatpush.msra.mxu0 %v2178
        %2191 = vmatpush.msra.mxu0 %v2177
        %2192 = vmatpush.msra.mxu0 %v2176
        %2193 = vmatpush.msra.mxu0 %v2175
        %2194 = vmatpush.msra.mxu0 %v2174
        %2195 = vmatpush.msra.mxu0 %v2173
        %2196 = vmatpush.msra.mxu0 %v2172
        %2197 = vmatpush.msra.mxu0 %v2171
        %2198 = vmatpush.msra.mxu0 %v2170
        %2199 = vmatpush.msra.mxu0 %v2169
        %2200 = vmatpush.msra.mxu0 %v2168
        %2201 = vmatpush.msra.mxu0 %v2167
        %2202 = vmatmul.f32.gmra.mxu0 %v2181
        %v2203 = vpop.f32.mrf.mxu0
        %v2204 = vadd.f32 0.0, %v2203
        %2205 = vdwg.mxu0
        %v2206 = vadd.f32 %v2165, %v2204
        %s2207 = scalar_lea.vmem %s11, 312
        %v2208 = vld [vmem:[%s2207] sm:$0xff]
        %v2209 = vld [vmem:[%s2207 + $0x8] sm:$0xff]
        %v2210 = vld [vmem:[%s2207 + $0x10] sm:$0xff]
        %v2211 = vld [vmem:[%s2207 + $0x18] sm:$0xff]
        %v2212 = vld [vmem:[%s2207 + $0x20] sm:$0xff]
        %v2213 = vld [vmem:[%s2207 + $0x28] sm:$0xff]
        %v2214 = vld [vmem:[%s2207 + $0x30] sm:$0xff]
        %v2215 = vld [vmem:[%s2207 + $0x38] sm:$0xff]
        %v2216 = vld [vmem:[%s2207 + $0x40] sm:$0xff]
        %v2217 = vld [vmem:[%s2207 + $0x48] sm:$0xff]
        %v2218 = vld [vmem:[%s2207 + $0x50] sm:$0xff]
        %v2219 = vld [vmem:[%s2207 + $0x58] sm:$0xff]
        %v2220 = vld [vmem:[%s2207 + $0x60] sm:$0x7f]
        %v2221 = vrot.slane %v2082, 3
        %v2222 = vsel %vm2097, %v2221, 0
        %v2225 = vsel %vm586, %v2220, 0
        %2227 = vmatpush.msra.mxu0 0.0
        %2228 = vmatpush.msra.mxu0 0.0
        %2229 = vmatpush.msra.mxu0 0.0
        %2230 = vmatpush.msra.mxu0 %v2225
        %2231 = vmatpush.msra.mxu0 %v2219
        %2232 = vmatpush.msra.mxu0 %v2218
        %2233 = vmatpush.msra.mxu0 %v2217
        %2234 = vmatpush.msra.mxu0 %v2216
        %2235 = vmatpush.msra.mxu0 %v2215
        %2236 = vmatpush.msra.mxu0 %v2214
        %2237 = vmatpush.msra.mxu0 %v2213
        %2238 = vmatpush.msra.mxu0 %v2212
        %2239 = vmatpush.msra.mxu0 %v2211
        %2240 = vmatpush.msra.mxu0 %v2210
        %2241 = vmatpush.msra.mxu0 %v2209
        %2242 = vmatpush.msra.mxu0 %v2208
        %2243 = vmatmul.f32.gmra.mxu0 %v2222
        %v2244 = vpop.f32.mrf.mxu0
        %v2245 = vadd.f32 0.0, %v2244
        %2246 = vdwg.mxu0
        %v2247 = vadd.f32 %v2206, %v2245
        %s2248 = scalar_lea.vmem %s11, 416
        %v2249 = vld [vmem:[%s2248] sm:$0xff]
        %v2250 = vld [vmem:[%s2248 + $0x8] sm:$0xff]
        %v2251 = vld [vmem:[%s2248 + $0x10] sm:$0xff]
        %v2252 = vld [vmem:[%s2248 + $0x18] sm:$0xff]
        %v2253 = vld [vmem:[%s2248 + $0x20] sm:$0xff]
        %v2254 = vld [vmem:[%s2248 + $0x28] sm:$0xff]
        %v2255 = vld [vmem:[%s2248 + $0x30] sm:$0xff]
        %v2256 = vld [vmem:[%s2248 + $0x38] sm:$0xff]
        %v2257 = vld [vmem:[%s2248 + $0x40] sm:$0xff]
        %v2258 = vld [vmem:[%s2248 + $0x48] sm:$0xff]
        %v2259 = vld [vmem:[%s2248 + $0x50] sm:$0xff]
        %v2260 = vld [vmem:[%s2248 + $0x58] sm:$0xff]
        %v2261 = vld [vmem:[%s2248 + $0x60] sm:$0x7f]
        %v2262 = vrot.slane %v2082, 4
        %v2263 = vsel %vm2097, %v2262, 0
        %v2266 = vsel %vm586, %v2261, 0
        %2268 = vmatpush.msra.mxu0 0.0
        %2269 = vmatpush.msra.mxu0 0.0
        %2270 = vmatpush.msra.mxu0 0.0
        %2271 = vmatpush.msra.mxu0 %v2266
        %2272 = vmatpush.msra.mxu0 %v2260
        %2273 = vmatpush.msra.mxu0 %v2259
        %2274 = vmatpush.msra.mxu0 %v2258
        %2275 = vmatpush.msra.mxu0 %v2257
        %2276 = vmatpush.msra.mxu0 %v2256
        %2277 = vmatpush.msra.mxu0 %v2255
        %2278 = vmatpush.msra.mxu0 %v2254
        %2279 = vmatpush.msra.mxu0 %v2253
        %2280 = vmatpush.msra.mxu0 %v2252
        %2281 = vmatpush.msra.mxu0 %v2251
        %2282 = vmatpush.msra.mxu0 %v2250
        %2283 = vmatpush.msra.mxu0 %v2249
        %2284 = vmatmul.f32.gmra.mxu0 %v2263
        %v2285 = vpop.f32.mrf.mxu0
        %v2286 = vadd.f32 0.0, %v2285
        %2287 = vdwg.mxu0
        %v2288 = vadd.f32 %v2247, %v2286
        %s2289 = scalar_lea.vmem %s11, 520
        %v2290 = vld [vmem:[%s2289] sm:$0xff]
        %v2291 = vld [vmem:[%s2289 + $0x8] sm:$0xff]
        %v2292 = vld [vmem:[%s2289 + $0x10] sm:$0xff]
        %v2293 = vld [vmem:[%s2289 + $0x18] sm:$0xff]
        %v2294 = vld [vmem:[%s2289 + $0x20] sm:$0xff]
        %v2295 = vld [vmem:[%s2289 + $0x28] sm:$0xff]
        %v2296 = vld [vmem:[%s2289 + $0x30] sm:$0xff]
        %v2297 = vld [vmem:[%s2289 + $0x38] sm:$0xff]
        %v2298 = vld [vmem:[%s2289 + $0x40] sm:$0xff]
        %v2299 = vld [vmem:[%s2289 + $0x48] sm:$0xff]
        %v2300 = vld [vmem:[%s2289 + $0x50] sm:$0xff]
        %v2301 = vld [vmem:[%s2289 + $0x58] sm:$0xff]
        %v2302 = vld [vmem:[%s2289 + $0x60] sm:$0x7f]
        %v2303 = vrot.slane %v2082, 5
        %v2304 = vsel %vm2097, %v2303, 0
        %v2307 = vsel %vm586, %v2302, 0
        %2309 = vmatpush.msra.mxu0 0.0
        %2310 = vmatpush.msra.mxu0 0.0
        %2311 = vmatpush.msra.mxu0 0.0
        %2312 = vmatpush.msra.mxu0 %v2307
        %2313 = vmatpush.msra.mxu0 %v2301
        %2314 = vmatpush.msra.mxu0 %v2300
        %2315 = vmatpush.msra.mxu0 %v2299
        %2316 = vmatpush.msra.mxu0 %v2298
        %2317 = vmatpush.msra.mxu0 %v2297
        %2318 = vmatpush.msra.mxu0 %v2296
        %2319 = vmatpush.msra.mxu0 %v2295
        %2320 = vmatpush.msra.mxu0 %v2294
        %2321 = vmatpush.msra.mxu0 %v2293
        %2322 = vmatpush.msra.mxu0 %v2292
        %2323 = vmatpush.msra.mxu0 %v2291
        %2324 = vmatpush.msra.mxu0 %v2290
        %2325 = vmatmul.f32.gmra.mxu0 %v2304
        %v2326 = vpop.f32.mrf.mxu0
        %v2327 = vadd.f32 0.0, %v2326
        %2328 = vdwg.mxu0
        %v2329 = vadd.f32 %v2288, %v2327
        %v2330 = vmax.f32 %v2329, 0.0
        %v2331 = vld [vmem:[%s13] sm:$0xff]
        %v2332 = vld [vmem:[%s13 + $0x8] sm:$0xff]
        %v2333 = vld [vmem:[%s13 + $0x10] sm:$0xff]
        %v2334 = vld [vmem:[%s13 + $0x18] sm:$0xff]
        %v2335 = vld [vmem:[%s13 + $0x20] sm:$0xff]
        %v2336 = vld [vmem:[%s13 + $0x28] sm:$0xff]
        %v2337 = vld [vmem:[%s13 + $0x30] sm:$0xff]
        %v2338 = vld [vmem:[%s13 + $0x38] sm:$0xff]
        %v2339 = vld [vmem:[%s14] sm:$0x1]
        %vm2340 = vcmask 523264
        %v2342 = vsel %vm2340, %v2330, 0
        %2344 = vmatpush.msra.mxu0 0.0
        %2345 = vmatpush.msra.mxu0 0.0
        %2346 = vmatpush.msra.mxu0 0.0
        %2347 = vmatpush.msra.mxu0 0.0
        %2348 = vmatpush.msra.mxu0 0.0
        %2349 = vmatpush.msra.mxu0 0.0
        %2350 = vmatpush.msra.mxu0 0.0
        %2351 = vmatpush.msra.mxu0 0.0
        %2352 = vmatpush.msra.mxu0 %v2338
        %2353 = vmatpush.msra.mxu0 %v2337
        %2354 = vmatpush.msra.mxu0 %v2336
        %2355 = vmatpush.msra.mxu0 %v2335
        %2356 = vmatpush.msra.mxu0 %v2334
        %2357 = vmatpush.msra.mxu0 %v2333
        %2358 = vmatpush.msra.mxu0 %v2332
        %2359 = vmatpush.msra.mxu0 %v2331
        %2360 = vmatmul.f32.gmra.mxu0 %v2342
        %v2361 = vpop.f32.mrf.mxu0
        %v2362 = vadd.f32 %v2339, %v2361
        %2363 = vdwg.mxu0
        %v2364 = vmax.f32 %v2362, 0.0
        %v2365 = vld [vmem:[%s15] sm:$0xff]
        %v2366 = vld [vmem:[%s15 + $0x8] sm:$0xff]
        %v2367 = vld [vmem:[%s15 + $0x10] sm:$0xff]
        %v2368 = vld [vmem:[%s15 + $0x18] sm:$0xff]
        %v2369 = vld [vmem:[%s16] sm:$0x1]
        %vm2370 = vcmask 261120
        %v2372 = vsel %vm2370, %v2364, 0
        %2374 = vmatpush.msra.mxu0 0.0
        %2375 = vmatpush.msra.mxu0 0.0
        %2376 = vmatpush.msra.mxu0 0.0
        %2377 = vmatpush.msra.mxu0 0.0
        %2378 = vmatpush.msra.mxu0 0.0
        %2379 = vmatpush.msra.mxu0 0.0
        %2380 = vmatpush.msra.mxu0 0.0
        %2381 = vmatpush.msra.mxu0 0.0
        %2382 = vmatpush.msra.mxu0 0.0
        %2383 = vmatpush.msra.mxu0 0.0
        %2384 = vmatpush.msra.mxu0 0.0
        %2385 = vmatpush.msra.mxu0 0.0
        %2386 = vmatpush.msra.mxu0 %v2368
        %2387 = vmatpush.msra.mxu0 %v2367
        %2388 = vmatpush.msra.mxu0 %v2366
        %2389 = vmatpush.msra.mxu0 %v2365
        %2390 = vmatmul.f32.gmra.mxu0 %v2372
        %v2391 = vpop.f32.mrf.mxu0
        %v2392 = vadd.f32 %v2369, %v2391
        %2393 = vdwg.mxu0
        %vm2394 = vcmask 16384
        %2395 = vst.msk [vmem:[%s557] sm:$0x1] %vm2394, %v2392
        %s2396 = sand.u32 %s402, 1
        %s2397 = scalar_lea.sflag [#allocation4], %s2396
        %s2398 = sand.u32 %s402, 1
        %s2399 = scalar_lea.vmem [#allocation5], %s2398
        // Predicated region
        $region93: #{forward.1} parent=87 // pred_check
          %p2400 = pneg %p412
        $region94: #{forward.1} parent=87 // pred_check_branch
          %2402 = sbr.rel (%p2400) target = $region96
        $region95: #{forward.1} parent=87 // pred_region
          %2404 = vsyncadd %s2397, 0
          %s2405 = scalar_lea.hbm %s17, %s32
          %s2407 = sshll.u32 %s2399, 4
          %s2408 = int_to_ptr.vmem [resolvable:$true] %s2407
          %s2409 = sshll.u32 %s2405, 4
          %s2410 = int_to_ptr.hbm [resolvable:$true] %s2409
          %2412 = dma.vmem_to_hbm [thread:$0]  %s2408, 16, %s2410, %s2397
        $region96: #{forward.1} parent=87 // pred_fallthru
          _
      $region88: #{forward.1} parent=5 // pred_fallthru
        _
      %p2413 = scmp.le.s32.totalorder 2, %s27
      // Predicated region
      $region97: #{forward.1} parent=5 // pred_check
        %p2414 = pneg %p2413
      $region98: #{forward.1} parent=5 // pred_check_branch
        %2416 = sbr.rel (%p2414) target = $region100
      $region99: #{forward.1} parent=5 // pred_region
        %s2417 = ssub.s32 %s27, 2
        // Predicated region
        $region101: #{forward.1} parent=99 // pred_check
          %p2418 = pneg %p418
        $region102: #{forward.1} parent=99 // pred_check_branch
          %2420 = sbr.rel (%p2418) target = $region104
        $region103: #{forward.1} parent=99 // pred_region
          %s2421 = sand.u32 %s403, 1
          %s2422 = scalar_lea.sflag [#allocation4], %s2421
          %s2423 = sand.u32 %s403, 1
          %s2424 = scalar_lea.vmem [#allocation5], %s2423
          %2426 = dma.done %s2422, 16
        $region104: #{forward.1} parent=99 // pred_fallthru
          _
      $region100: #{forward.1} parent=5 // pred_fallthru
        _
    $region6: #{forward.1} parent=1 // loop_footer
      %s31 = sadd.s32 1, %s27
    $region7: #{forward.1} parent=1 // loop_footer_branch
      %26 = sbr.rel target = $region3
    $region8: #{forward.1} parent=1 // loop_exit
      _
    %2427 = vsyncpa [#allocation3], 1
    %s2428 = scalar_lea.sflag [#allocation3], 1
    %2429 = vsyncpa %s2428, 1
    %2430 = vsyncpa [#allocation4], 1
    %s2431 = scalar_lea.sflag [#allocation4], 1
    %2432 = vsyncpa %s2431, 1

</llo_original>
